<compile_context>
chip_gen: v5e
topology: v5e:2x2
jax: 0.10.0
libtpu: 0.0.40
codegen_flags: <defaults>
</compile_context>

<pallas_src>
import math
import functools

import numpy as np
import jax
import jax.numpy as jnp
from jax import lax
from jax.experimental import pallas as pl
from jax.experimental.pallas import tpu as pltpu


# --------------------------------------------------------------------------- shared utils

def _pos_encoding_table(seq_len, d_model):
    """Exactly mirrors TransformerDecModel.pos_enc's python loop (non-standard formula)."""
    assert d_model % 2 == 0, "pos_enc writes pe[:, i+1]; d_model must be even"
    pe = np.zeros((seq_len, d_model), dtype=np.float32)
    for pos in range(seq_len):
        for i in range(0, d_model, 2):
            pe[pos, i] = math.sin(pos / 10000 ** (2 * i / d_model))
            pe[pos, i + 1] = math.cos(pos / 10000 ** (2 * (i + 1) / d_model))
    return jnp.asarray(pe)


# --------------------------------------------------------------------------- kernel body

def _layernorm(x, alpha, bias, eps):
    # alpha * (x - mean) / (std_unbiased + eps) + bias   (matches torch .std default, N-1)
    n = x.shape[-1]
    mean = jnp.mean(x, axis=-1, keepdims=True)
    d = x - mean
    var = jnp.sum(d * d, axis=-1, keepdims=True) * (1.0 / (n - 1))
    # Exact reciprocal here: this feeds the residual stream of every layer.
    inv = pl.reciprocal(jnp.sqrt(var) + eps, approx=False)
    return alpha * d * inv + bias


def _mha(xq16, kv_ref, mask_bias, wq16, bq_row, wo_ref, bo_row, heads):
    """Multi-head attention against a precomputed K|V cache.

    xq16:      (TQ, D)    bf16 query-side input
    kv_ref:    (SK, 2D)   bf16 VMEM ref; [:, :D] = K (all heads), [:, D:] = V (all heads)
    mask_bias: (1, SK)    f32 additive key-padding bias (0 or -1e9)
    wq16:      (D, D)     bf16 query weight, pre-scaled by 1/sqrt(d_k)
    bq_row:    (1, D)     f32 query bias, pre-scaled by 1/sqrt(d_k)
    wo_ref:    (H, d_k, D) bf16 output projection (head-major)
    bo_row:    (1, D)     f32 output bias
    """
    d_model = wq16.shape[0]
    d_k = d_model // heads
    tq = xq16.shape[0]

    # Full-width (lane-dense) query projection; per-head slicing happens on the result.
    q = jnp.dot(xq16, wq16, preferred_element_type=jnp.float32) + bq_row
    q16 = q.astype(jnp.bfloat16)

    acc = jnp.zeros((tq, d_model), jnp.float32)
    for h in range(heads):                                     # static unroll; H is small
        lo = h * d_k
        qh = q16[:, lo:lo + d_k]
        kh = kv_ref[:, lo:lo + d_k]
        vh = kv_ref[:, d_model + lo:d_model + lo + d_k]
        # scores: contract the last dims of q_h and k_h -> no explicit transpose of k.
        s = lax.dot_general(qh, kh, dimension_numbers=(((1,), (1,)), ((), ())),
                            preferred_element_type=jnp.float32)
        s = s + mask_bias                                      # scale already folded into wq
        s = s - jnp.max(s, axis=-1, keepdims=True)
        p = jnp.exp(s)
        p = p * pl.reciprocal(jnp.sum(p, axis=-1, keepdims=True), approx=True)
        head = jnp.dot(p.astype(jnp.bfloat16), vh, preferred_element_type=jnp.float32)
        # concat(heads) @ Wo == sum_h head_h @ Wo[h]  -> no lane-axis concatenate.
        acc = acc + jnp.dot(head.astype(jnp.bfloat16), wo_ref[h],
                            preferred_element_type=jnp.float32)
    return acc + bo_row


def dec_layer_kernel(xq_ref, xkv_ref, mem_ref, smask_ref, cmask_ref,
                     swq_ref, swkv_ref, swo_ref,
                     cwq_ref, cwkv_ref, cwo_ref,
                     w1_ref, w2_ref,
                     vec_ref, sbkv_ref, cbkv_ref, b1_ref,
                     o_ref,
                     skv_ref, ckv_ref,
                     *, self_heads, cross_heads, eps):
    neg = jnp.float32(-1.0e9)
    zero = jnp.float32(0.0)

    # --- K/V caches (all heads), projected once per batch element and reused by every
    #     query tile (grid axis 1 is "arbitrary", so scratch carries across q steps). ---
    @pl.when(pl.program_id(1) == 0)
    def _():
        skv = jnp.dot(xkv_ref[...], swkv_ref[...], preferred_element_type=jnp.float32)
        skv_ref[...] = (skv + sbkv_ref[...]).astype(jnp.bfloat16)
        ckv = jnp.dot(mem_ref[...], cwkv_ref[...], preferred_element_type=jnp.float32)
        ckv_ref[...] = (ckv + cbkv_ref[...]).astype(jnp.bfloat16)

    # Consolidated small per-layer vectors: rows of a single (11, D) f32 array.
    vec = vec_ref[...]
    a1, g1 = vec[0:1], vec[1:2]
    a2, g2 = vec[2:3], vec[3:4]
    a3, g3 = vec[4:5], vec[5:6]
    s_bq, s_bo = vec[6:7], vec[7:8]
    c_bq, c_bo = vec[8:9], vec[9:10]
    b2 = vec[10:11]

    # Additive key-padding bias rows, hoisted out of the head loops.
    smask_bias = jnp.where(smask_ref[...] == 0.0, neg, zero)   # (1, S)
    cmask_bias = jnp.where(cmask_ref[...] == 0.0, neg, zero)   # (1, SM)

    xq = xq_ref[...]                                           # (TQ, D) f32 query rows

    # --- self attention + residual + norm1 ---
    attn1 = _mha(xq.astype(jnp.bfloat16), skv_ref, smask_bias,
                 swq_ref[...], s_bq, swo_ref, s_bo, self_heads)
    x1 = _layernorm(xq + attn1, a1, g1, eps)

    # --- cross attention + residual + norm2 ---
    attn2 = _mha(x1.astype(jnp.bfloat16), ckv_ref, cmask_bias,
                 cwq_ref[...], c_bq, cwo_ref, c_bo, cross_heads)
    x2 = _layernorm(x1 + attn2, a2, g2, eps)

    # --- feed-forward (Linear -> ReLU -> Linear) + residual + norm3 ---
    # TODO(synk): for very large d_ff, add a reduction grid axis over F with a VMEM accumulator.
    h1 = jnp.dot(x2.astype(jnp.bfloat16), w1_ref[...],
                 preferred_element_type=jnp.float32) + b1_ref[...]
    h1 = jnp.maximum(h1, 0.0)
    ffo = jnp.dot(h1.astype(jnp.bfloat16), w2_ref[...],
                  preferred_element_type=jnp.float32) + b2
    o_ref[...] = _layernorm(x2 + ffo, a3, g3, eps)


# --------------------------------------------------------------------------- wrappers

def _pack_mha_params(p, heads):
    D = p["wq"].shape[0]
    d_k = D // heads
    scale = 1.0 / math.sqrt(d_k)
    return {
        # 1/sqrt(d_k) folded into the query projection (no per-head score scaling).
        "wq": (p["wq"] * scale).astype(jnp.bfloat16),                            # (D, D)
        "bq": (p["bq"] * scale).astype(jnp.float32),                             # (D,)
        # K and V fused into one lane-dense (D, 2D) projection.
        "wkv": jnp.concatenate([p["wk"], p["wv"]], axis=1).astype(jnp.bfloat16),  # (D, 2D)
        "bkv": jnp.concatenate([p["bk"], p["bv"]]).reshape(1, 2 * D).astype(jnp.float32),
        # Output projection pre-split head-major for the per-head accumulation trick.
        "wo": p["wo"].reshape(heads, d_k, D).astype(jnp.bfloat16),               # (H, d_k, D)
        "bo": p["bo"].astype(jnp.float32),                                       # (D,)
    }


def _pack_layer_params(lp, self_heads, cross_heads):
    s = _pack_mha_params(lp["self"], self_heads)
    c = _pack_mha_params(lp["cross"], cross_heads)
    vecs = jnp.stack([lp["a1"], lp["g1"], lp["a2"], lp["g2"], lp["a3"], lp["g3"],
                      s["bq"], s["bo"], c["bq"], c["bo"], lp["b2"]], axis=0)
    return {
        "s_wq": s["wq"], "s_wkv": s["wkv"], "s_wo": s["wo"], "s_bkv": s["bkv"],
        "c_wq": c["wq"], "c_wkv": c["wkv"], "c_wo": c["wo"], "c_bkv": c["bkv"],
        "w1": lp["w1"].astype(jnp.bfloat16),
        "w2": lp["w2"].astype(jnp.bfloat16),
        "b1": lp["b1"].reshape(1, -1).astype(jnp.float32),
        "vecs": vecs.astype(jnp.float32),                                        # (11, D)
    }


def _pick_q_tile(S, q_tile):
    if q_tile is not None and S % q_tile == 0 and (q_tile == S or q_tile % 8 == 0):
        return q_tile
    if S <= 256:
        return S                             # single full-sequence tile for small S
    if S % 128 == 0:
        return 128                           # keep the MXU M dimension full
    for t in range(256, 7, -8):              # largest multiple-of-8 divisor <= 256
        if S % t == 0:
            return t
    return S


def _vmem_limit_bytes(weight_args, q_tile, S, SM, D, F):
    try:
        cap = int(pltpu.get_tpu_info().vmem_capacity_bytes)
    except Exception:
        cap = 64 * 2 ** 20                   # conservative fallback (v7x per-core VMEM)
    w_bytes = sum(int(a.size) * a.dtype.itemsize for a in weight_args)
    act_bytes = 4 * q_tile * D * 2 + 2 * (S + SM) * D + 4 * (S + SM)   # per-step blocks
    scratch_bytes = 2 * (S + SM) * 2 * D                               # bf16 K/V caches
    # Inputs are double-buffered by the Pallas pipeline (weights included, see TODO above).
    need = 2 * w_bytes + 2 * act_bytes + scratch_bytes + (8 << 20)
    return int(min(cap - (4 << 20), max(need, 16 << 20)))


def _dec_layer_pallas(x, x_kv16, mem16, self_key_mask, cross_key_mask, pk,
                      *, self_heads, cross_heads, eps, q_tile=None):
    B, S, D = x.shape
    SM = mem16.shape[1]
    F = pk["w1"].shape[1]

    tq = _pick_q_tile(S, q_tile)
    n_q = S // tq

    kern = functools.partial(dec_layer_kernel, self_heads=self_heads,
                             cross_heads=cross_heads, eps=eps)

    def resident(arr):
        # Full-array block with a constant index map -> stays VMEM-resident across steps.
        nd = arr.ndim
        return pl.BlockSpec(arr.shape, lambda b, q, nd=nd: (0,) * nd)

    weight_args = (pk["s_wq"], pk["s_wkv"], pk["s_wo"],
                   pk["c_wq"], pk["c_wkv"], pk["c_wo"],
                   pk["w1"], pk["w2"],
                   pk["vecs"], pk["s_bkv"], pk["c_bkv"], pk["b1"])

    in_specs = [
        pl.BlockSpec((None, tq, D), lambda b, q: (b, q, 0)),    # x query tile (f32)
        pl.BlockSpec((None, S, D), lambda b, q: (b, 0, 0)),     # x (bf16) self-attn k/v src
        pl.BlockSpec((None, SM, D), lambda b, q: (b, 0, 0)),    # memory (bf16) cross k/v src
        pl.BlockSpec((None, 1, S), lambda b, q: (b, 0, 0)),     # self-attn key mask
        pl.BlockSpec((None, 1, SM), lambda b, q: (b, 0, 0)),    # cross-attn key mask
    ] + [resident(w) for w in weight_args]

    return pl.pallas_call(
        kern,
        out_shape=jax.ShapeDtypeStruct((B, S, D), jnp.float32),
        grid_spec=pltpu.PrefetchScalarGridSpec(
            num_scalar_prefetch=0,
            grid=(B, n_q),
            in_specs=in_specs,
            out_specs=pl.BlockSpec((None, tq, D), lambda b, q: (b, q, 0)),
            scratch_shapes=[pltpu.VMEM((S, 2 * D), jnp.bfloat16),     # self-attn K|V cache
                            pltpu.VMEM((SM, 2 * D), jnp.bfloat16)],   # cross-attn K|V cache
        ),
        compiler_params=pltpu.CompilerParams(
            # batch: parallel (megacore / v7x 2-TC); query tiles: arbitrary so the K/V
            # scratch written at q==0 is reused by the later query tiles of each batch.
            dimension_semantics=("parallel", "arbitrary"),
            vmem_limit_bytes=_vmem_limit_bytes(weight_args, tq, S, SM, D, F)),
    )(x, x_kv16, mem16, self_key_mask, cross_key_mask, *weight_args)


def transformer_dec_model(tgt, memory, mask, memory_mask, params,
                          *, self_heads, cross_heads, eps=1e-6, q_tile=None):
    """Pallas forward of TransformerDecModel (dropout = identity / eval)."""
    emb_tbl = params["emb"]
    D = emb_tbl.shape[1]
    B, S = tgt.shape
    SM = memory.shape[1]
    assert D % self_heads == 0 and D % cross_heads == 0
    # The PyTorch layer feeds memory_mask to self-attn (keys = tgt) and the x mask to
    # cross-attn (keys = memory), which only type-checks when both lengths are equal.
    assert S == SM, "TransformerDecLayer's mask usage requires len(tgt) == len(memory)"

    # Token embedding (padding_idx=0 row is zero) + scaled sinusoidal positional encoding.
    # TODO(synk): embedding gather + PE add kept in plain JAX (trivial memory-bound gather);
    #             could become a scalar-prefetch Pallas gather kernel if it ever matters.
    x = jnp.take(emb_tbl, tgt, axis=0) * math.sqrt(D) + _pos_encoding_table(S, D)[None]

    mem16 = memory.astype(jnp.bfloat16)          # cast once; reused by every layer
    packed = [_pack_layer_params(lp, self_heads, cross_heads) for lp in params["layers"]]
    for pk in packed:
        # Per the PyTorch module: self_attn(x, x, x, mask=memory_mask),
        #                         cross_attn(x, memory, memory, mask=x_mask).
        x = _dec_layer_pallas(x, x.astype(jnp.bfloat16), mem16, memory_mask, mask, pk,
                              self_heads=self_heads, cross_heads=cross_heads,
                              eps=eps, q_tile=q_tile)
    return x


# --------------------------------------------------------------------------- pure-JAX reference

def _ref_layernorm(y, a, g, eps):
    n = y.shape[-1]
    mean = jnp.mean(y, axis=-1, keepdims=True)
    d = y - mean
    var = jnp.sum(d * d, axis=-1, keepdims=True) / (n - 1)
    return a * d / (jnp.sqrt(var) + eps) + g


def _ref_mha(q_in, k_in, v_in, mask, p, heads):
    B, Sq, D = q_in.shape
    d_k = D // heads
    q = q_in @ p["wq"] + p["bq"]
    k = k_in @ p["wk"] + p["bk"]
    v = v_in @ p["wv"] + p["bv"]
    q = q.reshape(B, Sq, heads, d_k).transpose(0, 2, 1, 3)
    k = k.reshape(B, -1, heads, d_k).transpose(0, 2, 1, 3)
    v = v.reshape(B, -1, heads, d_k).transpose(0, 2, 1, 3)
    s = jnp.einsum("bhqd,bhkd->bhqk", q, k) / math.sqrt(d_k)
    s = jnp.where(mask[:, None, :, :] == 0, -1.0e9, s)
    a = jax.nn.softmax(s, axis=-1)
    o = jnp.einsum("bhqk,bhkd->bhqd", a, v).transpose(0, 2, 1, 3).reshape(B, Sq, D)
    return o @ p["wo"] + p["bo"]


def ref_forward(tgt, memory, mask, memory_mask, params, *, self_heads, cross_heads, eps=1e-6):
    """Pure-JAX f32 reference mirroring the PyTorch module (dropout = identity)."""
    D = params["emb"].shape[1]
    S = tgt.shape[1]
    x = jnp.take(params["emb"], tgt, axis=0) * math.sqrt(D) + _pos_encoding_table(S, D)[None]
    for lp in params["layers"]:
        x = _ref_layernorm(x + _ref_mha(x, x, x, memory_mask, lp["self"], self_heads),
                           lp["a1"], lp["g1"], eps)
        x = _ref_layernorm(x + _ref_mha(x, memory, memory, mask, lp["cross"], cross_heads),
                           lp["a2"], lp["g2"], eps)
        ff = jnp.maximum(x @ lp["w1"] + lp["b1"], 0.0) @ lp["w2"] + lp["b2"]
        x = _ref_layernorm(x + ff, lp["a3"], lp["g3"], eps)
    return x


# --------------------------------------------------------------------------- param init

def _init_linear(key, fan_in, fan_out):
    kw, kb = jax.random.split(key)
    w = (1.0 / math.sqrt(fan_in)) * jax.random.normal(kw, (fan_in, fan_out), jnp.float32)
    b = 0.01 * jax.random.normal(kb, (fan_out,), jnp.float32)
    return w, b


def _init_mha(key, D):
    ks = jax.random.split(key, 4)
    wq, bq = _init_linear(ks[0], D, D)
    wk, bk = _init_linear(ks[1], D, D)
    wv, bv = _init_linear(ks[2], D, D)
    wo, bo = _init_linear(ks[3], D, D)
    return dict(wq=wq, bq=bq, wk=wk, bk=bk, wv=wv, bv=bv, wo=wo, bo=bo)


def init_params(key, vocab, D, F, n_layers):
    keys = jax.random.split(key, n_layers + 1)
    emb = 0.1 * jax.random.normal(keys[0], (vocab, D), jnp.float32)
    emb = emb.at[0].set(0.0)                                    # padding_idx=0
    layers = []
    for lk in keys[1:]:
        ks = jax.random.split(lk, 4)
        w1, b1 = _init_linear(ks[2], D, F)
        w2, b2 = _init_linear(ks[3], F, D)
        layers.append(dict(
            self=_init_mha(ks[0], D),
            cross=_init_mha(ks[1], D),
            a1=jnp.ones((D,), jnp.float32), g1=jnp.zeros((D,), jnp.float32),
            a2=jnp.ones((D,), jnp.float32), g2=jnp.zeros((D,), jnp.float32),
            a3=jnp.ones((D,), jnp.float32), g3=jnp.zeros((D,), jnp.float32),
            w1=w1, b1=b1, w2=w2, b2=b2))
    return dict(emb=emb, layers=layers)


# --------------------------------------------------------------------------- demo / self-check

if __name__ == "__main__":
    VOCAB, D, FF = 40, 128, 256          # D multiple of 128 -> lane-dense tiles
    SELF_HEADS, CROSS_HEADS = 4, 2
    N_LAYERS = 2
    B, S = 2, 32                         # target length == memory length (module requirement)

    root = jax.random.PRNGKey(0)
    kp, kt, km = jax.random.split(root, 3)

    params = init_params(kp, VOCAB, D, FF, N_LAYERS)

    tgt = jax.random.randint(kt, (B, S), 1, VOCAB).astype(jnp.int32)
    tgt = tgt.at[:, S - 2:].set(0)                                   # trailing padding tokens
    memory = jax.random.normal(km, (B, S, D), jnp.float32)

    # masks: (B, 1, S) with 1.0 = attend, 0.0 = masked key position
    mask = jnp.ones((B, 1, S), jnp.float32).at[1, 0, S - 3:].set(0.0)          # x mask
    memory_mask = jnp.ones((B, 1, S), jnp.float32).at[:, 0, S - 2:].set(0.0)   # memory mask

    ref = ref_forward(tgt, memory, mask, memory_mask, params,
                      self_heads=SELF_HEADS, cross_heads=CROSS_HEADS)

    # Default tiling: S <= 256 -> one query tile per batch element, grid = (B, 1).
    out = transformer_dec_model(tgt, memory, mask, memory_mask, params,
                                self_heads=SELF_HEADS, cross_heads=CROSS_HEADS)
    out = jax.block_until_ready(out)
    assert out.shape == (B, S, D)
    # Kernel uses bf16 MXU operands (f32 accumulation) + EUP approx softmax reciprocal,
    # compared against a pure-f32 reference -> tolerance reflects bf16 rounding over 2 layers.
    err = float(jnp.max(jnp.abs(out - ref)))
    assert err < 5e-2, f"max abs err (single tile) {err}"

    # Multi-tile path: exercises the query-tile grid axis + K/V scratch cache reuse.
    out_tiled = transformer_dec_model(tgt, memory, mask, memory_mask, params,
                                      self_heads=SELF_HEADS, cross_heads=CROSS_HEADS,
                                      q_tile=16)
    out_tiled = jax.block_until_ready(out_tiled)
    err_t = float(jnp.max(jnp.abs(out_tiled - ref)))
    assert err_t < 5e-2, f"max abs err (tiled) {err_t}"

    print("KERNEL_OK")
</pallas_src>

<mosaic_0001>
module attributes {stable_mosaic.version = 11 : i64} {
  func.func @dec_layer_kernel(%arg0: i32, %arg1: i32, %arg2: memref<1x32x128xf32, #tpu.memory_space<vmem>>, %arg3: memref<1x32x128xbf16, #tpu.memory_space<vmem>>, %arg4: memref<1x32x128xbf16, #tpu.memory_space<vmem>>, %arg5: memref<1x1x32xf32, #tpu.memory_space<vmem>>, %arg6: memref<1x1x32xf32, #tpu.memory_space<vmem>>, %arg7: memref<128x128xbf16, #tpu.memory_space<vmem>>, %arg8: memref<128x256xbf16, #tpu.memory_space<vmem>>, %arg9: memref<4x32x128xbf16, #tpu.memory_space<vmem>>, %arg10: memref<128x128xbf16, #tpu.memory_space<vmem>>, %arg11: memref<128x256xbf16, #tpu.memory_space<vmem>>, %arg12: memref<2x64x128xbf16, #tpu.memory_space<vmem>>, %arg13: memref<128x256xbf16, #tpu.memory_space<vmem>>, %arg14: memref<256x128xbf16, #tpu.memory_space<vmem>>, %arg15: memref<11x128xf32, #tpu.memory_space<vmem>>, %arg16: memref<1x256xf32, #tpu.memory_space<vmem>>, %arg17: memref<1x256xf32, #tpu.memory_space<vmem>>, %arg18: memref<1x256xf32, #tpu.memory_space<vmem>>, %arg19: memref<1x32x128xf32, #tpu.memory_space<vmem>>, %arg20: memref<32x256xbf16, #tpu.memory_space<vmem>>, %arg21: memref<32x256xbf16, #tpu.memory_space<vmem>>) attributes {dimension_semantics = [#tpu.dimension_semantics<parallel>, #tpu.dimension_semantics<arbitrary>], iteration_bounds = array<i64: 2, 1>, scalar_prefetch = 0 : i64, scratch_operands = 2 : i64, tpu.core_type = #tpu.core_type<tc>, window_params = [{transform_indices = @transform_0, window_bounds = array<i64: 1, 32, 128>}, {transform_indices = @transform_1, window_bounds = array<i64: 1, 32, 128>}, {transform_indices = @transform_2, window_bounds = array<i64: 1, 32, 128>}, {transform_indices = @transform_3, window_bounds = array<i64: 1, 1, 32>}, {transform_indices = @transform_4, window_bounds = array<i64: 1, 1, 32>}, {pipeline_mode = #tpu.pipeline_mode<synchronous>, transform_indices = @transform_5, window_bounds = array<i64: 128, 128>}, {pipeline_mode = #tpu.pipeline_mode<synchronous>, transform_indices = @transform_6, window_bounds = array<i64: 128, 256>}, {pipeline_mode = #tpu.pipeline_mode<synchronous>, transform_indices = @transform_7, window_bounds = array<i64: 4, 32, 128>}, {pipeline_mode = #tpu.pipeline_mode<synchronous>, transform_indices = @transform_8, window_bounds = array<i64: 128, 128>}, {pipeline_mode = #tpu.pipeline_mode<synchronous>, transform_indices = @transform_9, window_bounds = array<i64: 128, 256>}, {pipeline_mode = #tpu.pipeline_mode<synchronous>, transform_indices = @transform_10, window_bounds = array<i64: 2, 64, 128>}, {pipeline_mode = #tpu.pipeline_mode<synchronous>, transform_indices = @transform_11, window_bounds = array<i64: 128, 256>}, {pipeline_mode = #tpu.pipeline_mode<synchronous>, transform_indices = @transform_12, window_bounds = array<i64: 256, 128>}, {pipeline_mode = #tpu.pipeline_mode<synchronous>, transform_indices = @transform_13, window_bounds = array<i64: 11, 128>}, {pipeline_mode = #tpu.pipeline_mode<synchronous>, transform_indices = @transform_14, window_bounds = array<i64: 1, 256>}, {pipeline_mode = #tpu.pipeline_mode<synchronous>, transform_indices = @transform_15, window_bounds = array<i64: 1, 256>}, {pipeline_mode = #tpu.pipeline_mode<synchronous>, transform_indices = @transform_16, window_bounds = array<i64: 1, 256>}, {transform_indices = @transform_17, window_bounds = array<i64: 1, 32, 128>}]} {
    %c0_i32 = arith.constant 0 : i32
    %0 = arith.cmpi eq, %arg1, %c0_i32 : i32
    %1 = arith.extui %0 : i1 to i32
    %c0_i32_0 = arith.constant 0 : i32
    %2 = arith.cmpi ne, %1, %c0_i32_0 : i32
    scf.if %2 {
      %c0_113 = arith.constant 0 : index
      %c0_114 = arith.constant 0 : index
      %c0_115 = arith.constant 0 : index
      %269 = vector.load %arg3[%c0_113, %c0_114, %c0_115] : memref<1x32x128xbf16, #tpu.memory_space<vmem>>, vector<1x32x128xbf16>
      %270 = vector.shape_cast %269 : vector<1x32x128xbf16> to vector<32x128xbf16>
      %c0_116 = arith.constant 0 : index
      %c0_117 = arith.constant 0 : index
      %271 = vector.load %arg8[%c0_116, %c0_117] : memref<128x256xbf16, #tpu.memory_space<vmem>>, vector<128x256xbf16>
      %cst_118 = arith.constant dense<0.000000e+00> : vector<32x256xf32>
      %272 = tpu.matmul %270, %271, %cst_118 {dimension_numbers = #tpu.dot_dimension_numbers<[1], [0], [0], [1], [0, 0, 1, 1], [], []>} : vector<32x128xbf16>, vector<128x256xbf16>, vector<32x256xf32> -> vector<32x256xf32>
      %c0_119 = arith.constant 0 : index
      %c0_120 = arith.constant 0 : index
      %273 = vector.load %arg16[%c0_119, %c0_120] : memref<1x256xf32, #tpu.memory_space<vmem>>, vector<1x256xf32>
      %274 = vector.broadcast %273 : vector<1x256xf32> to vector<32x256xf32>
      %275 = arith.addf %272, %274 : vector<32x256xf32>
      %276 = arith.truncf %275 : vector<32x256xf32> to vector<32x256xbf16>
      %c0_121 = arith.constant 0 : index
      %c0_122 = arith.constant 0 : index
      %277 = vector.load %arg20[%c0_121, %c0_122] : memref<32x256xbf16, #tpu.memory_space<vmem>>, vector<32x256xbf16>
      tpu.vector_store %arg20[%c0_121, %c0_122], %276 {strides = array<i32>} : memref<32x256xbf16, #tpu.memory_space<vmem>>, vector<32x256xbf16>,
      %c0_123 = arith.constant 0 : index
      %c0_124 = arith.constant 0 : index
      %c0_125 = arith.constant 0 : index
      %278 = vector.load %arg4[%c0_123, %c0_124, %c0_125] : memref<1x32x128xbf16, #tpu.memory_space<vmem>>, vector<1x32x128xbf16>
      %279 = vector.shape_cast %278 : vector<1x32x128xbf16> to vector<32x128xbf16>
      %c0_126 = arith.constant 0 : index
      %c0_127 = arith.constant 0 : index
      %280 = vector.load %arg11[%c0_126, %c0_127] : memref<128x256xbf16, #tpu.memory_space<vmem>>, vector<128x256xbf16>
      %cst_128 = arith.constant dense<0.000000e+00> : vector<32x256xf32>
      %281 = tpu.matmul %279, %280, %cst_128 {dimension_numbers = #tpu.dot_dimension_numbers<[1], [0], [0], [1], [0, 0, 1, 1], [], []>} : vector<32x128xbf16>, vector<128x256xbf16>, vector<32x256xf32> -> vector<32x256xf32>
      %c0_129 = arith.constant 0 : index
      %c0_130 = arith.constant 0 : index
      %282 = vector.load %arg17[%c0_129, %c0_130] : memref<1x256xf32, #tpu.memory_space<vmem>>, vector<1x256xf32>
      %283 = vector.broadcast %282 : vector<1x256xf32> to vector<32x256xf32>
      %284 = arith.addf %281, %283 : vector<32x256xf32>
      %285 = arith.truncf %284 : vector<32x256xf32> to vector<32x256xbf16>
      %c0_131 = arith.constant 0 : index
      %c0_132 = arith.constant 0 : index
      %286 = vector.load %arg21[%c0_131, %c0_132] : memref<32x256xbf16, #tpu.memory_space<vmem>>, vector<32x256xbf16>
      tpu.vector_store %arg21[%c0_131, %c0_132], %285 {strides = array<i32>} : memref<32x256xbf16, #tpu.memory_space<vmem>>, vector<32x256xbf16>,
    } else {
    }
    %c0 = arith.constant 0 : index
    %c0_1 = arith.constant 0 : index
    %3 = vector.load %arg15[%c0, %c0_1] : memref<11x128xf32, #tpu.memory_space<vmem>>, vector<11x128xf32>
    %4 = vector.extract_strided_slice %3 {offsets = [0, 0], sizes = [1, 128], strides = [1, 1]} : vector<11x128xf32> to vector<1x128xf32>
    %5 = vector.extract_strided_slice %3 {offsets = [1, 0], sizes = [1, 128], strides = [1, 1]} : vector<11x128xf32> to vector<1x128xf32>
    %6 = vector.extract_strided_slice %3 {offsets = [2, 0], sizes = [1, 128], strides = [1, 1]} : vector<11x128xf32> to vector<1x128xf32>
    %7 = vector.extract_strided_slice %3 {offsets = [3, 0], sizes = [1, 128], strides = [1, 1]} : vector<11x128xf32> to vector<1x128xf32>
    %8 = vector.extract_strided_slice %3 {offsets = [4, 0], sizes = [1, 128], strides = [1, 1]} : vector<11x128xf32> to vector<1x128xf32>
    %9 = vector.extract_strided_slice %3 {offsets = [5, 0], sizes = [1, 128], strides = [1, 1]} : vector<11x128xf32> to vector<1x128xf32>
    %10 = vector.extract_strided_slice %3 {offsets = [6, 0], sizes = [1, 128], strides = [1, 1]} : vector<11x128xf32> to vector<1x128xf32>
    %11 = vector.extract_strided_slice %3 {offsets = [7, 0], sizes = [1, 128], strides = [1, 1]} : vector<11x128xf32> to vector<1x128xf32>
    %12 = vector.extract_strided_slice %3 {offsets = [8, 0], sizes = [1, 128], strides = [1, 1]} : vector<11x128xf32> to vector<1x128xf32>
    %13 = vector.extract_strided_slice %3 {offsets = [9, 0], sizes = [1, 128], strides = [1, 1]} : vector<11x128xf32> to vector<1x128xf32>
    %14 = vector.extract_strided_slice %3 {offsets = [10, 0], sizes = [1, 128], strides = [1, 1]} : vector<11x128xf32> to vector<1x128xf32>
    %c0_2 = arith.constant 0 : index
    %c0_3 = arith.constant 0 : index
    %c0_4 = arith.constant 0 : index
    %15 = vector.load %arg5[%c0_2, %c0_3, %c0_4] : memref<1x1x32xf32, #tpu.memory_space<vmem>>, vector<1x1x32xf32>
    %16 = vector.shape_cast %15 : vector<1x1x32xf32> to vector<1x32xf32>
    %cst = arith.constant 0.000000e+00 : f32
    %17 = vector.broadcast %cst : f32 to vector<1x32xf32>
    %18 = arith.cmpf oeq, %16, %17 : vector<1x32xf32>
    %cst_5 = arith.constant -1.000000e+09 : f32
    %cst_6 = arith.constant 0.000000e+00 : f32
    %19 = vector.broadcast %cst_5 : f32 to vector<1x32xf32>
    %20 = vector.broadcast %cst_6 : f32 to vector<1x32xf32>
    %21 = arith.select %18, %19, %20 : vector<1x32xi1>, vector<1x32xf32>
    %c0_7 = arith.constant 0 : index
    %c0_8 = arith.constant 0 : index
    %c0_9 = arith.constant 0 : index
    %22 = vector.load %arg6[%c0_7, %c0_8, %c0_9] : memref<1x1x32xf32, #tpu.memory_space<vmem>>, vector<1x1x32xf32>
    %23 = vector.shape_cast %22 : vector<1x1x32xf32> to vector<1x32xf32>
    %cst_10 = arith.constant 0.000000e+00 : f32
    %24 = vector.broadcast %cst_10 : f32 to vector<1x32xf32>
    %25 = arith.cmpf oeq, %23, %24 : vector<1x32xf32>
    %cst_11 = arith.constant -1.000000e+09 : f32
    %cst_12 = arith.constant 0.000000e+00 : f32
    %26 = vector.broadcast %cst_11 : f32 to vector<1x32xf32>
    %27 = vector.broadcast %cst_12 : f32 to vector<1x32xf32>
    %28 = arith.select %25, %26, %27 : vector<1x32xi1>, vector<1x32xf32>
    %c0_13 = arith.constant 0 : index
    %c0_14 = arith.constant 0 : index
    %c0_15 = arith.constant 0 : index
    %29 = vector.load %arg2[%c0_13, %c0_14, %c0_15] : memref<1x32x128xf32, #tpu.memory_space<vmem>>, vector<1x32x128xf32>
    %30 = vector.shape_cast %29 : vector<1x32x128xf32> to vector<32x128xf32>
    %31 = arith.truncf %30 : vector<32x128xf32> to vector<32x128xbf16>
    %c0_16 = arith.constant 0 : index
    %c0_17 = arith.constant 0 : index
    %32 = vector.load %arg7[%c0_16, %c0_17] : memref<128x128xbf16, #tpu.memory_space<vmem>>, vector<128x128xbf16>
    %cst_18 = arith.constant dense<0.000000e+00> : vector<32x128xf32>
    %33 = tpu.matmul %31, %32, %cst_18 {dimension_numbers = #tpu.dot_dimension_numbers<[1], [0], [0], [1], [0, 0, 1, 1], [], []>} : vector<32x128xbf16>, vector<128x128xbf16>, vector<32x128xf32> -> vector<32x128xf32>
    %34 = vector.broadcast %10 : vector<1x128xf32> to vector<32x128xf32>
    %35 = arith.addf %33, %34 : vector<32x128xf32>
    %36 = arith.truncf %35 : vector<32x128xf32> to vector<32x128xbf16>
    %cst_19 = arith.constant 0.000000e+00 : f32
    %37 = vector.broadcast %cst_19 : f32 to vector<32x128xf32>
    %38 = vector.extract_strided_slice %36 {offsets = [0, 0], sizes = [32, 32], strides = [1, 1]} : vector<32x128xbf16> to vector<32x32xbf16>
    %c0_20 = arith.constant 0 : index
    %c0_21 = arith.constant 0 : index
    %39 = vector.load %arg20[%c0_20, %c0_21] : memref<32x256xbf16, #tpu.memory_space<vmem>>, vector<32x32xbf16>
    %c0_22 = arith.constant 0 : index
    %c128 = arith.constant 128 : index
    %40 = vector.load %arg20[%c0_22, %c128] : memref<32x256xbf16, #tpu.memory_space<vmem>>, vector<32x32xbf16>
    %cst_23 = arith.constant dense<0.000000e+00> : vector<32x32xf32>
    %41 = tpu.matmul %38, %39, %cst_23 {dimension_numbers = #tpu.dot_dimension_numbers<[1], [1], [0], [0], [0, 0, 1, 0], [], []>} : vector<32x32xbf16>, vector<32x32xbf16>, vector<32x32xf32> -> vector<32x32xf32>
    %42 = vector.broadcast %21 : vector<1x32xf32> to vector<32x32xf32>
    %43 = arith.addf %41, %42 : vector<32x32xf32>
    %cst_24 = arith.constant dense<0xFF800000> : vector<32xf32>
    %44 = vector.multi_reduction <maximumf>, %43, %cst_24 [1] : vector<32x32xf32> to vector<32xf32>
    %45 = vector.shape_cast %44 : vector<32xf32> to vector<32x1xf32>
    %46 = vector.broadcast %45 : vector<32x1xf32> to vector<32x32xf32>
    %47 = arith.subf %43, %46 : vector<32x32xf32>
    %48 = math.exp %47 : vector<32x32xf32>
    %cst_25 = arith.constant dense<0.000000e+00> : vector<32xf32>
    %49 = vector.multi_reduction <add>, %48, %cst_25 [1] : vector<32x32xf32> to vector<32xf32>
    %50 = vector.shape_cast %49 : vector<32xf32> to vector<32x1xf32>
    %51 = tpu.reciprocal %50 {approx = true} : vector<32x1xf32> -> vector<32x1xf32>
    %52 = vector.broadcast %51 : vector<32x1xf32> to vector<32x32xf32>
    %53 = arith.mulf %48, %52 : vector<32x32xf32>
    %54 = arith.truncf %53 : vector<32x32xf32> to vector<32x32xbf16>
    %cst_26 = arith.constant dense<0.000000e+00> : vector<32x32xf32>
    %55 = tpu.matmul %54, %40, %cst_26 {dimension_numbers = #tpu.dot_dimension_numbers<[1], [0], [0], [1], [0, 0, 1, 1], [], []>} : vector<32x32xbf16>, vector<32x32xbf16>, vector<32x32xf32> -> vector<32x32xf32>
    %56 = arith.truncf %55 : vector<32x32xf32> to vector<32x32xbf16>
    %c0_27 = arith.constant 0 : index
    %c0_28 = arith.constant 0 : index
    %c0_29 = arith.constant 0 : index
    %57 = vector.load %arg9[%c0_27, %c0_28, %c0_29] : memref<4x32x128xbf16, #tpu.memory_space<vmem>>, vector<1x32x128xbf16>
    %58 = vector.shape_cast %57 : vector<1x32x128xbf16> to vector<32x128xbf16>
    %cst_30 = arith.constant dense<0.000000e+00> : vector<32x128xf32>
    %59 = tpu.matmul %56, %58, %cst_30 {dimension_numbers = #tpu.dot_dimension_numbers<[1], [0], [0], [1], [0, 0, 1, 1], [], []>} : vector<32x32xbf16>, vector<32x128xbf16>, vector<32x128xf32> -> vector<32x128xf32>
    %60 = arith.addf %37, %59 : vector<32x128xf32>
    %61 = vector.extract_strided_slice %36 {offsets = [0, 32], sizes = [32, 32], strides = [1, 1]} : vector<32x128xbf16> to vector<32x32xbf16>
    %c0_31 = arith.constant 0 : index
    %c32 = arith.constant 32 : index
    %62 = vector.load %arg20[%c0_31, %c32] : memref<32x256xbf16, #tpu.memory_space<vmem>>, vector<32x32xbf16>
    %c0_32 = arith.constant 0 : index
    %c160 = arith.constant 160 : index
    %63 = vector.load %arg20[%c0_32, %c160] : memref<32x256xbf16, #tpu.memory_space<vmem>>, vector<32x32xbf16>
    %cst_33 = arith.constant dense<0.000000e+00> : vector<32x32xf32>
    %64 = tpu.matmul %61, %62, %cst_33 {dimension_numbers = #tpu.dot_dimension_numbers<[1], [1], [0], [0], [0, 0, 1, 0], [], []>} : vector<32x32xbf16>, vector<32x32xbf16>, vector<32x32xf32> -> vector<32x32xf32>
    %65 = vector.broadcast %21 : vector<1x32xf32> to vector<32x32xf32>
    %66 = arith.addf %64, %65 : vector<32x32xf32>
    %cst_34 = arith.constant dense<0xFF800000> : vector<32xf32>
    %67 = vector.multi_reduction <maximumf>, %66, %cst_34 [1] : vector<32x32xf32> to vector<32xf32>
    %68 = vector.shape_cast %67 : vector<32xf32> to vector<32x1xf32>
    %69 = vector.broadcast %68 : vector<32x1xf32> to vector<32x32xf32>
    %70 = arith.subf %66, %69 : vector<32x32xf32>
    %71 = math.exp %70 : vector<32x32xf32>
    %cst_35 = arith.constant dense<0.000000e+00> : vector<32xf32>
    %72 = vector.multi_reduction <add>, %71, %cst_35 [1] : vector<32x32xf32> to vector<32xf32>
    %73 = vector.shape_cast %72 : vector<32xf32> to vector<32x1xf32>
    %74 = tpu.reciprocal %73 {approx = true} : vector<32x1xf32> -> vector<32x1xf32>
    %75 = vector.broadcast %74 : vector<32x1xf32> to vector<32x32xf32>
    %76 = arith.mulf %71, %75 : vector<32x32xf32>
    %77 = arith.truncf %76 : vector<32x32xf32> to vector<32x32xbf16>
    %cst_36 = arith.constant dense<0.000000e+00> : vector<32x32xf32>
    %78 = tpu.matmul %77, %63, %cst_36 {dimension_numbers = #tpu.dot_dimension_numbers<[1], [0], [0], [1], [0, 0, 1, 1], [], []>} : vector<32x32xbf16>, vector<32x32xbf16>, vector<32x32xf32> -> vector<32x32xf32>
    %79 = arith.truncf %78 : vector<32x32xf32> to vector<32x32xbf16>
    %c1 = arith.constant 1 : index
    %c0_37 = arith.constant 0 : index
    %c0_38 = arith.constant 0 : index
    %80 = vector.load %arg9[%c1, %c0_37, %c0_38] : memref<4x32x128xbf16, #tpu.memory_space<vmem>>, vector<1x32x128xbf16>
    %81 = vector.shape_cast %80 : vector<1x32x128xbf16> to vector<32x128xbf16>
    %cst_39 = arith.constant dense<0.000000e+00> : vector<32x128xf32>
    %82 = tpu.matmul %79, %81, %cst_39 {dimension_numbers = #tpu.dot_dimension_numbers<[1], [0], [0], [1], [0, 0, 1, 1], [], []>} : vector<32x32xbf16>, vector<32x128xbf16>, vector<32x128xf32> -> vector<32x128xf32>
    %83 = arith.addf %60, %82 : vector<32x128xf32>
    %84 = vector.extract_strided_slice %36 {offsets = [0, 64], sizes = [32, 32], strides = [1, 1]} : vector<32x128xbf16> to vector<32x32xbf16>
    %c0_40 = arith.constant 0 : index
    %c64 = arith.constant 64 : index
    %85 = vector.load %arg20[%c0_40, %c64] : memref<32x256xbf16, #tpu.memory_space<vmem>>, vector<32x32xbf16>
    %c0_41 = arith.constant 0 : index
    %c192 = arith.constant 192 : index
    %86 = vector.load %arg20[%c0_41, %c192] : memref<32x256xbf16, #tpu.memory_space<vmem>>, vector<32x32xbf16>
    %cst_42 = arith.constant dense<0.000000e+00> : vector<32x32xf32>
    %87 = tpu.matmul %84, %85, %cst_42 {dimension_numbers = #tpu.dot_dimension_numbers<[1], [1], [0], [0], [0, 0, 1, 0], [], []>} : vector<32x32xbf16>, vector<32x32xbf16>, vector<32x32xf32> -> vector<32x32xf32>
    %88 = vector.broadcast %21 : vector<1x32xf32> to vector<32x32xf32>
    %89 = arith.addf %87, %88 : vector<32x32xf32>
    %cst_43 = arith.constant dense<0xFF800000> : vector<32xf32>
    %90 = vector.multi_reduction <maximumf>, %89, %cst_43 [1] : vector<32x32xf32> to vector<32xf32>
    %91 = vector.shape_cast %90 : vector<32xf32> to vector<32x1xf32>
    %92 = vector.broadcast %91 : vector<32x1xf32> to vector<32x32xf32>
    %93 = arith.subf %89, %92 : vector<32x32xf32>
    %94 = math.exp %93 : vector<32x32xf32>
    %cst_44 = arith.constant dense<0.000000e+00> : vector<32xf32>
    %95 = vector.multi_reduction <add>, %94, %cst_44 [1] : vector<32x32xf32> to vector<32xf32>
    %96 = vector.shape_cast %95 : vector<32xf32> to vector<32x1xf32>
    %97 = tpu.reciprocal %96 {approx = true} : vector<32x1xf32> -> vector<32x1xf32>
    %98 = vector.broadcast %97 : vector<32x1xf32> to vector<32x32xf32>
    %99 = arith.mulf %94, %98 : vector<32x32xf32>
    %100 = arith.truncf %99 : vector<32x32xf32> to vector<32x32xbf16>
    %cst_45 = arith.constant dense<0.000000e+00> : vector<32x32xf32>
    %101 = tpu.matmul %100, %86, %cst_45 {dimension_numbers = #tpu.dot_dimension_numbers<[1], [0], [0], [1], [0, 0, 1, 1], [], []>} : vector<32x32xbf16>, vector<32x32xbf16>, vector<32x32xf32> -> vector<32x32xf32>
    %102 = arith.truncf %101 : vector<32x32xf32> to vector<32x32xbf16>
    %c2 = arith.constant 2 : index
    %c0_46 = arith.constant 0 : index
    %c0_47 = arith.constant 0 : index
    %103 = vector.load %arg9[%c2, %c0_46, %c0_47] : memref<4x32x128xbf16, #tpu.memory_space<vmem>>, vector<1x32x128xbf16>
    %104 = vector.shape_cast %103 : vector<1x32x128xbf16> to vector<32x128xbf16>
    %cst_48 = arith.constant dense<0.000000e+00> : vector<32x128xf32>
    %105 = tpu.matmul %102, %104, %cst_48 {dimension_numbers = #tpu.dot_dimension_numbers<[1], [0], [0], [1], [0, 0, 1, 1], [], []>} : vector<32x32xbf16>, vector<32x128xbf16>, vector<32x128xf32> -> vector<32x128xf32>
    %106 = arith.addf %83, %105 : vector<32x128xf32>
    %107 = vector.extract_strided_slice %36 {offsets = [0, 96], sizes = [32, 32], strides = [1, 1]} : vector<32x128xbf16> to vector<32x32xbf16>
    %c0_49 = arith.constant 0 : index
    %c96 = arith.constant 96 : index
    %108 = vector.load %arg20[%c0_49, %c96] : memref<32x256xbf16, #tpu.memory_space<vmem>>, vector<32x32xbf16>
    %c0_50 = arith.constant 0 : index
    %c224 = arith.constant 224 : index
    %109 = vector.load %arg20[%c0_50, %c224] : memref<32x256xbf16, #tpu.memory_space<vmem>>, vector<32x32xbf16>
    %cst_51 = arith.constant dense<0.000000e+00> : vector<32x32xf32>
    %110 = tpu.matmul %107, %108, %cst_51 {dimension_numbers = #tpu.dot_dimension_numbers<[1], [1], [0], [0], [0, 0, 1, 0], [], []>} : vector<32x32xbf16>, vector<32x32xbf16>, vector<32x32xf32> -> vector<32x32xf32>
    %111 = vector.broadcast %21 : vector<1x32xf32> to vector<32x32xf32>
    %112 = arith.addf %110, %111 : vector<32x32xf32>
    %cst_52 = arith.constant dense<0xFF800000> : vector<32xf32>
    %113 = vector.multi_reduction <maximumf>, %112, %cst_52 [1] : vector<32x32xf32> to vector<32xf32>
    %114 = vector.shape_cast %113 : vector<32xf32> to vector<32x1xf32>
    %115 = vector.broadcast %114 : vector<32x1xf32> to vector<32x32xf32>
    %116 = arith.subf %112, %115 : vector<32x32xf32>
    %117 = math.exp %116 : vector<32x32xf32>
    %cst_53 = arith.constant dense<0.000000e+00> : vector<32xf32>
    %118 = vector.multi_reduction <add>, %117, %cst_53 [1] : vector<32x32xf32> to vector<32xf32>
    %119 = vector.shape_cast %118 : vector<32xf32> to vector<32x1xf32>
    %120 = tpu.reciprocal %119 {approx = true} : vector<32x1xf32> -> vector<32x1xf32>
    %121 = vector.broadcast %120 : vector<32x1xf32> to vector<32x32xf32>
    %122 = arith.mulf %117, %121 : vector<32x32xf32>
    %123 = arith.truncf %122 : vector<32x32xf32> to vector<32x32xbf16>
    %cst_54 = arith.constant dense<0.000000e+00> : vector<32x32xf32>
    %124 = tpu.matmul %123, %109, %cst_54 {dimension_numbers = #tpu.dot_dimension_numbers<[1], [0], [0], [1], [0, 0, 1, 1], [], []>} : vector<32x32xbf16>, vector<32x32xbf16>, vector<32x32xf32> -> vector<32x32xf32>
    %125 = arith.truncf %124 : vector<32x32xf32> to vector<32x32xbf16>
    %c3 = arith.constant 3 : index
    %c0_55 = arith.constant 0 : index
    %c0_56 = arith.constant 0 : index
    %126 = vector.load %arg9[%c3, %c0_55, %c0_56] : memref<4x32x128xbf16, #tpu.memory_space<vmem>>, vector<1x32x128xbf16>
    %127 = vector.shape_cast %126 : vector<1x32x128xbf16> to vector<32x128xbf16>
    %cst_57 = arith.constant dense<0.000000e+00> : vector<32x128xf32>
    %128 = tpu.matmul %125, %127, %cst_57 {dimension_numbers = #tpu.dot_dimension_numbers<[1], [0], [0], [1], [0, 0, 1, 1], [], []>} : vector<32x32xbf16>, vector<32x128xbf16>, vector<32x128xf32> -> vector<32x128xf32>
    %129 = arith.addf %106, %128 : vector<32x128xf32>
    %130 = vector.broadcast %11 : vector<1x128xf32> to vector<32x128xf32>
    %131 = arith.addf %129, %130 : vector<32x128xf32>
    %132 = arith.addf %30, %131 : vector<32x128xf32>
    %cst_58 = arith.constant dense<0.000000e+00> : vector<32xf32>
    %133 = vector.multi_reduction <add>, %132, %cst_58 [1] : vector<32x128xf32> to vector<32xf32>
    %134 = vector.shape_cast %133 : vector<32xf32> to vector<32x1xf32>
    %cst_59 = arith.constant 1.280000e+02 : f32
    %135 = vector.broadcast %cst_59 : f32 to vector<32x1xf32>
    %136 = arith.divf %134, %135 : vector<32x1xf32>
    %137 = vector.broadcast %136 : vector<32x1xf32> to vector<32x128xf32>
    %138 = arith.subf %132, %137 : vector<32x128xf32>
    %139 = arith.mulf %138, %138 : vector<32x128xf32>
    %cst_60 = arith.constant dense<0.000000e+00> : vector<32xf32>
    %140 = vector.multi_reduction <add>, %139, %cst_60 [1] : vector<32x128xf32> to vector<32xf32>
    %141 = vector.shape_cast %140 : vector<32xf32> to vector<32x1xf32>
    %cst_61 = arith.constant 0.00787401571 : f32
    %142 = vector.broadcast %cst_61 : f32 to vector<32x1xf32>
    %143 = arith.mulf %141, %142 : vector<32x1xf32>
    %144 = math.sqrt %143 : vector<32x1xf32>
    %cst_62 = arith.constant 9.99999997E-7 : f32
    %145 = vector.broadcast %cst_62 : f32 to vector<32x1xf32>
    %146 = arith.addf %144, %145 : vector<32x1xf32>
    %147 = tpu.reciprocal %146 : vector<32x1xf32> -> vector<32x1xf32>
    %148 = vector.broadcast %4 : vector<1x128xf32> to vector<32x128xf32>
    %149 = arith.mulf %148, %138 : vector<32x128xf32>
    %150 = vector.broadcast %147 : vector<32x1xf32> to vector<32x128xf32>
    %151 = arith.mulf %149, %150 : vector<32x128xf32>
    %152 = vector.broadcast %5 : vector<1x128xf32> to vector<32x128xf32>
    %153 = arith.addf %151, %152 : vector<32x128xf32>
    %154 = arith.truncf %153 : vector<32x128xf32> to vector<32x128xbf16>
    %c0_63 = arith.constant 0 : index
    %c0_64 = arith.constant 0 : index
    %155 = vector.load %arg10[%c0_63, %c0_64] : memref<128x128xbf16, #tpu.memory_space<vmem>>, vector<128x128xbf16>
    %cst_65 = arith.constant dense<0.000000e+00> : vector<32x128xf32>
    %156 = tpu.matmul %154, %155, %cst_65 {dimension_numbers = #tpu.dot_dimension_numbers<[1], [0], [0], [1], [0, 0, 1, 1], [], []>} : vector<32x128xbf16>, vector<128x128xbf16>, vector<32x128xf32> -> vector<32x128xf32>
    %157 = vector.broadcast %12 : vector<1x128xf32> to vector<32x128xf32>
    %158 = arith.addf %156, %157 : vector<32x128xf32>
    %159 = arith.truncf %158 : vector<32x128xf32> to vector<32x128xbf16>
    %cst_66 = arith.constant 0.000000e+00 : f32
    %160 = vector.broadcast %cst_66 : f32 to vector<32x128xf32>
    %161 = vector.extract_strided_slice %159 {offsets = [0, 0], sizes = [32, 64], strides = [1, 1]} : vector<32x128xbf16> to vector<32x64xbf16>
    %c0_67 = arith.constant 0 : index
    %c0_68 = arith.constant 0 : index
    %162 = vector.load %arg21[%c0_67, %c0_68] : memref<32x256xbf16, #tpu.memory_space<vmem>>, vector<32x64xbf16>
    %c0_69 = arith.constant 0 : index
    %c128_70 = arith.constant 128 : index
    %163 = vector.load %arg21[%c0_69, %c128_70] : memref<32x256xbf16, #tpu.memory_space<vmem>>, vector<32x64xbf16>
    %cst_71 = arith.constant dense<0.000000e+00> : vector<32x32xf32>
    %164 = tpu.matmul %161, %162, %cst_71 {dimension_numbers = #tpu.dot_dimension_numbers<[1], [1], [0], [0], [0, 0, 1, 0], [], []>} : vector<32x64xbf16>, vector<32x64xbf16>, vector<32x32xf32> -> vector<32x32xf32>
    %165 = vector.broadcast %28 : vector<1x32xf32> to vector<32x32xf32>
    %166 = arith.addf %164, %165 : vector<32x32xf32>
    %cst_72 = arith.constant dense<0xFF800000> : vector<32xf32>
    %167 = vector.multi_reduction <maximumf>, %166, %cst_72 [1] : vector<32x32xf32> to vector<32xf32>
    %168 = vector.shape_cast %167 : vector<32xf32> to vector<32x1xf32>
    %169 = vector.broadcast %168 : vector<32x1xf32> to vector<32x32xf32>
    %170 = arith.subf %166, %169 : vector<32x32xf32>
    %171 = math.exp %170 : vector<32x32xf32>
    %cst_73 = arith.constant dense<0.000000e+00> : vector<32xf32>
    %172 = vector.multi_reduction <add>, %171, %cst_73 [1] : vector<32x32xf32> to vector<32xf32>
    %173 = vector.shape_cast %172 : vector<32xf32> to vector<32x1xf32>
    %174 = tpu.reciprocal %173 {approx = true} : vector<32x1xf32> -> vector<32x1xf32>
    %175 = vector.broadcast %174 : vector<32x1xf32> to vector<32x32xf32>
    %176 = arith.mulf %171, %175 : vector<32x32xf32>
    %177 = arith.truncf %176 : vector<32x32xf32> to vector<32x32xbf16>
    %cst_74 = arith.constant dense<0.000000e+00> : vector<32x64xf32>
    %178 = tpu.matmul %177, %163, %cst_74 {dimension_numbers = #tpu.dot_dimension_numbers<[1], [0], [0], [1], [0, 0, 1, 1], [], []>} : vector<32x32xbf16>, vector<32x64xbf16>, vector<32x64xf32> -> vector<32x64xf32>
    %179 = arith.truncf %178 : vector<32x64xf32> to vector<32x64xbf16>
    %c0_75 = arith.constant 0 : index
    %c0_76 = arith.constant 0 : index
    %c0_77 = arith.constant 0 : index
    %180 = vector.load %arg12[%c0_75, %c0_76, %c0_77] : memref<2x64x128xbf16, #tpu.memory_space<vmem>>, vector<1x64x128xbf16>
    %181 = vector.shape_cast %180 : vector<1x64x128xbf16> to vector<64x128xbf16>
    %cst_78 = arith.constant dense<0.000000e+00> : vector<32x128xf32>
    %182 = tpu.matmul %179, %181, %cst_78 {dimension_numbers = #tpu.dot_dimension_numbers<[1], [0], [0], [1], [0, 0, 1, 1], [], []>} : vector<32x64xbf16>, vector<64x128xbf16>, vector<32x128xf32> -> vector<32x128xf32>
    %183 = arith.addf %160, %182 : vector<32x128xf32>
    %184 = vector.extract_strided_slice %159 {offsets = [0, 64], sizes = [32, 64], strides = [1, 1]} : vector<32x128xbf16> to vector<32x64xbf16>
    %c0_79 = arith.constant 0 : index
    %c64_80 = arith.constant 64 : index
    %185 = vector.load %arg21[%c0_79, %c64_80] : memref<32x256xbf16, #tpu.memory_space<vmem>>, vector<32x64xbf16>
    %c0_81 = arith.constant 0 : index
    %c192_82 = arith.constant 192 : index
    %186 = vector.load %arg21[%c0_81, %c192_82] : memref<32x256xbf16, #tpu.memory_space<vmem>>, vector<32x64xbf16>
    %cst_83 = arith.constant dense<0.000000e+00> : vector<32x32xf32>
    %187 = tpu.matmul %184, %185, %cst_83 {dimension_numbers = #tpu.dot_dimension_numbers<[1], [1], [0], [0], [0, 0, 1, 0], [], []>} : vector<32x64xbf16>, vector<32x64xbf16>, vector<32x32xf32> -> vector<32x32xf32>
    %188 = vector.broadcast %28 : vector<1x32xf32> to vector<32x32xf32>
    %189 = arith.addf %187, %188 : vector<32x32xf32>
    %cst_84 = arith.constant dense<0xFF800000> : vector<32xf32>
    %190 = vector.multi_reduction <maximumf>, %189, %cst_84 [1] : vector<32x32xf32> to vector<32xf32>
    %191 = vector.shape_cast %190 : vector<32xf32> to vector<32x1xf32>
    %192 = vector.broadcast %191 : vector<32x1xf32> to vector<32x32xf32>
    %193 = arith.subf %189, %192 : vector<32x32xf32>
    %194 = math.exp %193 : vector<32x32xf32>
    %cst_85 = arith.constant dense<0.000000e+00> : vector<32xf32>
    %195 = vector.multi_reduction <add>, %194, %cst_85 [1] : vector<32x32xf32> to vector<32xf32>
    %196 = vector.shape_cast %195 : vector<32xf32> to vector<32x1xf32>
    %197 = tpu.reciprocal %196 {approx = true} : vector<32x1xf32> -> vector<32x1xf32>
    %198 = vector.broadcast %197 : vector<32x1xf32> to vector<32x32xf32>
    %199 = arith.mulf %194, %198 : vector<32x32xf32>
    %200 = arith.truncf %199 : vector<32x32xf32> to vector<32x32xbf16>
    %cst_86 = arith.constant dense<0.000000e+00> : vector<32x64xf32>
    %201 = tpu.matmul %200, %186, %cst_86 {dimension_numbers = #tpu.dot_dimension_numbers<[1], [0], [0], [1], [0, 0, 1, 1], [], []>} : vector<32x32xbf16>, vector<32x64xbf16>, vector<32x64xf32> -> vector<32x64xf32>
    %202 = arith.truncf %201 : vector<32x64xf32> to vector<32x64xbf16>
    %c1_87 = arith.constant 1 : index
    %c0_88 = arith.constant 0 : index
    %c0_89 = arith.constant 0 : index
    %203 = vector.load %arg12[%c1_87, %c0_88, %c0_89] : memref<2x64x128xbf16, #tpu.memory_space<vmem>>, vector<1x64x128xbf16>
    %204 = vector.shape_cast %203 : vector<1x64x128xbf16> to vector<64x128xbf16>
    %cst_90 = arith.constant dense<0.000000e+00> : vector<32x128xf32>
    %205 = tpu.matmul %202, %204, %cst_90 {dimension_numbers = #tpu.dot_dimension_numbers<[1], [0], [0], [1], [0, 0, 1, 1], [], []>} : vector<32x64xbf16>, vector<64x128xbf16>, vector<32x128xf32> -> vector<32x128xf32>
    %206 = arith.addf %183, %205 : vector<32x128xf32>
    %207 = vector.broadcast %13 : vector<1x128xf32> to vector<32x128xf32>
    %208 = arith.addf %206, %207 : vector<32x128xf32>
    %209 = arith.addf %153, %208 : vector<32x128xf32>
    %cst_91 = arith.constant dense<0.000000e+00> : vector<32xf32>
    %210 = vector.multi_reduction <add>, %209, %cst_91 [1] : vector<32x128xf32> to vector<32xf32>
    %211 = vector.shape_cast %210 : vector<32xf32> to vector<32x1xf32>
    %cst_92 = arith.constant 1.280000e+02 : f32
    %212 = vector.broadcast %cst_92 : f32 to vector<32x1xf32>
    %213 = arith.divf %211, %212 : vector<32x1xf32>
    %214 = vector.broadcast %213 : vector<32x1xf32> to vector<32x128xf32>
    %215 = arith.subf %209, %214 : vector<32x128xf32>
    %216 = arith.mulf %215, %215 : vector<32x128xf32>
    %cst_93 = arith.constant dense<0.000000e+00> : vector<32xf32>
    %217 = vector.multi_reduction <add>, %216, %cst_93 [1] : vector<32x128xf32> to vector<32xf32>
    %218 = vector.shape_cast %217 : vector<32xf32> to vector<32x1xf32>
    %cst_94 = arith.constant 0.00787401571 : f32
    %219 = vector.broadcast %cst_94 : f32 to vector<32x1xf32>
    %220 = arith.mulf %218, %219 : vector<32x1xf32>
    %221 = math.sqrt %220 : vector<32x1xf32>
    %cst_95 = arith.constant 9.99999997E-7 : f32
    %222 = vector.broadcast %cst_95 : f32 to vector<32x1xf32>
    %223 = arith.addf %221, %222 : vector<32x1xf32>
    %224 = tpu.reciprocal %223 : vector<32x1xf32> -> vector<32x1xf32>
    %225 = vector.broadcast %6 : vector<1x128xf32> to vector<32x128xf32>
    %226 = arith.mulf %225, %215 : vector<32x128xf32>
    %227 = vector.broadcast %224 : vector<32x1xf32> to vector<32x128xf32>
    %228 = arith.mulf %226, %227 : vector<32x128xf32>
    %229 = vector.broadcast %7 : vector<1x128xf32> to vector<32x128xf32>
    %230 = arith.addf %228, %229 : vector<32x128xf32>
    %231 = arith.truncf %230 : vector<32x128xf32> to vector<32x128xbf16>
    %c0_96 = arith.constant 0 : index
    %c0_97 = arith.constant 0 : index
    %232 = vector.load %arg13[%c0_96, %c0_97] : memref<128x256xbf16, #tpu.memory_space<vmem>>, vector<128x256xbf16>
    %cst_98 = arith.constant dense<0.000000e+00> : vector<32x256xf32>
    %233 = tpu.matmul %231, %232, %cst_98 {dimension_numbers = #tpu.dot_dimension_numbers<[1], [0], [0], [1], [0, 0, 1, 1], [], []>} : vector<32x128xbf16>, vector<128x256xbf16>, vector<32x256xf32> -> vector<32x256xf32>
    %c0_99 = arith.constant 0 : index
    %c0_100 = arith.constant 0 : index
    %234 = vector.load %arg18[%c0_99, %c0_100] : memref<1x256xf32, #tpu.memory_space<vmem>>, vector<1x256xf32>
    %235 = vector.broadcast %234 : vector<1x256xf32> to vector<32x256xf32>
    %236 = arith.addf %233, %235 : vector<32x256xf32>
    %cst_101 = arith.constant 0.000000e+00 : f32
    %237 = vector.broadcast %cst_101 : f32 to vector<32x256xf32>
    %238 = arith.maximumf %236, %237 : vector<32x256xf32>
    %239 = arith.truncf %238 : vector<32x256xf32> to vector<32x256xbf16>
    %c0_102 = arith.constant 0 : index
    %c0_103 = arith.constant 0 : index
    %240 = vector.load %arg14[%c0_102, %c0_103] : memref<256x128xbf16, #tpu.memory_space<vmem>>, vector<256x128xbf16>
    %cst_104 = arith.constant dense<0.000000e+00> : vector<32x128xf32>
    %241 = tpu.matmul %239, %240, %cst_104 {dimension_numbers = #tpu.dot_dimension_numbers<[1], [0], [0], [1], [0, 0, 1, 1], [], []>} : vector<32x256xbf16>, vector<256x128xbf16>, vector<32x128xf32> -> vector<32x128xf32>
    %242 = vector.broadcast %14 : vector<1x128xf32> to vector<32x128xf32>
    %243 = arith.addf %241, %242 : vector<32x128xf32>
    %244 = arith.addf %230, %243 : vector<32x128xf32>
    %cst_105 = arith.constant dense<0.000000e+00> : vector<32xf32>
    %245 = vector.multi_reduction <add>, %244, %cst_105 [1] : vector<32x128xf32> to vector<32xf32>
    %246 = vector.shape_cast %245 : vector<32xf32> to vector<32x1xf32>
    %cst_106 = arith.constant 1.280000e+02 : f32
    %247 = vector.broadcast %cst_106 : f32 to vector<32x1xf32>
    %248 = arith.divf %246, %247 : vector<32x1xf32>
    %249 = vector.broadcast %248 : vector<32x1xf32> to vector<32x128xf32>
    %250 = arith.subf %244, %249 : vector<32x128xf32>
    %251 = arith.mulf %250, %250 : vector<32x128xf32>
    %cst_107 = arith.constant dense<0.000000e+00> : vector<32xf32>
    %252 = vector.multi_reduction <add>, %251, %cst_107 [1] : vector<32x128xf32> to vector<32xf32>
    %253 = vector.shape_cast %252 : vector<32xf32> to vector<32x1xf32>
    %cst_108 = arith.constant 0.00787401571 : f32
    %254 = vector.broadcast %cst_108 : f32 to vector<32x1xf32>
    %255 = arith.mulf %253, %254 : vector<32x1xf32>
    %256 = math.sqrt %255 : vector<32x1xf32>
    %cst_109 = arith.constant 9.99999997E-7 : f32
    %257 = vector.broadcast %cst_109 : f32 to vector<32x1xf32>
    %258 = arith.addf %256, %257 : vector<32x1xf32>
    %259 = tpu.reciprocal %258 : vector<32x1xf32> -> vector<32x1xf32>
    %260 = vector.broadcast %8 : vector<1x128xf32> to vector<32x128xf32>
    %261 = arith.mulf %260, %250 : vector<32x128xf32>
    %262 = vector.broadcast %259 : vector<32x1xf32> to vector<32x128xf32>
    %263 = arith.mulf %261, %262 : vector<32x128xf32>
    %264 = vector.broadcast %9 : vector<1x128xf32> to vector<32x128xf32>
    %265 = arith.addf %263, %264 : vector<32x128xf32>
    %c0_110 = arith.constant 0 : index
    %c0_111 = arith.constant 0 : index
    %c0_112 = arith.constant 0 : index
    %266 = vector.load %arg19[%c0_110, %c0_111, %c0_112] : memref<1x32x128xf32, #tpu.memory_space<vmem>>, vector<1x32x128xf32>
    %267 = vector.shape_cast %266 : vector<1x32x128xf32> to vector<32x128xf32>
    %268 = vector.shape_cast %265 : vector<32x128xf32> to vector<1x32x128xf32>
    tpu.vector_store %arg19[%c0_110, %c0_111, %c0_112], %268 {strides = array<i32>} : memref<1x32x128xf32, #tpu.memory_space<vmem>>, vector<1x32x128xf32>,
    return
  }
  func.func @transform_0(%arg0: i32, %arg1: i32) -> (i32, i32, i32) {
    %c0_i32 = arith.constant 0 : i32
    %c0_i32_0 = arith.constant 0 : i32
    return %arg0, %arg1, %c0_i32 : i32, i32, i32
  }
  func.func @transform_1(%arg0: i32, %arg1: i32) -> (i32, i32, i32) {
    %c0_i32 = arith.constant 0 : i32
    %c0_i32_0 = arith.constant 0 : i32
    %c0_i32_1 = arith.constant 0 : i32
    return %arg0, %c0_i32, %c0_i32_0 : i32, i32, i32
  }
  func.func @transform_2(%arg0: i32, %arg1: i32) -> (i32, i32, i32) {
    %c0_i32 = arith.constant 0 : i32
    %c0_i32_0 = arith.constant 0 : i32
    %c0_i32_1 = arith.constant 0 : i32
    return %arg0, %c0_i32, %c0_i32_0 : i32, i32, i32
  }
  func.func @transform_3(%arg0: i32, %arg1: i32) -> (i32, i32, i32) {
    %c0_i32 = arith.constant 0 : i32
    %c0_i32_0 = arith.constant 0 : i32
    %c0_i32_1 = arith.constant 0 : i32
    return %arg0, %c0_i32, %c0_i32_0 : i32, i32, i32
  }
  func.func @transform_4(%arg0: i32, %arg1: i32) -> (i32, i32, i32) {
    %c0_i32 = arith.constant 0 : i32
    %c0_i32_0 = arith.constant 0 : i32
    %c0_i32_1 = arith.constant 0 : i32
    return %arg0, %c0_i32, %c0_i32_0 : i32, i32, i32
  }
  func.func @transform_5(%arg0: i32, %arg1: i32) -> (i32, i32) {
    %c0_i32 = arith.constant 0 : i32
    %c0_i32_0 = arith.constant 0 : i32
    %c0_i32_1 = arith.constant 0 : i32
    return %c0_i32, %c0_i32_0 : i32, i32
  }
  func.func @transform_6(%arg0: i32, %arg1: i32) -> (i32, i32) {
    %c0_i32 = arith.constant 0 : i32
    %c0_i32_0 = arith.constant 0 : i32
    %c0_i32_1 = arith.constant 0 : i32
    return %c0_i32, %c0_i32_0 : i32, i32
  }
  func.func @transform_7(%arg0: i32, %arg1: i32) -> (i32, i32, i32) {
    %c0_i32 = arith.constant 0 : i32
    %c0_i32_0 = arith.constant 0 : i32
    %c0_i32_1 = arith.constant 0 : i32
    %c0_i32_2 = arith.constant 0 : i32
    return %c0_i32, %c0_i32_0, %c0_i32_1 : i32, i32, i32
  }
  func.func @transform_8(%arg0: i32, %arg1: i32) -> (i32, i32) {
    %c0_i32 = arith.constant 0 : i32
    %c0_i32_0 = arith.constant 0 : i32
    %c0_i32_1 = arith.constant 0 : i32
    return %c0_i32, %c0_i32_0 : i32, i32
  }
  func.func @transform_9(%arg0: i32, %arg1: i32) -> (i32, i32) {
    %c0_i32 = arith.constant 0 : i32
    %c0_i32_0 = arith.constant 0 : i32
    %c0_i32_1 = arith.constant 0 : i32
    return %c0_i32, %c0_i32_0 : i32, i32
  }
  func.func @transform_10(%arg0: i32, %arg1: i32) -> (i32, i32, i32) {
    %c0_i32 = arith.constant 0 : i32
    %c0_i32_0 = arith.constant 0 : i32
    %c0_i32_1 = arith.constant 0 : i32
    %c0_i32_2 = arith.constant 0 : i32
    return %c0_i32, %c0_i32_0, %c0_i32_1 : i32, i32, i32
  }
  func.func @transform_11(%arg0: i32, %arg1: i32) -> (i32, i32) {
    %c0_i32 = arith.constant 0 : i32
    %c0_i32_0 = arith.constant 0 : i32
    %c0_i32_1 = arith.constant 0 : i32
    return %c0_i32, %c0_i32_0 : i32, i32
  }
  func.func @transform_12(%arg0: i32, %arg1: i32) -> (i32, i32) {
    %c0_i32 = arith.constant 0 : i32
    %c0_i32_0 = arith.constant 0 : i32
    %c0_i32_1 = arith.constant 0 : i32
    return %c0_i32, %c0_i32_0 : i32, i32
  }
  func.func @transform_13(%arg0: i32, %arg1: i32) -> (i32, i32) {
    %c0_i32 = arith.constant 0 : i32
    %c0_i32_0 = arith.constant 0 : i32
    %c0_i32_1 = arith.constant 0 : i32
    return %c0_i32, %c0_i32_0 : i32, i32
  }
  func.func @transform_14(%arg0: i32, %arg1: i32) -> (i32, i32) {
    %c0_i32 = arith.constant 0 : i32
    %c0_i32_0 = arith.constant 0 : i32
    %c0_i32_1 = arith.constant 0 : i32
    return %c0_i32, %c0_i32_0 : i32, i32
  }
  func.func @transform_15(%arg0: i32, %arg1: i32) -> (i32, i32) {
    %c0_i32 = arith.constant 0 : i32
    %c0_i32_0 = arith.constant 0 : i32
    %c0_i32_1 = arith.constant 0 : i32
    return %c0_i32, %c0_i32_0 : i32, i32
  }
  func.func @transform_16(%arg0: i32, %arg1: i32) -> (i32, i32) {
    %c0_i32 = arith.constant 0 : i32
    %c0_i32_0 = arith.constant 0 : i32
    %c0_i32_1 = arith.constant 0 : i32
    return %c0_i32, %c0_i32_0 : i32, i32
  }
  func.func @transform_17(%arg0: i32, %arg1: i32) -> (i32, i32, i32) {
    %c0_i32 = arith.constant 0 : i32
    %c0_i32_0 = arith.constant 0 : i32
    return %arg0, %arg1, %c0_i32 : i32, i32, i32
  }
}

</mosaic_0001>

<llo_original>
// kernel: tpu_custom_call.1
$region0: #{tpu_custom_call.1}
  #allocation0 [shape = 'u32[]', space=smem, size = 0x4, offset = 0x4, fixed_abs, tag = 'smem constant byte address 0x4 - core index']
  #allocation1 [shape = 'u32[72,128]{1,0:T(1,128)}', space=vmem, size = 0x9000, scoped, tag = 'internal scratch']
  #allocation2 [shape = 'bf16[32,256]{1,0:T(8,128)(2,1)}', space=vmem, size = 0x4000, scoped, tag = 'scratch operand']
  #allocation3 [shape = 'bf16[32,256]{1,0:T(8,128)(2,1)}', space=vmem, size = 0x4000, scoped, tag = 'scratch operand']
  %s0 = inlined_call_operand.hbm [shape: f32[2,32,128], index: 0, kind: input, shape index: {}]
  %s1 = inlined_call_operand.hbm [shape: bf16[2,32,128], index: 1, kind: input, shape index: {}]
  %s2 = inlined_call_operand.hbm [shape: bf16[2,32,128], index: 2, kind: input, shape index: {}]
  %s3 = inlined_call_operand.vmem [shape: f32[2,1,32], index: 3, kind: input, shape index: {}]
  %s4 = inlined_call_operand.hbm [shape: f32[2,1,32], index: 4, kind: input, shape index: {}]
  %s5 = inlined_call_operand.hbm [shape: bf16[128,128], index: 5, kind: input, shape index: {}]
  %s6 = inlined_call_operand.hbm [shape: bf16[128,256], index: 6, kind: input, shape index: {}]
  %s7 = inlined_call_operand.hbm [shape: bf16[4,32,128], index: 7, kind: input, shape index: {}]
  %s8 = inlined_call_operand.hbm [shape: bf16[128,128], index: 8, kind: input, shape index: {}]
  %s9 = inlined_call_operand.hbm [shape: bf16[128,256], index: 9, kind: input, shape index: {}]
  %s10 = inlined_call_operand.hbm [shape: bf16[2,64,128], index: 10, kind: input, shape index: {}]
  %s11 = inlined_call_operand.hbm [shape: bf16[128,256], index: 11, kind: input, shape index: {}]
  %s12 = inlined_call_operand.hbm [shape: bf16[256,128], index: 12, kind: input, shape index: {}]
  %s13 = inlined_call_operand.hbm [shape: f32[11,128], index: 13, kind: input, shape index: {}]
  %s14 = inlined_call_operand.vmem [shape: f32[1,256], index: 14, kind: input, shape index: {}]
  %s15 = inlined_call_operand.vmem [shape: f32[1,256], index: 15, kind: input, shape index: {}]
  %s16 = inlined_call_operand.vmem [shape: f32[1,256], index: 16, kind: input, shape index: {}]
  %s17 = inlined_call_operand.hbm [shape: f32[2,32,128], index: 17, kind: output, shape index: {}]
  %s18 = sld [smem:[#allocation0]]
  $region157: #{tpu_custom_call.1} parent=0
    _
  %s20 = ssub.s32 1, %s18
  %s21 = scalar_select 0, %s20, %s18
  $region1: #{tpu_custom_call.1} parent=0
    #allocation4 [shape = 'u8[32768]{0}', space=vmem, size = 0x8000, scoped, tag = 'input window, operand 0']
    #allocation5 [shape = 's32[2]{0}', space=sflag, size = 0x8, scoped, tag = 'scoped memory for tpu_custom_call.1']
    #allocation6 [shape = 's32[2]{0}', space=sflag, size = 0x8, scoped, tag = 'scoped memory for tpu_custom_call.1']
    #allocation7 [shape = 'u8[16384]{0}', space=vmem, size = 0x4000, scoped, tag = 'input window, operand 1']
    #allocation8 [shape = 's32[2]{0}', space=sflag, size = 0x8, scoped, tag = 'scoped memory for tpu_custom_call.1']
    #allocation9 [shape = 'u8[16384]{0}', space=vmem, size = 0x4000, scoped, tag = 'input window, operand 2']
    #allocation10 [shape = 'u8[1024]{0}', space=vmem, size = 0x400, scoped, tag = 'input window, operand 4']
    #allocation11 [shape = 's32[2]{0}', space=sflag, size = 0x8, scoped, tag = 'scoped memory for tpu_custom_call.1']
    #allocation12 [shape = 'u8[32768]{0}', space=vmem, size = 0x8000, scoped, tag = 'input window, operand 5, single buffered']
    #allocation13 [shape = 'u8[65536]{0}', space=vmem, size = 0x10000, scoped, tag = 'input window, operand 6, single buffered']
    #allocation14 [shape = 's32[1]{0}', space=sflag, size = 0x4, scoped, tag = 'scoped memory for tpu_custom_call.1']
    #allocation15 [shape = 'u8[32768]{0}', space=vmem, size = 0x8000, scoped, tag = 'input window, operand 7, single buffered']
    #allocation16 [shape = 'u8[32768]{0}', space=vmem, size = 0x8000, scoped, tag = 'input window, operand 8, single buffered']
    #allocation17 [shape = 's32[1]{0}', space=sflag, size = 0x4, scoped, tag = 'scoped memory for tpu_custom_call.1']
    #allocation18 [shape = 'u8[65536]{0}', space=vmem, size = 0x10000, scoped, tag = 'input window, operand 9, single buffered']
    #allocation19 [shape = 'u8[32768]{0}', space=vmem, size = 0x8000, scoped, tag = 'input window, operand 10, single buffered']
    #allocation20 [shape = 's32[1]{0}', space=sflag, size = 0x4, scoped, tag = 'scoped memory for tpu_custom_call.1']
    #allocation21 [shape = 'u8[65536]{0}', space=vmem, size = 0x10000, scoped, tag = 'input window, operand 11, single buffered']
    #allocation22 [shape = 'u8[65536]{0}', space=vmem, size = 0x10000, scoped, tag = 'input window, operand 12, single buffered']
    #allocation23 [shape = 's32[1]{0}', space=sflag, size = 0x4, scoped, tag = 'scoped memory for tpu_custom_call.1']
    #allocation24 [shape = 'u8[8192]{0}', space=vmem, size = 0x2000, scoped, tag = 'input window, operand 13, single buffered']
    #allocation25 [shape = 'u8[32768]{0}', space=vmem, size = 0x8000, scoped, tag = 'output window, operand 0']
    %22 = vsyncpa [#allocation5], 0
    %s23 = scalar_lea.sflag [#allocation5], 1
    %24 = vsyncpa %s23, 0
    %25 = vsyncpa [#allocation8], 0
    %s26 = scalar_lea.sflag [#allocation8], 1
    %27 = vsyncpa %s26, 0
    %28 = vsyncpa [#allocation11], 0
    %s29 = scalar_lea.sflag [#allocation11], 1
    %30 = vsyncpa %s29, 0
    %31 = vsyncpa [#allocation14], 0
    %32 = vsyncpa [#allocation17], 0
    %33 = vsyncpa [#allocation20], 0
    %34 = vsyncpa [#allocation23], 0
    %35 = vsyncpa [#allocation6], 0
    %s36 = scalar_lea.sflag [#allocation6], 1
    %37 = vsyncpa %s36, 0
    loop: start=0, step=1, limit=4
    $region2: #{tpu_custom_call.1} parent=1 // loop_pre_header
      _
    $region3: #{tpu_custom_call.1} parent=1 // loop_header
      %s39 = sphi 0, %s43
      %p40 = scmp.ge.s32.totalorder %s39, 4
      %s46 = sphi 0, %s58
      %s47 = sphi 0, %s54
      %s48 = sphi 0, %s46
      %s49 = sphi 0, %s47
      %s50 = sphi 0, %s48
      %s51 = sphi 0, %s49
      %s63 = sphi 0, %s65
      %s66 = sphi 0, %s63
      %s67 = sphi 0, %s66
      %s83 = sphi 0, %s67
      %s89 = sphi 0, %s91
      %s92 = sphi 0, %s89
      %s93 = sphi 0, %s92
      %s109 = sphi 0, %s93
      %s115 = sphi 0, %s117
      %s118 = sphi 0, %s115
      %s119 = sphi 0, %s118
      %s135 = sphi 0, %s119
      %s141 = sphi 0, %s143
      %s144 = sphi 0, %s141
      %s145 = sphi 0, %s144
      %s161 = sphi 0, %s145
      %s167 = sphi 0, %s169
      %s170 = sphi 0, %s167
      %s171 = sphi 0, %s170
      %s187 = sphi 0, %s171
      %s191 = sphi 0, %s191
      %s193 = sphi 0, %s191
      %s194 = sphi 0, %s193
      %s208 = sphi 0, %s194
      %s212 = sphi 0, %s212
      %s214 = sphi 0, %s212
      %s215 = sphi 0, %s214
      %s229 = sphi 0, %s215
      %s233 = sphi 0, %s233
      %s235 = sphi 0, %s233
      %s236 = sphi 0, %s235
      %s250 = sphi 0, %s236
      %s254 = sphi 0, %s254
      %s256 = sphi 0, %s254
      %s257 = sphi 0, %s256
      %s271 = sphi 0, %s257
      %s275 = sphi 0, %s275
      %s277 = sphi 0, %s275
      %s278 = sphi 0, %s277
      %s292 = sphi 0, %s278
      %s296 = sphi 0, %s296
      %s298 = sphi 0, %s296
      %s299 = sphi 0, %s298
      %s313 = sphi 0, %s299
      %s317 = sphi 0, %s317
      %s319 = sphi 0, %s317
      %s320 = sphi 0, %s319
      %s334 = sphi 0, %s320
      %s338 = sphi 0, %s338
      %s340 = sphi 0, %s338
      %s341 = sphi 0, %s340
      %s355 = sphi 0, %s341
      %s359 = sphi 0, %s359
      %s361 = sphi 0, %s359
      %s362 = sphi 0, %s361
      %s376 = sphi 0, %s362
      %s380 = sphi 0, %s380
      %s382 = sphi 0, %s380
      %s383 = sphi 0, %s382
      %s397 = sphi 0, %s383
      %s401 = sphi 0, %s401
      %s403 = sphi 0, %s401
      %s404 = sphi 0, %s403
      %s418 = sphi 0, %s404
      %s422 = sphi 0, %s422
      %s424 = sphi 0, %s422
      %s425 = sphi 0, %s424
      %s439 = sphi 0, %s425
      %s447 = sphi 0, %s449
      %s450 = sphi 0, %s447
      %s451 = sphi 0, %s450
      %s467 = sphi 0, %s451
    $region4: #{tpu_custom_call.1} parent=1 // loop_header_branch
      %42 = sbr.rel (%p40) target = $region8
    $region5: #{tpu_custom_call.1} parent=1 // loop_body
      %s44 = ssub.s32 %s39, 1
      %s45 = ssub.s32 %s39, 2
      %s52 = sadd.s32 1, %s47
      %p53 = scmp.ge.s32.totalorder %s52, 1
      %s54 = scalar_select %p53, 0, %s52
      %s55 = sadd.s32 1, %s46
      %s56 = scalar_select %p53, %s55, %s46
      %p57 = scmp.ge.s32.totalorder %s56, 2
      %s58 = scalar_select %p57, 0, %s56
      %s59 = ssub.s32 %s46, %s58
      %s60 = ssub.s32 %s47, %s54
      %s61 = sor.u32 %s59, %s60
      %p62 = scmp.eq.s32.totalorder %s61, 0
      %s64 = sadd.s32 %s63, 1
      %s65 = scalar_select %p62, %s63, %s64
      %p68 = pneg %p62
      %p69 = scmp.eq.s32.totalorder %s39, 1
      %p70 = por %p68, %p69
      %p71 = scmp.ne.s32.totalorder %s63, %s66
      %p72 = scmp.eq.s32.totalorder %s39, 0
      %p73 = por %p71, %p72
      %p74 = scmp.ne.s32.totalorder %s63, %s66
      %p75 = scmp.eq.s32.totalorder %s44, 1
      %p76 = por %p74, %p75
      %p77 = scmp.ne.s32.totalorder %s66, %s67
      %p78 = scmp.eq.s32.totalorder %s44, 0
      %p79 = por %p77, %p78
      %p80 = scmp.ne.s32.totalorder %s66, %s67
      %p81 = scmp.eq.s32.totalorder %s45, 1
      %p82 = por %p80, %p81
      %p84 = scmp.ne.s32.totalorder %s67, %s83
      %p85 = scmp.eq.s32.totalorder %s45, 0
      %p86 = por %p84, %p85
      %s87 = ssub.s32 %s46, %s58
      %p88 = scmp.eq.s32.totalorder %s87, 0
      %s90 = sadd.s32 %s89, 1
      %s91 = scalar_select %p88, %s89, %s90
      %p94 = pneg %p88
      %p95 = scmp.eq.s32.totalorder %s39, 1
      %p96 = por %p94, %p95
      %p97 = scmp.ne.s32.totalorder %s89, %s92
      %p98 = scmp.eq.s32.totalorder %s39, 0
      %p99 = por %p97, %p98
      %p100 = scmp.ne.s32.totalorder %s89, %s92
      %p101 = scmp.eq.s32.totalorder %s44, 1
      %p102 = por %p100, %p101
      %p103 = scmp.ne.s32.totalorder %s92, %s93
      %p104 = scmp.eq.s32.totalorder %s44, 0
      %p105 = por %p103, %p104
      %p106 = scmp.ne.s32.totalorder %s92, %s93
      %p107 = scmp.eq.s32.totalorder %s45, 1
      %p108 = por %p106, %p107
      %p110 = scmp.ne.s32.totalorder %s93, %s109
      %p111 = scmp.eq.s32.totalorder %s45, 0
      %p112 = por %p110, %p111
      %s113 = ssub.s32 %s46, %s58
      %p114 = scmp.eq.s32.totalorder %s113, 0
      %s116 = sadd.s32 %s115, 1
      %s117 = scalar_select %p114, %s115, %s116
      %p120 = pneg %p114
      %p121 = scmp.eq.s32.totalorder %s39, 1
      %p122 = por %p120, %p121
      %p123 = scmp.ne.s32.totalorder %s115, %s118
      %p124 = scmp.eq.s32.totalorder %s39, 0
      %p125 = por %p123, %p124
      %p126 = scmp.ne.s32.totalorder %s115, %s118
      %p127 = scmp.eq.s32.totalorder %s44, 1
      %p128 = por %p126, %p127
      %p129 = scmp.ne.s32.totalorder %s118, %s119
      %p130 = scmp.eq.s32.totalorder %s44, 0
      %p131 = por %p129, %p130
      %p132 = scmp.ne.s32.totalorder %s118, %s119
      %p133 = scmp.eq.s32.totalorder %s45, 1
      %p134 = por %p132, %p133
      %p136 = scmp.ne.s32.totalorder %s119, %s135
      %p137 = scmp.eq.s32.totalorder %s45, 0
      %p138 = por %p136, %p137
      %s139 = ssub.s32 %s46, %s58
      %p140 = scmp.eq.s32.totalorder %s139, 0
      %s142 = sadd.s32 %s141, 1
      %s143 = scalar_select %p140, %s141, %s142
      %p146 = pneg %p140
      %p147 = scmp.eq.s32.totalorder %s39, 1
      %p148 = por %p146, %p147
      %p149 = scmp.ne.s32.totalorder %s141, %s144
      %p150 = scmp.eq.s32.totalorder %s39, 0
      %p151 = por %p149, %p150
      %p152 = scmp.ne.s32.totalorder %s141, %s144
      %p153 = scmp.eq.s32.totalorder %s44, 1
      %p154 = por %p152, %p153
      %p155 = scmp.ne.s32.totalorder %s144, %s145
      %p156 = scmp.eq.s32.totalorder %s44, 0
      %p157 = por %p155, %p156
      %p158 = scmp.ne.s32.totalorder %s144, %s145
      %p159 = scmp.eq.s32.totalorder %s45, 1
      %p160 = por %p158, %p159
      %p162 = scmp.ne.s32.totalorder %s145, %s161
      %p163 = scmp.eq.s32.totalorder %s45, 0
      %p164 = por %p162, %p163
      %s165 = ssub.s32 %s46, %s58
      %p166 = scmp.eq.s32.totalorder %s165, 0
      %s168 = sadd.s32 %s167, 1
      %s169 = scalar_select %p166, %s167, %s168
      %p172 = pneg %p166
      %p173 = scmp.eq.s32.totalorder %s39, 1
      %p174 = por %p172, %p173
      %p175 = scmp.ne.s32.totalorder %s167, %s170
      %p176 = scmp.eq.s32.totalorder %s39, 0
      %p177 = por %p175, %p176
      %p178 = scmp.ne.s32.totalorder %s167, %s170
      %p179 = scmp.eq.s32.totalorder %s44, 1
      %p180 = por %p178, %p179
      %p181 = scmp.ne.s32.totalorder %s170, %s171
      %p182 = scmp.eq.s32.totalorder %s44, 0
      %p183 = por %p181, %p182
      %p184 = scmp.ne.s32.totalorder %s170, %s171
      %p185 = scmp.eq.s32.totalorder %s45, 1
      %p186 = por %p184, %p185
      %p188 = scmp.ne.s32.totalorder %s171, %s187
      %p189 = scmp.eq.s32.totalorder %s45, 0
      %p190 = por %p188, %p189
      %s192 = sadd.s32 %s191, 1
      %p195 = scmp.eq.s32.totalorder %s39, 1
      %p196 = scmp.ne.s32.totalorder %s191, %s193
      %p197 = scmp.eq.s32.totalorder %s39, 0
      %p198 = por %p196, %p197
      %p199 = scmp.ne.s32.totalorder %s191, %s193
      %p200 = scmp.eq.s32.totalorder %s44, 1
      %p201 = por %p199, %p200
      %p202 = scmp.ne.s32.totalorder %s193, %s194
      %p203 = scmp.eq.s32.totalorder %s44, 0
      %p204 = por %p202, %p203
      %p205 = scmp.ne.s32.totalorder %s193, %s194
      %p206 = scmp.eq.s32.totalorder %s45, 1
      %p207 = por %p205, %p206
      %p209 = scmp.ne.s32.totalorder %s194, %s208
      %p210 = scmp.eq.s32.totalorder %s45, 0
      %p211 = por %p209, %p210
      %s213 = sadd.s32 %s212, 1
      %p216 = scmp.eq.s32.totalorder %s39, 1
      %p217 = scmp.ne.s32.totalorder %s212, %s214
      %p218 = scmp.eq.s32.totalorder %s39, 0
      %p219 = por %p217, %p218
      %p220 = scmp.ne.s32.totalorder %s212, %s214
      %p221 = scmp.eq.s32.totalorder %s44, 1
      %p222 = por %p220, %p221
      %p223 = scmp.ne.s32.totalorder %s214, %s215
      %p224 = scmp.eq.s32.totalorder %s44, 0
      %p225 = por %p223, %p224
      %p226 = scmp.ne.s32.totalorder %s214, %s215
      %p227 = scmp.eq.s32.totalorder %s45, 1
      %p228 = por %p226, %p227
      %p230 = scmp.ne.s32.totalorder %s215, %s229
      %p231 = scmp.eq.s32.totalorder %s45, 0
      %p232 = por %p230, %p231
      %s234 = sadd.s32 %s233, 1
      %p237 = scmp.eq.s32.totalorder %s39, 1
      %p238 = scmp.ne.s32.totalorder %s233, %s235
      %p239 = scmp.eq.s32.totalorder %s39, 0
      %p240 = por %p238, %p239
      %p241 = scmp.ne.s32.totalorder %s233, %s235
      %p242 = scmp.eq.s32.totalorder %s44, 1
      %p243 = por %p241, %p242
      %p244 = scmp.ne.s32.totalorder %s235, %s236
      %p245 = scmp.eq.s32.totalorder %s44, 0
      %p246 = por %p244, %p245
      %p247 = scmp.ne.s32.totalorder %s235, %s236
      %p248 = scmp.eq.s32.totalorder %s45, 1
      %p249 = por %p247, %p248
      %p251 = scmp.ne.s32.totalorder %s236, %s250
      %p252 = scmp.eq.s32.totalorder %s45, 0
      %p253 = por %p251, %p252
      %s255 = sadd.s32 %s254, 1
      %p258 = scmp.eq.s32.totalorder %s39, 1
      %p259 = scmp.ne.s32.totalorder %s254, %s256
      %p260 = scmp.eq.s32.totalorder %s39, 0
      %p261 = por %p259, %p260
      %p262 = scmp.ne.s32.totalorder %s254, %s256
      %p263 = scmp.eq.s32.totalorder %s44, 1
      %p264 = por %p262, %p263
      %p265 = scmp.ne.s32.totalorder %s256, %s257
      %p266 = scmp.eq.s32.totalorder %s44, 0
      %p267 = por %p265, %p266
      %p268 = scmp.ne.s32.totalorder %s256, %s257
      %p269 = scmp.eq.s32.totalorder %s45, 1
      %p270 = por %p268, %p269
      %p272 = scmp.ne.s32.totalorder %s257, %s271
      %p273 = scmp.eq.s32.totalorder %s45, 0
      %p274 = por %p272, %p273
      %s276 = sadd.s32 %s275, 1
      %p279 = scmp.eq.s32.totalorder %s39, 1
      %p280 = scmp.ne.s32.totalorder %s275, %s277
      %p281 = scmp.eq.s32.totalorder %s39, 0
      %p282 = por %p280, %p281
      %p283 = scmp.ne.s32.totalorder %s275, %s277
      %p284 = scmp.eq.s32.totalorder %s44, 1
      %p285 = por %p283, %p284
      %p286 = scmp.ne.s32.totalorder %s277, %s278
      %p287 = scmp.eq.s32.totalorder %s44, 0
      %p288 = por %p286, %p287
      %p289 = scmp.ne.s32.totalorder %s277, %s278
      %p290 = scmp.eq.s32.totalorder %s45, 1
      %p291 = por %p289, %p290
      %p293 = scmp.ne.s32.totalorder %s278, %s292
      %p294 = scmp.eq.s32.totalorder %s45, 0
      %p295 = por %p293, %p294
      %s297 = sadd.s32 %s296, 1
      %p300 = scmp.eq.s32.totalorder %s39, 1
      %p301 = scmp.ne.s32.totalorder %s296, %s298
      %p302 = scmp.eq.s32.totalorder %s39, 0
      %p303 = por %p301, %p302
      %p304 = scmp.ne.s32.totalorder %s296, %s298
      %p305 = scmp.eq.s32.totalorder %s44, 1
      %p306 = por %p304, %p305
      %p307 = scmp.ne.s32.totalorder %s298, %s299
      %p308 = scmp.eq.s32.totalorder %s44, 0
      %p309 = por %p307, %p308
      %p310 = scmp.ne.s32.totalorder %s298, %s299
      %p311 = scmp.eq.s32.totalorder %s45, 1
      %p312 = por %p310, %p311
      %p314 = scmp.ne.s32.totalorder %s299, %s313
      %p315 = scmp.eq.s32.totalorder %s45, 0
      %p316 = por %p314, %p315
      %s318 = sadd.s32 %s317, 1
      %p321 = scmp.eq.s32.totalorder %s39, 1
      %p322 = scmp.ne.s32.totalorder %s317, %s319
      %p323 = scmp.eq.s32.totalorder %s39, 0
      %p324 = por %p322, %p323
      %p325 = scmp.ne.s32.totalorder %s317, %s319
      %p326 = scmp.eq.s32.totalorder %s44, 1
      %p327 = por %p325, %p326
      %p328 = scmp.ne.s32.totalorder %s319, %s320
      %p329 = scmp.eq.s32.totalorder %s44, 0
      %p330 = por %p328, %p329
      %p331 = scmp.ne.s32.totalorder %s319, %s320
      %p332 = scmp.eq.s32.totalorder %s45, 1
      %p333 = por %p331, %p332
      %p335 = scmp.ne.s32.totalorder %s320, %s334
      %p336 = scmp.eq.s32.totalorder %s45, 0
      %p337 = por %p335, %p336
      %s339 = sadd.s32 %s338, 1
      %p342 = scmp.eq.s32.totalorder %s39, 1
      %p343 = scmp.ne.s32.totalorder %s338, %s340
      %p344 = scmp.eq.s32.totalorder %s39, 0
      %p345 = por %p343, %p344
      %p346 = scmp.ne.s32.totalorder %s338, %s340
      %p347 = scmp.eq.s32.totalorder %s44, 1
      %p348 = por %p346, %p347
      %p349 = scmp.ne.s32.totalorder %s340, %s341
      %p350 = scmp.eq.s32.totalorder %s44, 0
      %p351 = por %p349, %p350
      %p352 = scmp.ne.s32.totalorder %s340, %s341
      %p353 = scmp.eq.s32.totalorder %s45, 1
      %p354 = por %p352, %p353
      %p356 = scmp.ne.s32.totalorder %s341, %s355
      %p357 = scmp.eq.s32.totalorder %s45, 0
      %p358 = por %p356, %p357
      %s360 = sadd.s32 %s359, 1
      %p363 = scmp.eq.s32.totalorder %s39, 1
      %p364 = scmp.ne.s32.totalorder %s359, %s361
      %p365 = scmp.eq.s32.totalorder %s39, 0
      %p366 = por %p364, %p365
      %p367 = scmp.ne.s32.totalorder %s359, %s361
      %p368 = scmp.eq.s32.totalorder %s44, 1
      %p369 = por %p367, %p368
      %p370 = scmp.ne.s32.totalorder %s361, %s362
      %p371 = scmp.eq.s32.totalorder %s44, 0
      %p372 = por %p370, %p371
      %p373 = scmp.ne.s32.totalorder %s361, %s362
      %p374 = scmp.eq.s32.totalorder %s45, 1
      %p375 = por %p373, %p374
      %p377 = scmp.ne.s32.totalorder %s362, %s376
      %p378 = scmp.eq.s32.totalorder %s45, 0
      %p379 = por %p377, %p378
      %s381 = sadd.s32 %s380, 1
      %p384 = scmp.eq.s32.totalorder %s39, 1
      %p385 = scmp.ne.s32.totalorder %s380, %s382
      %p386 = scmp.eq.s32.totalorder %s39, 0
      %p387 = por %p385, %p386
      %p388 = scmp.ne.s32.totalorder %s380, %s382
      %p389 = scmp.eq.s32.totalorder %s44, 1
      %p390 = por %p388, %p389
      %p391 = scmp.ne.s32.totalorder %s382, %s383
      %p392 = scmp.eq.s32.totalorder %s44, 0
      %p393 = por %p391, %p392
      %p394 = scmp.ne.s32.totalorder %s382, %s383
      %p395 = scmp.eq.s32.totalorder %s45, 1
      %p396 = por %p394, %p395
      %p398 = scmp.ne.s32.totalorder %s383, %s397
      %p399 = scmp.eq.s32.totalorder %s45, 0
      %p400 = por %p398, %p399
      %s402 = sadd.s32 %s401, 1
      %p405 = scmp.eq.s32.totalorder %s39, 1
      %p406 = scmp.ne.s32.totalorder %s401, %s403
      %p407 = scmp.eq.s32.totalorder %s39, 0
      %p408 = por %p406, %p407
      %p409 = scmp.ne.s32.totalorder %s401, %s403
      %p410 = scmp.eq.s32.totalorder %s44, 1
      %p411 = por %p409, %p410
      %p412 = scmp.ne.s32.totalorder %s403, %s404
      %p413 = scmp.eq.s32.totalorder %s44, 0
      %p414 = por %p412, %p413
      %p415 = scmp.ne.s32.totalorder %s403, %s404
      %p416 = scmp.eq.s32.totalorder %s45, 1
      %p417 = por %p415, %p416
      %p419 = scmp.ne.s32.totalorder %s404, %s418
      %p420 = scmp.eq.s32.totalorder %s45, 0
      %p421 = por %p419, %p420
      %s423 = sadd.s32 %s422, 1
      %p426 = scmp.eq.s32.totalorder %s39, 1
      %p427 = scmp.ne.s32.totalorder %s422, %s424
      %p428 = scmp.eq.s32.totalorder %s39, 0
      %p429 = por %p427, %p428
      %p430 = scmp.ne.s32.totalorder %s422, %s424
      %p431 = scmp.eq.s32.totalorder %s44, 1
      %p432 = por %p430, %p431
      %p433 = scmp.ne.s32.totalorder %s424, %s425
      %p434 = scmp.eq.s32.totalorder %s44, 0
      %p435 = por %p433, %p434
      %p436 = scmp.ne.s32.totalorder %s424, %s425
      %p437 = scmp.eq.s32.totalorder %s45, 1
      %p438 = por %p436, %p437
      %p440 = scmp.ne.s32.totalorder %s425, %s439
      %p441 = scmp.eq.s32.totalorder %s45, 0
      %p442 = por %p440, %p441
      %s443 = ssub.s32 %s46, %s58
      %s444 = ssub.s32 %s47, %s54
      %s445 = sor.u32 %s443, %s444
      %p446 = scmp.eq.s32.totalorder %s445, 0
      %s448 = sadd.s32 %s447, 1
      %s449 = scalar_select %p446, %s447, %s448
      %p452 = pneg %p446
      %p453 = scmp.eq.s32.totalorder %s39, 1
      %p454 = por %p452, %p453
      %p455 = scmp.ne.s32.totalorder %s447, %s450
      %p456 = scmp.eq.s32.totalorder %s39, 0
      %p457 = por %p455, %p456
      %p458 = scmp.ne.s32.totalorder %s447, %s450
      %p459 = scmp.eq.s32.totalorder %s44, 1
      %p460 = por %p458, %p459
      %p461 = scmp.ne.s32.totalorder %s450, %s451
      %p462 = scmp.eq.s32.totalorder %s44, 0
      %p463 = por %p461, %p462
      %p464 = scmp.ne.s32.totalorder %s450, %s451
      %p465 = scmp.eq.s32.totalorder %s45, 1
      %p466 = por %p464, %p465
      %p468 = scmp.ne.s32.totalorder %s451, %s467
      %p469 = scmp.eq.s32.totalorder %s45, 0
      %p470 = por %p468, %p469
      %p471 = scmp.le.s32.totalorder 1, %s39
      %p472 = scmp.lt.s32.totalorder %s39, 3
      %p473 = pnand %p471, %p472
      %p474 = pneg %p473
      // Predicated region
      $region9: #{tpu_custom_call.1} parent=5 // pred_check
        _
      $region10: #{tpu_custom_call.1} parent=5 // pred_check_branch
        %476 = sbr.rel (%p473) target = $region12
      $region11: #{tpu_custom_call.1} parent=5 // pred_region
        %s477 = ssub.s32 %s39, 1
        // Predicated region
        $region13: #{tpu_custom_call.1} parent=11 // pred_check
          %p478 = pneg %p204
        $region14: #{tpu_custom_call.1} parent=11 // pred_check_branch
          %480 = sbr.rel (%p478) target = $region16
        $region15: #{tpu_custom_call.1} parent=11 // pred_region
          %482 = vsyncadd [#allocation11], 0
          %s483 = sshll.u32 %s5, 4
          %s484 = int_to_ptr.hbm [resolvable:$true] %s483
          %s485 = sshll.u32 [#allocation12], 4
          %s486 = int_to_ptr.vmem [resolvable:$true] %s485
          %491 = dma.hbm_to_vmem [thread:$0]  %s484, 1024, %s486, [#allocation11], 64, 64, 4
        $region16: #{tpu_custom_call.1} parent=11 // pred_fallthru
          _
        // Predicated region
        $region17: #{tpu_custom_call.1} parent=11 // pred_check
          %p492 = pneg %p225
        $region18: #{tpu_custom_call.1} parent=11 // pred_check_branch
          %494 = sbr.rel (%p492) target = $region20
        $region19: #{tpu_custom_call.1} parent=11 // pred_region
          %496 = vsyncadd [#allocation14], 0
          %s497 = sshll.u32 %s6, 4
          %s498 = int_to_ptr.hbm [resolvable:$true] %s497
          %s499 = sshll.u32 [#allocation13], 4
          %s500 = int_to_ptr.vmem [resolvable:$true] %s499
          %505 = dma.hbm_to_vmem [thread:$0]  %s498, 2048, %s500, [#allocation14], 128, 128, 8
        $region20: #{tpu_custom_call.1} parent=11 // pred_fallthru
          _
        // Predicated region
        $region21: #{tpu_custom_call.1} parent=11 // pred_check
          %p506 = pneg %p246
        $region22: #{tpu_custom_call.1} parent=11 // pred_check_branch
          %508 = sbr.rel (%p506) target = $region24
        $region23: #{tpu_custom_call.1} parent=11 // pred_region
          %510 = vsyncadd [#allocation14], 0
          %s511 = sshll.u32 %s7, 4
          %s512 = int_to_ptr.hbm [resolvable:$true] %s511
          %s513 = sshll.u32 [#allocation15], 4
          %s514 = int_to_ptr.vmem [resolvable:$true] %s513
          %519 = dma.hbm_to_vmem [thread:$0]  %s512, 1024, %s514, [#allocation14], 64, 64, 4
        $region24: #{tpu_custom_call.1} parent=11 // pred_fallthru
          _
        // Predicated region
        $region25: #{tpu_custom_call.1} parent=11 // pred_check
          %p520 = pneg %p267
        $region26: #{tpu_custom_call.1} parent=11 // pred_check_branch
          %522 = sbr.rel (%p520) target = $region28
        $region27: #{tpu_custom_call.1} parent=11 // pred_region
          %524 = vsyncadd [#allocation17], 0
          %s525 = sshll.u32 %s8, 4
          %s526 = int_to_ptr.hbm [resolvable:$true] %s525
          %s527 = sshll.u32 [#allocation16], 4
          %s528 = int_to_ptr.vmem [resolvable:$true] %s527
          %533 = dma.hbm_to_vmem [thread:$0]  %s526, 1024, %s528, [#allocation17], 64, 64, 4
        $region28: #{tpu_custom_call.1} parent=11 // pred_fallthru
          _
        // Predicated region
        $region29: #{tpu_custom_call.1} parent=11 // pred_check
          %p534 = pneg %p288
        $region30: #{tpu_custom_call.1} parent=11 // pred_check_branch
          %536 = sbr.rel (%p534) target = $region32
        $region31: #{tpu_custom_call.1} parent=11 // pred_region
          %538 = vsyncadd [#allocation17], 0
          %s539 = sshll.u32 %s9, 4
          %s540 = int_to_ptr.hbm [resolvable:$true] %s539
          %s541 = sshll.u32 [#allocation18], 4
          %s542 = int_to_ptr.vmem [resolvable:$true] %s541
          %547 = dma.hbm_to_vmem [thread:$0]  %s540, 2048, %s542, [#allocation17], 128, 128, 8
        $region32: #{tpu_custom_call.1} parent=11 // pred_fallthru
          _
        // Predicated region
        $region33: #{tpu_custom_call.1} parent=11 // pred_check
          %p548 = pneg %p309
        $region34: #{tpu_custom_call.1} parent=11 // pred_check_branch
          %550 = sbr.rel (%p548) target = $region36
        $region35: #{tpu_custom_call.1} parent=11 // pred_region
          %552 = vsyncadd [#allocation20], 0
          %s553 = sshll.u32 %s10, 4
          %s554 = int_to_ptr.hbm [resolvable:$true] %s553
          %s555 = sshll.u32 [#allocation19], 4
          %s556 = int_to_ptr.vmem [resolvable:$true] %s555
          %561 = dma.hbm_to_vmem [thread:$0]  %s554, 1024, %s556, [#allocation20], 64, 64, 4
        $region36: #{tpu_custom_call.1} parent=11 // pred_fallthru
          _
        // Predicated region
        $region37: #{tpu_custom_call.1} parent=11 // pred_check
          %p562 = pneg %p330
        $region38: #{tpu_custom_call.1} parent=11 // pred_check_branch
          %564 = sbr.rel (%p562) target = $region40
        $region39: #{tpu_custom_call.1} parent=11 // pred_region
          %566 = vsyncadd [#allocation20], 0
          %s567 = sshll.u32 %s11, 4
          %s568 = int_to_ptr.hbm [resolvable:$true] %s567
          %s569 = sshll.u32 [#allocation21], 4
          %s570 = int_to_ptr.vmem [resolvable:$true] %s569
          %575 = dma.hbm_to_vmem [thread:$0]  %s568, 2048, %s570, [#allocation20], 128, 128, 8
        $region40: #{tpu_custom_call.1} parent=11 // pred_fallthru
          _
        // Predicated region
        $region41: #{tpu_custom_call.1} parent=11 // pred_check
          %p576 = pneg %p351
        $region42: #{tpu_custom_call.1} parent=11 // pred_check_branch
          %578 = sbr.rel (%p576) target = $region44
        $region43: #{tpu_custom_call.1} parent=11 // pred_region
          %580 = vsyncadd [#allocation23], 0
          %s581 = sshll.u32 %s12, 4
          %s582 = int_to_ptr.hbm [resolvable:$true] %s581
          %s583 = sshll.u32 [#allocation22], 4
          %s584 = int_to_ptr.vmem [resolvable:$true] %s583
          %589 = dma.hbm_to_vmem [thread:$0]  %s582, 2048, %s584, [#allocation23], 64, 64, 4
        $region44: #{tpu_custom_call.1} parent=11 // pred_fallthru
          _
        // Predicated region
        $region45: #{tpu_custom_call.1} parent=11 // pred_check
          %p590 = pneg %p372
        $region46: #{tpu_custom_call.1} parent=11 // pred_check_branch
          %592 = sbr.rel (%p590) target = $region48
        $region47: #{tpu_custom_call.1} parent=11 // pred_region
          %594 = vsyncadd [#allocation23], 0
          %s595 = sshll.u32 %s13, 4
          %s596 = int_to_ptr.hbm [resolvable:$true] %s595
          %s597 = sshll.u32 [#allocation24], 4
          %s598 = int_to_ptr.vmem [resolvable:$true] %s597
          %603 = dma.hbm_to_vmem [thread:$0]  %s596, 256, %s598, [#allocation23], 128, 128, 8
        $region48: #{tpu_custom_call.1} parent=11 // pred_fallthru
          _
        // Predicated region
        $region49: #{tpu_custom_call.1} parent=11 // pred_check
          %p604 = pneg %p393
        $region50: #{tpu_custom_call.1} parent=11 // pred_check_branch
          %606 = sbr.rel (%p604) target = $region52
        $region51: #{tpu_custom_call.1} parent=11 // pred_region
          _
        $region52: #{tpu_custom_call.1} parent=11 // pred_fallthru
          _
        // Predicated region
        $region53: #{tpu_custom_call.1} parent=11 // pred_check
          %p607 = pneg %p414
        $region54: #{tpu_custom_call.1} parent=11 // pred_check_branch
          %609 = sbr.rel (%p607) target = $region56
        $region55: #{tpu_custom_call.1} parent=11 // pred_region
          _
        $region56: #{tpu_custom_call.1} parent=11 // pred_fallthru
          _
        // Predicated region
        $region57: #{tpu_custom_call.1} parent=11 // pred_check
          %p610 = pneg %p435
        $region58: #{tpu_custom_call.1} parent=11 // pred_check_branch
          %612 = sbr.rel (%p610) target = $region60
        $region59: #{tpu_custom_call.1} parent=11 // pred_region
          _
        $region60: #{tpu_custom_call.1} parent=11 // pred_fallthru
          _
      $region12: #{tpu_custom_call.1} parent=5 // pred_fallthru
        _
      %p613 = scmp.lt.s32.totalorder %s39, 2
      // Predicated region
      $region61: #{tpu_custom_call.1} parent=5 // pred_check
        %p614 = pneg %p613
      $region62: #{tpu_custom_call.1} parent=5 // pred_check_branch
        %616 = sbr.rel (%p614) target = $region64
      $region63: #{tpu_custom_call.1} parent=5 // pred_region
        // Predicated region
        $region65: #{tpu_custom_call.1} parent=63 // pred_check
          %p617 = pneg %p73
        $region66: #{tpu_custom_call.1} parent=63 // pred_check_branch
          %619 = sbr.rel (%p617) target = $region68
        $region67: #{tpu_custom_call.1} parent=63 // pred_region
          %s620 = sand.u32 %s63, 1
          %s621 = scalar_lea.sflag [#allocation5], %s620
          %s622 = sand.u32 %s63, 1
          %s623 = smul.addr %s622, 32
          %s624 = scalar_lea.vmem [#allocation4], %s623
          %s625 = smul.u32 4, %s47
          %627 = vsyncadd %s621, 0
          %s628 = smul.addr %s46, 4
          %s629 = sadd.s32 %s625, %s628
          %s630 = smul.addr %s629, 8
          %s631 = scalar_lea.hbm %s0, %s630
          %s632 = sshll.u32 %s631, 4
          %s633 = int_to_ptr.hbm [resolvable:$true] %s632
          %s634 = sshll.u32 %s624, 4
          %s635 = int_to_ptr.vmem [resolvable:$true] %s634
          %640 = dma.hbm_to_vmem [thread:$0]  %s633, 512, %s635, %s621, 128, 128, 8
        $region68: #{tpu_custom_call.1} parent=63 // pred_fallthru
          _
        // Predicated region
        $region69: #{tpu_custom_call.1} parent=63 // pred_check
          %p641 = pneg %p99
        $region70: #{tpu_custom_call.1} parent=63 // pred_check_branch
          %643 = sbr.rel (%p641) target = $region72
        $region71: #{tpu_custom_call.1} parent=63 // pred_region
          %s644 = sand.u32 %s39, 1
          %s645 = scalar_lea.sflag [#allocation8], %s644
          %s646 = sand.u32 %s89, 1
          %s647 = smul.addr %s646, 16
          %s648 = scalar_lea.vmem [#allocation7], %s647
          %650 = vsyncadd %s645, 0
          %s651 = smul.addr %s46, 4
          %s652 = smul.addr %s651, 4
          %s653 = scalar_lea.hbm %s1, %s652
          %s654 = sshll.u32 %s653, 4
          %s655 = int_to_ptr.hbm [resolvable:$true] %s654
          %s656 = sshll.u32 %s648, 4
          %s657 = int_to_ptr.vmem [resolvable:$true] %s656
          %662 = dma.hbm_to_vmem [thread:$0]  %s655, 256, %s657, %s645, 64, 64, 4
        $region72: #{tpu_custom_call.1} parent=63 // pred_fallthru
          _
        // Predicated region
        $region73: #{tpu_custom_call.1} parent=63 // pred_check
          %p663 = pneg %p125
        $region74: #{tpu_custom_call.1} parent=63 // pred_check_branch
          %665 = sbr.rel (%p663) target = $region76
        $region75: #{tpu_custom_call.1} parent=63 // pred_region
          %s666 = sand.u32 %s39, 1
          %s667 = scalar_lea.sflag [#allocation8], %s666
          %s668 = sand.u32 %s115, 1
          %s669 = smul.addr %s668, 16
          %s670 = scalar_lea.vmem [#allocation9], %s669
          %672 = vsyncadd %s667, 0
          %s673 = smul.addr %s46, 4
          %s674 = smul.addr %s673, 4
          %s675 = scalar_lea.hbm %s2, %s674
          %s676 = sshll.u32 %s675, 4
          %s677 = int_to_ptr.hbm [resolvable:$true] %s676
          %s678 = sshll.u32 %s670, 4
          %s679 = int_to_ptr.vmem [resolvable:$true] %s678
          %684 = dma.hbm_to_vmem [thread:$0]  %s677, 256, %s679, %s667, 64, 64, 4
        $region76: #{tpu_custom_call.1} parent=63 // pred_fallthru
          _
        // Predicated region
        $region77: #{tpu_custom_call.1} parent=63 // pred_check
          %p685 = pneg %p151
        $region78: #{tpu_custom_call.1} parent=63 // pred_check_branch
          %687 = sbr.rel (%p685) target = $region80
        $region79: #{tpu_custom_call.1} parent=63 // pred_region
          %p688 = scmp.lt.s32.totalorder %s46, 1
          %s689 = scalar_select %p688, %s46, 1
          %s690 = scalar_lea.vmem %s3, %s689
        $region80: #{tpu_custom_call.1} parent=63 // pred_fallthru
          _
        // Predicated region
        $region81: #{tpu_custom_call.1} parent=63 // pred_check
          %p691 = pneg %p177
        $region82: #{tpu_custom_call.1} parent=63 // pred_check_branch
          %693 = sbr.rel (%p691) target = $region84
        $region83: #{tpu_custom_call.1} parent=63 // pred_region
          %s694 = sand.u32 %s39, 1
          %s695 = scalar_lea.sflag [#allocation11], %s694
          %s696 = sand.u32 %s167, 1
          %s697 = scalar_lea.vmem [#allocation10], %s696
          %699 = vsyncadd %s695, 0
          %s700 = scalar_lea.hbm %s4, %s46
          %s702 = sshll.u32 %s700, 4
          %s703 = int_to_ptr.hbm [resolvable:$true] %s702
          %s704 = sshll.u32 %s697, 4
          %s705 = int_to_ptr.vmem [resolvable:$true] %s704
          %707 = dma.hbm_to_vmem [thread:$0]  %s703, 16, %s705, %s695
        $region84: #{tpu_custom_call.1} parent=63 // pred_fallthru
          _
      $region64: #{tpu_custom_call.1} parent=5 // pred_fallthru
        _
      %p708 = scmp.le.s32.totalorder 1, %s39
      %p709 = scmp.lt.s32.totalorder %s39, 3
      %p710 = pnand %p708, %p709
      %p711 = pneg %p710
      // Predicated region
      $region85: #{tpu_custom_call.1} parent=5 // pred_check
        _
      $region86: #{tpu_custom_call.1} parent=5 // pred_check_branch
        %713 = sbr.rel (%p710) target = $region88
      $region87: #{tpu_custom_call.1} parent=5 // pred_region
        %s714 = ssub.s32 %s39, 1
        %s715 = sand.u32 %s66, 1
        %s716 = scalar_lea.sflag [#allocation5], %s715
        %s717 = sand.u32 %s66, 1
        %s718 = smul.addr %s717, 32
        %s719 = scalar_lea.vmem [#allocation4], %s718
        // Predicated region
        $region89: #{tpu_custom_call.1} parent=87 // pred_check
          %p720 = pneg %p79
        $region90: #{tpu_custom_call.1} parent=87 // pred_check_branch
          %722 = sbr.rel (%p720) target = $region92
        $region91: #{tpu_custom_call.1} parent=87 // pred_region
          %724 = dma.done %s716, 512
        $region92: #{tpu_custom_call.1} parent=87 // pred_fallthru
          _
        %s725 = sand.u32 %s44, 1
        %s726 = scalar_lea.sflag [#allocation8], %s725
        %s727 = sand.u32 %s92, 1
        %s728 = smul.addr %s727, 16
        %s729 = scalar_lea.vmem [#allocation7], %s728
        // Predicated region
        $region93: #{tpu_custom_call.1} parent=87 // pred_check
          %p730 = pneg %p105
        $region94: #{tpu_custom_call.1} parent=87 // pred_check_branch
          %732 = sbr.rel (%p730) target = $region96
        $region95: #{tpu_custom_call.1} parent=87 // pred_region
          %734 = dma.done %s726, 256
        $region96: #{tpu_custom_call.1} parent=87 // pred_fallthru
          _
        %s735 = sand.u32 %s44, 1
        %s736 = scalar_lea.sflag [#allocation8], %s735
        %s737 = sand.u32 %s118, 1
        %s738 = smul.addr %s737, 16
        %s739 = scalar_lea.vmem [#allocation9], %s738
        // Predicated region
        $region97: #{tpu_custom_call.1} parent=87 // pred_check
          %p740 = pneg %p131
        $region98: #{tpu_custom_call.1} parent=87 // pred_check_branch
          %742 = sbr.rel (%p740) target = $region100
        $region99: #{tpu_custom_call.1} parent=87 // pred_region
          %744 = dma.done %s736, 256
        $region100: #{tpu_custom_call.1} parent=87 // pred_fallthru
          _
        %s745 = sand.u32 %s44, 1
        %s746 = scalar_lea.sflag [#allocation11], %s745
        %s747 = sand.u32 %s170, 1
        %s748 = scalar_lea.vmem [#allocation10], %s747
        // Predicated region
        $region101: #{tpu_custom_call.1} parent=87 // pred_check
          %p749 = pneg %p183
        $region102: #{tpu_custom_call.1} parent=87 // pred_check_branch
          %751 = sbr.rel (%p749) target = $region104
        $region103: #{tpu_custom_call.1} parent=87 // pred_region
          %753 = dma.done %s746, 16
        $region104: #{tpu_custom_call.1} parent=87 // pred_fallthru
          _
        // Predicated region
        $region105: #{tpu_custom_call.1} parent=87 // pred_check
          %p754 = pneg %p204
        $region106: #{tpu_custom_call.1} parent=87 // pred_check_branch
          %756 = sbr.rel (%p754) target = $region108
        $region107: #{tpu_custom_call.1} parent=87 // pred_region
          %758 = dma.done [#allocation11], 1024
        $region108: #{tpu_custom_call.1} parent=87 // pred_fallthru
          _
        // Predicated region
        $region109: #{tpu_custom_call.1} parent=87 // pred_check
          %p759 = pneg %p225
        $region110: #{tpu_custom_call.1} parent=87 // pred_check_branch
          %761 = sbr.rel (%p759) target = $region112
        $region111: #{tpu_custom_call.1} parent=87 // pred_region
          %763 = dma.done [#allocation14], 2048
        $region112: #{tpu_custom_call.1} parent=87 // pred_fallthru
          _
        // Predicated region
        $region113: #{tpu_custom_call.1} parent=87 // pred_check
          %p764 = pneg %p246
        $region114: #{tpu_custom_call.1} parent=87 // pred_check_branch
          %766 = sbr.rel (%p764) target = $region116
        $region115: #{tpu_custom_call.1} parent=87 // pred_region
          %768 = dma.done [#allocation14], 1024
        $region116: #{tpu_custom_call.1} parent=87 // pred_fallthru
          _
        // Predicated region
        $region117: #{tpu_custom_call.1} parent=87 // pred_check
          %p769 = pneg %p267
        $region118: #{tpu_custom_call.1} parent=87 // pred_check_branch
          %771 = sbr.rel (%p769) target = $region120
        $region119: #{tpu_custom_call.1} parent=87 // pred_region
          %773 = dma.done [#allocation17], 1024
        $region120: #{tpu_custom_call.1} parent=87 // pred_fallthru
          _
        // Predicated region
        $region121: #{tpu_custom_call.1} parent=87 // pred_check
          %p774 = pneg %p288
        $region122: #{tpu_custom_call.1} parent=87 // pred_check_branch
          %776 = sbr.rel (%p774) target = $region124
        $region123: #{tpu_custom_call.1} parent=87 // pred_region
          %778 = dma.done [#allocation17], 2048
        $region124: #{tpu_custom_call.1} parent=87 // pred_fallthru
          _
        // Predicated region
        $region125: #{tpu_custom_call.1} parent=87 // pred_check
          %p779 = pneg %p309
        $region126: #{tpu_custom_call.1} parent=87 // pred_check_branch
          %781 = sbr.rel (%p779) target = $region128
        $region127: #{tpu_custom_call.1} parent=87 // pred_region
          %783 = dma.done [#allocation20], 1024
        $region128: #{tpu_custom_call.1} parent=87 // pred_fallthru
          _
        // Predicated region
        $region129: #{tpu_custom_call.1} parent=87 // pred_check
          %p784 = pneg %p330
        $region130: #{tpu_custom_call.1} parent=87 // pred_check_branch
          %786 = sbr.rel (%p784) target = $region132
        $region131: #{tpu_custom_call.1} parent=87 // pred_region
          %788 = dma.done [#allocation20], 2048
        $region132: #{tpu_custom_call.1} parent=87 // pred_fallthru
          _
        // Predicated region
        $region133: #{tpu_custom_call.1} parent=87 // pred_check
          %p789 = pneg %p351
        $region134: #{tpu_custom_call.1} parent=87 // pred_check_branch
          %791 = sbr.rel (%p789) target = $region136
        $region135: #{tpu_custom_call.1} parent=87 // pred_region
          %793 = dma.done [#allocation23], 2048
        $region136: #{tpu_custom_call.1} parent=87 // pred_fallthru
          _
        // Predicated region
        $region137: #{tpu_custom_call.1} parent=87 // pred_check
          %p794 = pneg %p372
        $region138: #{tpu_custom_call.1} parent=87 // pred_check_branch
          %796 = sbr.rel (%p794) target = $region140
        $region139: #{tpu_custom_call.1} parent=87 // pred_region
          %798 = dma.done [#allocation23], 256
        $region140: #{tpu_custom_call.1} parent=87 // pred_fallthru
          _
        %s799 = sand.u32 %s66, 1
        %s800 = scalar_lea.sflag [#allocation5], %s799
        %s801 = sand.u32 %s66, 1
        %s802 = smul.addr %s801, 32
        %s803 = scalar_lea.vmem [#allocation4], %s802
        %p804 = pneg %p79
        %p805 = pneg %p76
        %s806 = sand.u32 %s44, 1
        %s807 = scalar_lea.sflag [#allocation8], %s806
        %s808 = sand.u32 %s92, 1
        %s809 = smul.addr %s808, 16
        %s810 = scalar_lea.vmem [#allocation7], %s809
        %p811 = pneg %p105
        %p812 = pneg %p102
        %s813 = sand.u32 %s44, 1
        %s814 = scalar_lea.sflag [#allocation8], %s813
        %s815 = sand.u32 %s118, 1
        %s816 = smul.addr %s815, 16
        %s817 = scalar_lea.vmem [#allocation9], %s816
        %p818 = pneg %p131
        %p819 = pneg %p128
        %p820 = scmp.lt.s32.totalorder %s48, 1
        %s821 = scalar_select %p820, %s48, 1
        %s822 = scalar_lea.vmem %s3, %s821
        %p823 = pneg %p157
        %p824 = pneg %p154
        %s825 = sand.u32 %s44, 1
        %s826 = scalar_lea.sflag [#allocation11], %s825
        %s827 = sand.u32 %s170, 1
        %s828 = scalar_lea.vmem [#allocation10], %s827
        %p829 = pneg %p183
        %p830 = pneg %p180
        %p831 = pneg %p204
        %p832 = pneg %p201
        %p833 = pneg %p225
        %p834 = pneg %p222
        %p835 = pneg %p246
        %p836 = pneg %p243
        %p837 = pneg %p267
        %p838 = pneg %p264
        %p839 = pneg %p288
        %p840 = pneg %p285
        %p841 = pneg %p309
        %p842 = pneg %p306
        %p843 = pneg %p330
        %p844 = pneg %p327
        %p845 = pneg %p351
        %p846 = pneg %p348
        %p847 = pneg %p372
        %p848 = pneg %p369
        %p849 = pneg %p393
        %p850 = pneg %p390
        %p851 = pneg %p414
        %p852 = pneg %p411
        %p853 = pneg %p435
        %p854 = pneg %p432
        %p855 = pneg %p463
        %p856 = pneg %p460
        %s857 = sand.u32 %s450, 1
        %s858 = scalar_lea.sflag [#allocation6], %s857
        %s859 = sand.u32 %s450, 1
        %s860 = smul.addr %s859, 32
        %s861 = scalar_lea.vmem [#allocation25], %s860
        %s862 = smul.u32 4, %s49
        %p863 = scmp.lt.s32.totalorder %s48, 1
        %s864 = scalar_select %p863, %s48, 1
        %s865 = scalar_lea.vmem %s3, %s864
        %s866 = smul.u32 4, %s49
        %p868 = scmp.eq.s32.totalorder %s49, 0
        // Predicated region
        $region141: #{tpu_custom_call.1} parent=87 // pred_check
          %p869 = pneg %p868
        $region142: #{tpu_custom_call.1} parent=87 // pred_check_branch
          %871 = sbr.rel (%p869) target = $region144
        $region143: #{tpu_custom_call.1} parent=87 // pred_region
          %v872 = vld [vmem:[%s729] sm:$0xf]
          %v873 = vld [vmem:[%s729 + $0x4] sm:$0xf]
          %v874 = vld [vmem:[%s729 + $0x8] sm:$0xf]
          %v875 = vld [vmem:[%s729 + $0xc] sm:$0xf]
          %v876 = vld [vmem:[#allocation13] sm:$0xff]
          %v877 = vld [vmem:[#allocation13 + $0x8] sm:$0xff]
          %v878 = vld [vmem:[#allocation13 + $0x10] sm:$0xff]
          %v879 = vld [vmem:[#allocation13 + $0x18] sm:$0xff]
          %v880 = vld [vmem:[#allocation13 + $0x20] sm:$0xff]
          %v881 = vld [vmem:[#allocation13 + $0x28] sm:$0xff]
          %v882 = vld [vmem:[#allocation13 + $0x30] sm:$0xff]
          %v883 = vld [vmem:[#allocation13 + $0x38] sm:$0xff]
          %v884 = vld [vmem:[#allocation13 + $0x40] sm:$0xff]
          %v885 = vld [vmem:[#allocation13 + $0x48] sm:$0xff]
          %v886 = vld [vmem:[#allocation13 + $0x50] sm:$0xff]
          %v887 = vld [vmem:[#allocation13 + $0x58] sm:$0xff]
          %v888 = vld [vmem:[#allocation13 + $0x60] sm:$0xff]
          %v889 = vld [vmem:[#allocation13 + $0x68] sm:$0xff]
          %v890 = vld [vmem:[#allocation13 + $0x70] sm:$0xff]
          %v891 = vld [vmem:[#allocation13 + $0x78] sm:$0xff]
          %v892 = vld [vmem:[%s14] sm:$0x3]
          %v894 = vperm.slane %v892, 0
          %v895 = vperm.slane %v892, 1
          %v902 = vunpack.c.l.b16 %v872
          %v903 = vunpack.c.l.b16 %v873
          %v904 = vunpack.c.l.b16 %v874
          %v905 = vunpack.c.l.b16 %v875
          %v906 = vpack.c.b16 %v903, %v902
          %v907 = vpack.c.b16 %v905, %v904
          %v926 = vunpack.c.l.b16 %v876
          %v927 = vunpack.c.h.b16 %v876
          %v928 = vunpack.c.l.b16 %v877
          %v929 = vunpack.c.h.b16 %v877
          %v930 = vunpack.c.l.b16 %v878
          %v931 = vunpack.c.h.b16 %v878
          %v932 = vunpack.c.l.b16 %v879
          %v933 = vunpack.c.h.b16 %v879
          %v934 = vunpack.c.l.b16 %v880
          %v935 = vunpack.c.h.b16 %v880
          %v936 = vunpack.c.l.b16 %v881
          %v937 = vunpack.c.h.b16 %v881
          %v938 = vunpack.c.l.b16 %v882
          %v939 = vunpack.c.h.b16 %v882
          %v940 = vunpack.c.l.b16 %v883
          %v941 = vunpack.c.h.b16 %v883
          %v942 = vunpack.c.l.b16 %v884
          %v943 = vunpack.c.h.b16 %v884
          %v944 = vunpack.c.l.b16 %v885
          %v945 = vunpack.c.h.b16 %v885
          %v946 = vunpack.c.l.b16 %v886
          %v947 = vunpack.c.h.b16 %v886
          %v948 = vunpack.c.l.b16 %v887
          %v949 = vunpack.c.h.b16 %v887
          %v950 = vunpack.c.l.b16 %v888
          %v951 = vunpack.c.h.b16 %v888
          %v952 = vunpack.c.l.b16 %v889
          %v953 = vunpack.c.h.b16 %v889
          %v954 = vunpack.c.l.b16 %v890
          %v955 = vunpack.c.h.b16 %v890
          %v956 = vunpack.c.l.b16 %v891
          %v957 = vunpack.c.h.b16 %v891
          %v958 = vpack.c.b16 %v928, %v926
          %v959 = vpack.c.b16 %v929, %v927
          %v960 = vpack.c.b16 %v932, %v930
          %v961 = vpack.c.b16 %v933, %v931
          %v962 = vpack.c.b16 %v936, %v934
          %v963 = vpack.c.b16 %v937, %v935
          %v964 = vpack.c.b16 %v940, %v938
          %v965 = vpack.c.b16 %v941, %v939
          %v966 = vpack.c.b16 %v944, %v942
          %v967 = vpack.c.b16 %v945, %v943
          %v968 = vpack.c.b16 %v948, %v946
          %v969 = vpack.c.b16 %v949, %v947
          %v970 = vpack.c.b16 %v952, %v950
          %v971 = vpack.c.b16 %v953, %v951
          %v972 = vpack.c.b16 %v956, %v954
          %v973 = vpack.c.b16 %v957, %v955
          %990 = vmatpush.bf16.msra.mxu0 %v972
          %991 = vmatpush.bf16.msra.mxu0 %v970
          %992 = vmatpush.bf16.msra.mxu0 %v968
          %993 = vmatpush.bf16.msra.mxu0 %v966
          %994 = vmatpush.bf16.msra.mxu0 %v964
          %995 = vmatpush.bf16.msra.mxu0 %v962
          %996 = vmatpush.bf16.msra.mxu0 %v960
          %997 = vmatpush.bf16.msra.mxu0 %v958
          %998 = vmatmul.bf16.gmra.mxu0 %v906
          %v999 = vpop.f32.mrf.mxu0
          %v1000 = vadd.f32 %v894, %v999
          %v1001 = vpop.f32.mrf.mxu0
          %v1002 = vadd.f32 %v894, %v1001
          %1003 = vmatmul.bf16.gmra.mxu0 %v907
          %v1004 = vpop.f32.mrf.mxu0
          %v1005 = vadd.f32 %v894, %v1004
          %v1006 = vpop.f32.mrf.mxu0
          %v1007 = vadd.f32 %v894, %v1006
          %1008 = vdwg.mxu0
          %1009 = vmatpush.bf16.msra.mxu0 %v973
          %1010 = vmatpush.bf16.msra.mxu0 %v971
          %1011 = vmatpush.bf16.msra.mxu0 %v969
          %1012 = vmatpush.bf16.msra.mxu0 %v967
          %1013 = vmatpush.bf16.msra.mxu0 %v965
          %1014 = vmatpush.bf16.msra.mxu0 %v963
          %1015 = vmatpush.bf16.msra.mxu0 %v961
          %1016 = vmatpush.bf16.msra.mxu0 %v959
          %1017 = vmatmul.bf16.gmra.mxu0 %v906
          %v1018 = vpop.f32.mrf.mxu0
          %v1019 = vadd.f32 %v895, %v1018
          %v1020 = vpop.f32.mrf.mxu0
          %v1021 = vadd.f32 %v895, %v1020
          %1022 = vmatmul.bf16.gmra.mxu0 %v907
          %v1023 = vpop.f32.mrf.mxu0
          %v1024 = vadd.f32 %v895, %v1023
          %v1025 = vpop.f32.mrf.mxu0
          %v1026 = vadd.f32 %v895, %v1025
          %1027 = vdwg.mxu0
          %v1028 = vpack.c.bf16 %v1019, %v1000
          %v1029 = vpack.c.bf16 %v1021, %v1002
          %v1030 = vpack.c.bf16 %v1024, %v1005
          %v1031 = vpack.c.bf16 %v1026, %v1007
          %1032 = vst [vmem:[#allocation2] sm:$0xff] %v1028
          %1033 = vst [vmem:[#allocation2 + $0x8] sm:$0xff] %v1029
          %1034 = vst [vmem:[#allocation2 + $0x10] sm:$0xff] %v1030
          %1035 = vst [vmem:[#allocation2 + $0x18] sm:$0xff] %v1031
          %v1036 = vld [vmem:[%s739] sm:$0xf]
          %v1037 = vld [vmem:[%s739 + $0x4] sm:$0xf]
          %v1038 = vld [vmem:[%s739 + $0x8] sm:$0xf]
          %v1039 = vld [vmem:[%s739 + $0xc] sm:$0xf]
          %v1040 = vld [vmem:[#allocation18] sm:$0xff]
          %v1041 = vld [vmem:[#allocation18 + $0x8] sm:$0xff]
          %v1042 = vld [vmem:[#allocation18 + $0x10] sm:$0xff]
          %v1043 = vld [vmem:[#allocation18 + $0x18] sm:$0xff]
          %v1044 = vld [vmem:[#allocation18 + $0x20] sm:$0xff]
          %v1045 = vld [vmem:[#allocation18 + $0x28] sm:$0xff]
          %v1046 = vld [vmem:[#allocation18 + $0x30] sm:$0xff]
          %v1047 = vld [vmem:[#allocation18 + $0x38] sm:$0xff]
          %v1048 = vld [vmem:[#allocation18 + $0x40] sm:$0xff]
          %v1049 = vld [vmem:[#allocation18 + $0x48] sm:$0xff]
          %v1050 = vld [vmem:[#allocation18 + $0x50] sm:$0xff]
          %v1051 = vld [vmem:[#allocation18 + $0x58] sm:$0xff]
          %v1052 = vld [vmem:[#allocation18 + $0x60] sm:$0xff]
          %v1053 = vld [vmem:[#allocation18 + $0x68] sm:$0xff]
          %v1054 = vld [vmem:[#allocation18 + $0x70] sm:$0xff]
          %v1055 = vld [vmem:[#allocation18 + $0x78] sm:$0xff]
          %v1056 = vld [vmem:[%s15] sm:$0x3]
          %v1058 = vperm.slane %v1056, 0
          %v1059 = vperm.slane %v1056, 1
          %v1066 = vunpack.c.l.b16 %v1036
          %v1067 = vunpack.c.l.b16 %v1037
          %v1068 = vunpack.c.l.b16 %v1038
          %v1069 = vunpack.c.l.b16 %v1039
          %v1070 = vpack.c.b16 %v1067, %v1066
          %v1071 = vpack.c.b16 %v1069, %v1068
          %v1090 = vunpack.c.l.b16 %v1040
          %v1091 = vunpack.c.h.b16 %v1040
          %v1092 = vunpack.c.l.b16 %v1041
          %v1093 = vunpack.c.h.b16 %v1041
          %v1094 = vunpack.c.l.b16 %v1042
          %v1095 = vunpack.c.h.b16 %v1042
          %v1096 = vunpack.c.l.b16 %v1043
          %v1097 = vunpack.c.h.b16 %v1043
          %v1098 = vunpack.c.l.b16 %v1044
          %v1099 = vunpack.c.h.b16 %v1044
          %v1100 = vunpack.c.l.b16 %v1045
          %v1101 = vunpack.c.h.b16 %v1045
          %v1102 = vunpack.c.l.b16 %v1046
          %v1103 = vunpack.c.h.b16 %v1046
          %v1104 = vunpack.c.l.b16 %v1047
          %v1105 = vunpack.c.h.b16 %v1047
          %v1106 = vunpack.c.l.b16 %v1048
          %v1107 = vunpack.c.h.b16 %v1048
          %v1108 = vunpack.c.l.b16 %v1049
          %v1109 = vunpack.c.h.b16 %v1049
          %v1110 = vunpack.c.l.b16 %v1050
          %v1111 = vunpack.c.h.b16 %v1050
          %v1112 = vunpack.c.l.b16 %v1051
          %v1113 = vunpack.c.h.b16 %v1051
          %v1114 = vunpack.c.l.b16 %v1052
          %v1115 = vunpack.c.h.b16 %v1052
          %v1116 = vunpack.c.l.b16 %v1053
          %v1117 = vunpack.c.h.b16 %v1053
          %v1118 = vunpack.c.l.b16 %v1054
          %v1119 = vunpack.c.h.b16 %v1054
          %v1120 = vunpack.c.l.b16 %v1055
          %v1121 = vunpack.c.h.b16 %v1055
          %v1122 = vpack.c.b16 %v1092, %v1090
          %v1123 = vpack.c.b16 %v1093, %v1091
          %v1124 = vpack.c.b16 %v1096, %v1094
          %v1125 = vpack.c.b16 %v1097, %v1095
          %v1126 = vpack.c.b16 %v1100, %v1098
          %v1127 = vpack.c.b16 %v1101, %v1099
          %v1128 = vpack.c.b16 %v1104, %v1102
          %v1129 = vpack.c.b16 %v1105, %v1103
          %v1130 = vpack.c.b16 %v1108, %v1106
          %v1131 = vpack.c.b16 %v1109, %v1107
          %v1132 = vpack.c.b16 %v1112, %v1110
          %v1133 = vpack.c.b16 %v1113, %v1111
          %v1134 = vpack.c.b16 %v1116, %v1114
          %v1135 = vpack.c.b16 %v1117, %v1115
          %v1136 = vpack.c.b16 %v1120, %v1118
          %v1137 = vpack.c.b16 %v1121, %v1119
          %1154 = vmatpush.bf16.msra.mxu0 %v1136
          %1155 = vmatpush.bf16.msra.mxu0 %v1134
          %1156 = vmatpush.bf16.msra.mxu0 %v1132
          %1157 = vmatpush.bf16.msra.mxu0 %v1130
          %1158 = vmatpush.bf16.msra.mxu0 %v1128
          %1159 = vmatpush.bf16.msra.mxu0 %v1126
          %1160 = vmatpush.bf16.msra.mxu0 %v1124
          %1161 = vmatpush.bf16.msra.mxu0 %v1122
          %1162 = vmatmul.bf16.gmra.mxu0 %v1070
          %v1163 = vpop.f32.mrf.mxu0
          %v1164 = vadd.f32 %v1058, %v1163
          %v1165 = vpop.f32.mrf.mxu0
          %v1166 = vadd.f32 %v1058, %v1165
          %1167 = vmatmul.bf16.gmra.mxu0 %v1071
          %v1168 = vpop.f32.mrf.mxu0
          %v1169 = vadd.f32 %v1058, %v1168
          %v1170 = vpop.f32.mrf.mxu0
          %v1171 = vadd.f32 %v1058, %v1170
          %1172 = vdwg.mxu0
          %1173 = vmatpush.bf16.msra.mxu0 %v1137
          %1174 = vmatpush.bf16.msra.mxu0 %v1135
          %1175 = vmatpush.bf16.msra.mxu0 %v1133
          %1176 = vmatpush.bf16.msra.mxu0 %v1131
          %1177 = vmatpush.bf16.msra.mxu0 %v1129
          %1178 = vmatpush.bf16.msra.mxu0 %v1127
          %1179 = vmatpush.bf16.msra.mxu0 %v1125
          %1180 = vmatpush.bf16.msra.mxu0 %v1123
          %1181 = vmatmul.bf16.gmra.mxu0 %v1070
          %v1182 = vpop.f32.mrf.mxu0
          %v1183 = vadd.f32 %v1059, %v1182
          %v1184 = vpop.f32.mrf.mxu0
          %v1185 = vadd.f32 %v1059, %v1184
          %1186 = vmatmul.bf16.gmra.mxu0 %v1071
          %v1187 = vpop.f32.mrf.mxu0
          %v1188 = vadd.f32 %v1059, %v1187
          %v1189 = vpop.f32.mrf.mxu0
          %v1190 = vadd.f32 %v1059, %v1189
          %1191 = vdwg.mxu0
          %v1192 = vpack.c.bf16 %v1183, %v1164
          %v1193 = vpack.c.bf16 %v1185, %v1166
          %v1194 = vpack.c.bf16 %v1188, %v1169
          %v1195 = vpack.c.bf16 %v1190, %v1171
          %1196 = vst [vmem:[#allocation3] sm:$0xff] %v1192
          %1197 = vst [vmem:[#allocation3 + $0x8] sm:$0xff] %v1193
          %1198 = vst [vmem:[#allocation3 + $0x10] sm:$0xff] %v1194
          %1199 = vst [vmem:[#allocation3 + $0x18] sm:$0xff] %v1195
        $region144: #{tpu_custom_call.1} parent=87 // pred_fallthru
          _
        %v1200 = vld [vmem:[#allocation24] sm:$0xff]
        %v1201 = vld [vmem:[#allocation24 + $0x8] sm:$0x7]
        %v1202 = vld [vmem:[%s865] sm:$0x1]
        %vm1203 = vcmp.eq.f32.partialorder %v1202, 0.0
        %v1204 = vsel %vm1203, -1e+09, 0.0
        %v1205 = vld [vmem:[%s748] sm:$0x1]
        %vm1206 = vcmp.eq.f32.partialorder %v1205, 0.0
        %v1207 = vsel %vm1206, -1e+09, 0.0
        %v1208 = vld [vmem:[%s719] sm:$0xff]
        %v1209 = vld [vmem:[%s719 + $0x8] sm:$0xff]
        %v1210 = vld [vmem:[%s719 + $0x10] sm:$0xff]
        %v1211 = vld [vmem:[%s719 + $0x18] sm:$0xff]
        %v1212 = vpack.c.bf16 %v1209, %v1208
        %v1213 = vpack.c.bf16 %v1211, %v1210
        %v1214 = vld [vmem:[#allocation12] sm:$0xf]
        %v1215 = vld [vmem:[#allocation12 + $0x4] sm:$0xf]
        %v1216 = vld [vmem:[#allocation12 + $0x8] sm:$0xf]
        %v1217 = vld [vmem:[#allocation12 + $0xc] sm:$0xf]
        %v1218 = vld [vmem:[#allocation12 + $0x10] sm:$0xf]
        %v1219 = vld [vmem:[#allocation12 + $0x14] sm:$0xf]
        %v1220 = vld [vmem:[#allocation12 + $0x18] sm:$0xf]
        %v1221 = vld [vmem:[#allocation12 + $0x1c] sm:$0xf]
        %v1222 = vld [vmem:[#allocation12 + $0x20] sm:$0xf]
        %v1223 = vld [vmem:[#allocation12 + $0x24] sm:$0xf]
        %v1224 = vld [vmem:[#allocation12 + $0x28] sm:$0xf]
        %v1225 = vld [vmem:[#allocation12 + $0x2c] sm:$0xf]
        %v1226 = vld [vmem:[#allocation12 + $0x30] sm:$0xf]
        %v1227 = vld [vmem:[#allocation12 + $0x34] sm:$0xf]
        %v1228 = vld [vmem:[#allocation12 + $0x38] sm:$0xf]
        %v1229 = vld [vmem:[#allocation12 + $0x3c] sm:$0xf]
        %v1230 = vperm.slane %v1200, 6
        %v1247 = vunpack.c.l.b16 %v1214
        %v1248 = vunpack.c.l.b16 %v1215
        %v1249 = vunpack.c.l.b16 %v1216
        %v1250 = vunpack.c.l.b16 %v1217
        %v1251 = vunpack.c.l.b16 %v1218
        %v1252 = vunpack.c.l.b16 %v1219
        %v1253 = vunpack.c.l.b16 %v1220
        %v1254 = vunpack.c.l.b16 %v1221
        %v1255 = vunpack.c.l.b16 %v1222
        %v1256 = vunpack.c.l.b16 %v1223
        %v1257 = vunpack.c.l.b16 %v1224
        %v1258 = vunpack.c.l.b16 %v1225
        %v1259 = vunpack.c.l.b16 %v1226
        %v1260 = vunpack.c.l.b16 %v1227
        %v1261 = vunpack.c.l.b16 %v1228
        %v1262 = vunpack.c.l.b16 %v1229
        %v1263 = vpack.c.b16 %v1248, %v1247
        %v1264 = vpack.c.b16 %v1250, %v1249
        %v1265 = vpack.c.b16 %v1252, %v1251
        %v1266 = vpack.c.b16 %v1254, %v1253
        %v1267 = vpack.c.b16 %v1256, %v1255
        %v1268 = vpack.c.b16 %v1258, %v1257
        %v1269 = vpack.c.b16 %v1260, %v1259
        %v1270 = vpack.c.b16 %v1262, %v1261
        %1279 = vmatpush.bf16.msra.mxu0 %v1270
        %1280 = vmatpush.bf16.msra.mxu0 %v1269
        %1281 = vmatpush.bf16.msra.mxu0 %v1268
        %1282 = vmatpush.bf16.msra.mxu0 %v1267
        %1283 = vmatpush.bf16.msra.mxu0 %v1266
        %1284 = vmatpush.bf16.msra.mxu0 %v1265
        %1285 = vmatpush.bf16.msra.mxu0 %v1264
        %1286 = vmatpush.bf16.msra.mxu0 %v1263
        %1287 = vmatmul.bf16.gmra.mxu0 %v1212
        %v1288 = vpop.f32.mrf.mxu0
        %v1289 = vadd.f32 %v1230, %v1288
        %v1290 = vpop.f32.mrf.mxu0
        %v1291 = vadd.f32 %v1230, %v1290
        %1292 = vmatmul.bf16.gmra.mxu0 %v1213
        %v1293 = vpop.f32.mrf.mxu0
        %v1294 = vadd.f32 %v1230, %v1293
        %v1295 = vpop.f32.mrf.mxu0
        %v1296 = vadd.f32 %v1230, %v1295
        %1297 = vdwg.mxu0
        %v1298 = vpack.c.bf16 %v1289, %v1289
        %v1299 = vpack.c.bf16 %v1291, %v1291
        %v1300 = vpack.c.bf16 %v1294, %v1294
        %v1301 = vpack.c.bf16 %v1296, %v1296
        %v1302 = vld [vmem:[#allocation2] sm:$0xf]
        %v1303 = vld [vmem:[#allocation2 + $0x8] sm:$0xf]
        %v1304 = vld [vmem:[#allocation2 + $0x10] sm:$0xf]
        %v1305 = vld [vmem:[#allocation2 + $0x18] sm:$0xf]
        %v1306 = vld [vmem:[#allocation2 + $0x4] sm:$0xf]
        %v1307 = vld [vmem:[#allocation2 + $0xc] sm:$0xf]
        %v1308 = vld [vmem:[#allocation2 + $0x14] sm:$0xf]
        %v1309 = vld [vmem:[#allocation2 + $0x1c] sm:$0xf]
        %v1311 = vperm.slane %v1204, 0
        %v1317 = vunpack.c.l.b16 %v1298
        %v1318 = vunpack.c.l.b16 %v1299
        %v1319 = vunpack.c.l.b16 %v1300
        %v1320 = vunpack.c.l.b16 %v1301
        %v1321 = vpack.c.b16 %v1318, %v1317
        %v1322 = vpack.c.b16 %v1320, %v1319
        %v1327 = vunpack.c.l.b16 %v1302
        %v1328 = vunpack.c.l.b16 %v1303
        %v1329 = vunpack.c.l.b16 %v1304
        %v1330 = vunpack.c.l.b16 %v1305
        %v1331 = vpack.c.b16 %v1328, %v1327
        %v1332 = vpack.c.b16 %v1330, %v1329
        %vm1333 = vcmask 261120
        %v1335 = vsel %vm1333, %v1321, 0
        %v1338 = vsel %vm1333, %v1322, 0
        %v1341 = vsel %vm1333, %v1331, 0
        %v1344 = vsel %vm1333, %v1332, 0
        %1346 = vmatpush.bf16.xpose.msra.mxu0 0
        %1347 = vmatpush.bf16.xpose.msra.mxu0 0
        %1348 = vmatpush.bf16.xpose.msra.mxu0 0
        %1349 = vmatpush.bf16.xpose.msra.mxu0 0
        %1350 = vmatpush.bf16.xpose.msra.mxu0 0
        %1351 = vmatpush.bf16.xpose.msra.mxu0 0
        %1352 = vmatpush.bf16.xpose.msra.mxu0 %v1344
        %1353 = vmatpush.bf16.xpose.msra.mxu0 %v1341
        %1354 = vmatmul.bf16.gmra.mxu0 %v1335
        %v1355 = vpop.f32.mrf.mxu0
        %v1356 = vadd.f32 %v1311, %v1355
        %v1357 = vpop.f32.mrf.mxu0
        %v1358 = vadd.f32 %v1311, %v1357
        %1359 = vmatmul.bf16.gmra.mxu0 %v1338
        %v1360 = vpop.f32.mrf.mxu0
        %v1361 = vadd.f32 %v1311, %v1360
        %v1362 = vpop.f32.mrf.mxu0
        %v1363 = vadd.f32 %v1311, %v1362
        %1364 = vdwg.mxu0
        %v1365 = vsel %vm1333, %v1356, -inf
        %1366 = vmax.xlane.f32.xlu0 %v1365
        %v1367 = vpop.xlane.xlu0 %1366
        %v1368 = vsel %vm1333, %v1358, -inf
        %1369 = vmax.xlane.f32.xlu0 %v1368
        %v1370 = vpop.xlane.xlu0 %1369
        %v1371 = vsel %vm1333, %v1361, -inf
        %1372 = vmax.xlane.f32.xlu0 %v1371
        %v1373 = vpop.xlane.xlu0 %1372
        %v1374 = vsel %vm1333, %v1363, -inf
        %1375 = vmax.xlane.f32.xlu0 %v1374
        %v1376 = vpop.xlane.xlu0 %1375
        %v1377 = vsub.f32 %v1356, %v1367
        %v1378 = vsub.f32 %v1358, %v1370
        %v1379 = vsub.f32 %v1361, %v1373
        %v1380 = vsub.f32 %v1363, %v1376
        %v1381 = vmul.f32 %v1377, 1.442695
        %v1382 = vpow.pop %v1381
        %v1383 = vmul.f32 %v1378, 1.442695
        %v1384 = vpow.pop %v1383
        %v1385 = vmul.f32 %v1379, 1.442695
        %v1386 = vpow.pop %v1385
        %v1387 = vmul.f32 %v1380, 1.442695
        %v1388 = vpow.pop %v1387
        %v1389 = vsel %vm1333, %v1382, 0.0
        %1390 = vadd.xlane.f32.xlu0 %v1389
        %v1391 = vpop.xlane.xlu0 %1390
        %v1392 = vsel %vm1333, %v1384, 0.0
        %1393 = vadd.xlane.f32.xlu0 %v1392
        %v1394 = vpop.xlane.xlu0 %1393
        %v1395 = vsel %vm1333, %v1386, 0.0
        %1396 = vadd.xlane.f32.xlu0 %v1395
        %v1397 = vpop.xlane.xlu0 %1396
        %v1398 = vsel %vm1333, %v1388, 0.0
        %1399 = vadd.xlane.f32.xlu0 %v1398
        %v1400 = vpop.xlane.xlu0 %1399
        %v1401 = vrcp.pop %v1391
        %v1402 = vrcp.pop %v1394
        %v1403 = vrcp.pop %v1397
        %v1404 = vrcp.pop %v1400
        %v1405 = vmul.f32 %v1382, %v1401
        %v1406 = vmul.f32 %v1384, %v1402
        %v1407 = vmul.f32 %v1386, %v1403
        %v1408 = vmul.f32 %v1388, %v1404
        %v1409 = vpack.c.bf16 %v1406, %v1405
        %v1410 = vpack.c.bf16 %v1408, %v1407
        %v1415 = vunpack.c.l.b16 %v1306
        %v1416 = vunpack.c.l.b16 %v1307
        %v1417 = vunpack.c.l.b16 %v1308
        %v1418 = vunpack.c.l.b16 %v1309
        %v1419 = vpack.c.b16 %v1416, %v1415
        %v1420 = vpack.c.b16 %v1418, %v1417
        %v1424 = vsel %vm1333, %v1409, 0
        %v1427 = vsel %vm1333, %v1410, 0
        %1429 = vmatpush.bf16.msra.mxu0 0
        %1430 = vmatpush.bf16.msra.mxu0 0
        %1431 = vmatpush.bf16.msra.mxu0 0
        %1432 = vmatpush.bf16.msra.mxu0 0
        %1433 = vmatpush.bf16.msra.mxu0 0
        %1434 = vmatpush.bf16.msra.mxu0 0
        %1435 = vmatpush.bf16.msra.mxu0 %v1420
        %1436 = vmatpush.bf16.msra.mxu0 %v1419
        %1437 = vmatmul.bf16.gmra.mxu0 %v1424
        %v1438 = vpop.f32.mrf.mxu0
        %v1439 = vadd.f32 0.0, %v1438
        %v1440 = vpop.f32.mrf.mxu0
        %v1441 = vadd.f32 0.0, %v1440
        %1442 = vmatmul.bf16.gmra.mxu0 %v1427
        %v1443 = vpop.f32.mrf.mxu0
        %v1444 = vadd.f32 0.0, %v1443
        %v1445 = vpop.f32.mrf.mxu0
        %v1446 = vadd.f32 0.0, %v1445
        %1447 = vdwg.mxu0
        %v1448 = vpack.c.bf16 %v1441, %v1439
        %v1449 = vpack.c.bf16 %v1446, %v1444
        %v1450 = vld [vmem:[#allocation15] sm:$0xf]
        %v1451 = vld [vmem:[#allocation15 + $0x4] sm:$0xf]
        %v1452 = vld [vmem:[#allocation15 + $0x8] sm:$0xf]
        %v1453 = vld [vmem:[#allocation15 + $0xc] sm:$0xf]
        %1454 = vrot.lane.b32.xlu0 %v1321, 96
        %v1455 = vpop.permute.xlu0 %1454
        %1456 = vrot.lane.b32.xlu0 %v1322, 96
        %v1457 = vpop.permute.xlu0 %1456
        %1458 = vrot.lane.b32.xlu0 %v1331, 96
        %v1459 = vpop.permute.xlu0 %1458
        %1460 = vrot.lane.b32.xlu0 %v1332, 96
        %v1461 = vpop.permute.xlu0 %1460
        %v1463 = vsel %vm1333, %v1455, 0
        %v1466 = vsel %vm1333, %v1457, 0
        %v1469 = vsel %vm1333, %v1459, 0
        %v1472 = vsel %vm1333, %v1461, 0
        %1474 = vmatpush.bf16.xpose.msra.mxu0 0
        %1475 = vmatpush.bf16.xpose.msra.mxu0 0
        %1476 = vmatpush.bf16.xpose.msra.mxu0 0
        %1477 = vmatpush.bf16.xpose.msra.mxu0 0
        %1478 = vmatpush.bf16.xpose.msra.mxu0 0
        %1479 = vmatpush.bf16.xpose.msra.mxu0 0
        %1480 = vmatpush.bf16.xpose.msra.mxu0 %v1472
        %1481 = vmatpush.bf16.xpose.msra.mxu0 %v1469
        %1482 = vmatmul.bf16.gmra.mxu0 %v1463
        %v1483 = vpop.f32.mrf.mxu0
        %v1484 = vadd.f32 %v1311, %v1483
        %v1485 = vpop.f32.mrf.mxu0
        %v1486 = vadd.f32 %v1311, %v1485
        %1487 = vmatmul.bf16.gmra.mxu0 %v1466
        %v1488 = vpop.f32.mrf.mxu0
        %v1489 = vadd.f32 %v1311, %v1488
        %v1490 = vpop.f32.mrf.mxu0
        %v1491 = vadd.f32 %v1311, %v1490
        %1492 = vdwg.mxu0
        %v1493 = vsel %vm1333, %v1484, -inf
        %1494 = vmax.xlane.f32.xlu0 %v1493
        %v1495 = vpop.xlane.xlu0 %1494
        %v1496 = vsel %vm1333, %v1486, -inf
        %1497 = vmax.xlane.f32.xlu0 %v1496
        %v1498 = vpop.xlane.xlu0 %1497
        %v1499 = vsel %vm1333, %v1489, -inf
        %1500 = vmax.xlane.f32.xlu0 %v1499
        %v1501 = vpop.xlane.xlu0 %1500
        %v1502 = vsel %vm1333, %v1491, -inf
        %1503 = vmax.xlane.f32.xlu0 %v1502
        %v1504 = vpop.xlane.xlu0 %1503
        %v1505 = vsub.f32 %v1484, %v1495
        %v1506 = vsub.f32 %v1486, %v1498
        %v1507 = vsub.f32 %v1489, %v1501
        %v1508 = vsub.f32 %v1491, %v1504
        %v1509 = vmul.f32 %v1505, 1.442695
        %v1510 = vpow.pop %v1509
        %v1511 = vmul.f32 %v1506, 1.442695
        %v1512 = vpow.pop %v1511
        %v1513 = vmul.f32 %v1507, 1.442695
        %v1514 = vpow.pop %v1513
        %v1515 = vmul.f32 %v1508, 1.442695
        %v1516 = vpow.pop %v1515
        %v1517 = vsel %vm1333, %v1510, 0.0
        %1518 = vadd.xlane.f32.xlu0 %v1517
        %v1519 = vpop.xlane.xlu0 %1518
        %v1520 = vsel %vm1333, %v1512, 0.0
        %1521 = vadd.xlane.f32.xlu0 %v1520
        %v1522 = vpop.xlane.xlu0 %1521
        %v1523 = vsel %vm1333, %v1514, 0.0
        %1524 = vadd.xlane.f32.xlu0 %v1523
        %v1525 = vpop.xlane.xlu0 %1524
        %v1526 = vsel %vm1333, %v1516, 0.0
        %1527 = vadd.xlane.f32.xlu0 %v1526
        %v1528 = vpop.xlane.xlu0 %1527
        %v1529 = vrcp.pop %v1519
        %v1530 = vrcp.pop %v1522
        %v1531 = vrcp.pop %v1525
        %v1532 = vrcp.pop %v1528
        %v1533 = vmul.f32 %v1510, %v1529
        %v1534 = vmul.f32 %v1512, %v1530
        %v1535 = vmul.f32 %v1514, %v1531
        %v1536 = vmul.f32 %v1516, %v1532
        %v1537 = vpack.c.bf16 %v1534, %v1533
        %v1538 = vpack.c.bf16 %v1536, %v1535
        %1539 = vrot.lane.b32.xlu0 %v1419, 96
        %v1540 = vpop.permute.xlu0 %1539
        %1541 = vrot.lane.b32.xlu0 %v1420, 96
        %v1542 = vpop.permute.xlu0 %1541
        %v1546 = vsel %vm1333, %v1537, 0
        %v1549 = vsel %vm1333, %v1538, 0
        %1551 = vmatpush.bf16.msra.mxu0 0
        %1552 = vmatpush.bf16.msra.mxu0 0
        %1553 = vmatpush.bf16.msra.mxu0 0
        %1554 = vmatpush.bf16.msra.mxu0 0
        %1555 = vmatpush.bf16.msra.mxu0 0
        %1556 = vmatpush.bf16.msra.mxu0 0
        %1557 = vmatpush.bf16.msra.mxu0 %v1542
        %1558 = vmatpush.bf16.msra.mxu0 %v1540
        %1559 = vmatmul.bf16.gmra.mxu0 %v1546
        %v1560 = vpop.f32.mrf.mxu0
        %v1561 = vadd.f32 0.0, %v1560
        %v1562 = vpop.f32.mrf.mxu0
        %v1563 = vadd.f32 0.0, %v1562
        %1564 = vmatmul.bf16.gmra.mxu0 %v1549
        %v1565 = vpop.f32.mrf.mxu0
        %v1566 = vadd.f32 0.0, %v1565
        %v1567 = vpop.f32.mrf.mxu0
        %v1568 = vadd.f32 0.0, %v1567
        %1569 = vdwg.mxu0
        %v1570 = vpack.c.bf16 %v1563, %v1561
        %v1571 = vpack.c.bf16 %v1568, %v1566
        %s1572 = scalar_lea.vmem [#allocation15], 16
        %v1573 = vld [vmem:[%s1572] sm:$0xf]
        %v1574 = vld [vmem:[%s1572 + $0x4] sm:$0xf]
        %v1575 = vld [vmem:[%s1572 + $0x8] sm:$0xf]
        %v1576 = vld [vmem:[%s1572 + $0xc] sm:$0xf]
        %v1581 = vunpack.c.l.b16 %v1573
        %v1582 = vunpack.c.l.b16 %v1574
        %v1583 = vunpack.c.l.b16 %v1575
        %v1584 = vunpack.c.l.b16 %v1576
        %v1585 = vpack.c.b16 %v1582, %v1581
        %v1586 = vpack.c.b16 %v1584, %v1583
        %v1590 = vsel %vm1333, %v1570, 0
        %v1593 = vsel %vm1333, %v1571, 0
        %1595 = vmatpush.bf16.msra.mxu0 0
        %1596 = vmatpush.bf16.msra.mxu0 0
        %1597 = vmatpush.bf16.msra.mxu0 0
        %1598 = vmatpush.bf16.msra.mxu0 0
        %1599 = vmatpush.bf16.msra.mxu0 0
        %1600 = vmatpush.bf16.msra.mxu0 0
        %1601 = vmatpush.bf16.msra.mxu0 %v1586
        %1602 = vmatpush.bf16.msra.mxu0 %v1585
        %1603 = vmatmul.bf16.gmra.mxu0 %v1590
        %v1604 = vpop.f32.mrf.mxu0
        %v1605 = vadd.f32 0.0, %v1604
        %v1606 = vpop.f32.mrf.mxu0
        %v1607 = vadd.f32 0.0, %v1606
        %1608 = vmatmul.bf16.gmra.mxu0 %v1593
        %v1609 = vpop.f32.mrf.mxu0
        %v1610 = vadd.f32 0.0, %v1609
        %v1611 = vpop.f32.mrf.mxu0
        %v1612 = vadd.f32 0.0, %v1611
        %1613 = vdwg.mxu0
        %v1618 = vunpack.c.l.b16 %v1450
        %v1619 = vunpack.c.l.b16 %v1451
        %v1620 = vunpack.c.l.b16 %v1452
        %v1621 = vunpack.c.l.b16 %v1453
        %v1622 = vpack.c.b16 %v1619, %v1618
        %v1623 = vpack.c.b16 %v1621, %v1620
        %v1627 = vsel %vm1333, %v1448, 0
        %v1630 = vsel %vm1333, %v1449, 0
        %1632 = vmatpush.bf16.msra.mxu0 0
        %1633 = vmatpush.bf16.msra.mxu0 0
        %1634 = vmatpush.bf16.msra.mxu0 0
        %1635 = vmatpush.bf16.msra.mxu0 0
        %1636 = vmatpush.bf16.msra.mxu0 0
        %1637 = vmatpush.bf16.msra.mxu0 0
        %1638 = vmatpush.bf16.msra.mxu0 %v1623
        %1639 = vmatpush.bf16.msra.mxu0 %v1622
        %1640 = vmatmul.bf16.gmra.mxu0 %v1627
        %v1641 = vpop.f32.mrf.mxu0
        %v1642 = vadd.f32 %v1605, %v1641
        %v1643 = vpop.f32.mrf.mxu0
        %v1644 = vadd.f32 %v1607, %v1643
        %1645 = vmatmul.bf16.gmra.mxu0 %v1630
        %v1646 = vpop.f32.mrf.mxu0
        %v1647 = vadd.f32 %v1610, %v1646
        %v1648 = vpop.f32.mrf.mxu0
        %v1649 = vadd.f32 %v1612, %v1648
        %1650 = vdwg.mxu0
        %1651 = vrot.lane.b32.xlu0 %v1321, 64
        %v1652 = vpop.permute.xlu0 %1651
        %1653 = vrot.lane.b32.xlu0 %v1322, 64
        %v1654 = vpop.permute.xlu0 %1653
        %1655 = vrot.lane.b32.xlu0 %v1331, 64
        %v1656 = vpop.permute.xlu0 %1655
        %1657 = vrot.lane.b32.xlu0 %v1332, 64
        %v1658 = vpop.permute.xlu0 %1657
        %v1660 = vsel %vm1333, %v1652, 0
        %v1663 = vsel %vm1333, %v1654, 0
        %v1666 = vsel %vm1333, %v1656, 0
        %v1669 = vsel %vm1333, %v1658, 0
        %1671 = vmatpush.bf16.xpose.msra.mxu0 0
        %1672 = vmatpush.bf16.xpose.msra.mxu0 0
        %1673 = vmatpush.bf16.xpose.msra.mxu0 0
        %1674 = vmatpush.bf16.xpose.msra.mxu0 0
        %1675 = vmatpush.bf16.xpose.msra.mxu0 0
        %1676 = vmatpush.bf16.xpose.msra.mxu0 0
        %1677 = vmatpush.bf16.xpose.msra.mxu0 %v1669
        %1678 = vmatpush.bf16.xpose.msra.mxu0 %v1666
        %1679 = vmatmul.bf16.gmra.mxu0 %v1660
        %v1680 = vpop.f32.mrf.mxu0
        %v1681 = vadd.f32 %v1311, %v1680
        %v1682 = vpop.f32.mrf.mxu0
        %v1683 = vadd.f32 %v1311, %v1682
        %1684 = vmatmul.bf16.gmra.mxu0 %v1663
        %v1685 = vpop.f32.mrf.mxu0
        %v1686 = vadd.f32 %v1311, %v1685
        %v1687 = vpop.f32.mrf.mxu0
        %v1688 = vadd.f32 %v1311, %v1687
        %1689 = vdwg.mxu0
        %v1690 = vsel %vm1333, %v1681, -inf
        %1691 = vmax.xlane.f32.xlu0 %v1690
        %v1692 = vpop.xlane.xlu0 %1691
        %v1693 = vsel %vm1333, %v1683, -inf
        %1694 = vmax.xlane.f32.xlu0 %v1693
        %v1695 = vpop.xlane.xlu0 %1694
        %v1696 = vsel %vm1333, %v1686, -inf
        %1697 = vmax.xlane.f32.xlu0 %v1696
        %v1698 = vpop.xlane.xlu0 %1697
        %v1699 = vsel %vm1333, %v1688, -inf
        %1700 = vmax.xlane.f32.xlu0 %v1699
        %v1701 = vpop.xlane.xlu0 %1700
        %v1702 = vsub.f32 %v1681, %v1692
        %v1703 = vsub.f32 %v1683, %v1695
        %v1704 = vsub.f32 %v1686, %v1698
        %v1705 = vsub.f32 %v1688, %v1701
        %v1706 = vmul.f32 %v1702, 1.442695
        %v1707 = vpow.pop %v1706
        %v1708 = vmul.f32 %v1703, 1.442695
        %v1709 = vpow.pop %v1708
        %v1710 = vmul.f32 %v1704, 1.442695
        %v1711 = vpow.pop %v1710
        %v1712 = vmul.f32 %v1705, 1.442695
        %v1713 = vpow.pop %v1712
        %v1714 = vsel %vm1333, %v1707, 0.0
        %1715 = vadd.xlane.f32.xlu0 %v1714
        %v1716 = vpop.xlane.xlu0 %1715
        %v1717 = vsel %vm1333, %v1709, 0.0
        %1718 = vadd.xlane.f32.xlu0 %v1717
        %v1719 = vpop.xlane.xlu0 %1718
        %v1720 = vsel %vm1333, %v1711, 0.0
        %1721 = vadd.xlane.f32.xlu0 %v1720
        %v1722 = vpop.xlane.xlu0 %1721
        %v1723 = vsel %vm1333, %v1713, 0.0
        %1724 = vadd.xlane.f32.xlu0 %v1723
        %v1725 = vpop.xlane.xlu0 %1724
        %v1726 = vrcp.pop %v1716
        %v1727 = vrcp.pop %v1719
        %v1728 = vrcp.pop %v1722
        %v1729 = vrcp.pop %v1725
        %v1730 = vmul.f32 %v1707, %v1726
        %v1731 = vmul.f32 %v1709, %v1727
        %v1732 = vmul.f32 %v1711, %v1728
        %v1733 = vmul.f32 %v1713, %v1729
        %v1734 = vpack.c.bf16 %v1731, %v1730
        %v1735 = vpack.c.bf16 %v1733, %v1732
        %1736 = vrot.lane.b32.xlu0 %v1419, 64
        %v1737 = vpop.permute.xlu0 %1736
        %1738 = vrot.lane.b32.xlu0 %v1420, 64
        %v1739 = vpop.permute.xlu0 %1738
        %v1743 = vsel %vm1333, %v1734, 0
        %v1746 = vsel %vm1333, %v1735, 0
        %1748 = vmatpush.bf16.msra.mxu0 0
        %1749 = vmatpush.bf16.msra.mxu0 0
        %1750 = vmatpush.bf16.msra.mxu0 0
        %1751 = vmatpush.bf16.msra.mxu0 0
        %1752 = vmatpush.bf16.msra.mxu0 0
        %1753 = vmatpush.bf16.msra.mxu0 0
        %1754 = vmatpush.bf16.msra.mxu0 %v1739
        %1755 = vmatpush.bf16.msra.mxu0 %v1737
        %1756 = vmatmul.bf16.gmra.mxu0 %v1743
        %v1757 = vpop.f32.mrf.mxu0
        %v1758 = vadd.f32 0.0, %v1757
        %v1759 = vpop.f32.mrf.mxu0
        %v1760 = vadd.f32 0.0, %v1759
        %1761 = vmatmul.bf16.gmra.mxu0 %v1746
        %v1762 = vpop.f32.mrf.mxu0
        %v1763 = vadd.f32 0.0, %v1762
        %v1764 = vpop.f32.mrf.mxu0
        %v1765 = vadd.f32 0.0, %v1764
        %1766 = vdwg.mxu0
        %v1767 = vpack.c.bf16 %v1760, %v1758
        %v1768 = vpack.c.bf16 %v1765, %v1763
        %s1769 = scalar_lea.vmem [#allocation15], 32
        %v1770 = vld [vmem:[%s1769] sm:$0xf]
        %v1771 = vld [vmem:[%s1769 + $0x4] sm:$0xf]
        %v1772 = vld [vmem:[%s1769 + $0x8] sm:$0xf]
        %v1773 = vld [vmem:[%s1769 + $0xc] sm:$0xf]
        %v1778 = vunpack.c.l.b16 %v1770
        %v1779 = vunpack.c.l.b16 %v1771
        %v1780 = vunpack.c.l.b16 %v1772
        %v1781 = vunpack.c.l.b16 %v1773
        %v1782 = vpack.c.b16 %v1779, %v1778
        %v1783 = vpack.c.b16 %v1781, %v1780
        %v1787 = vsel %vm1333, %v1767, 0
        %v1790 = vsel %vm1333, %v1768, 0
        %1792 = vmatpush.bf16.msra.mxu0 0
        %1793 = vmatpush.bf16.msra.mxu0 0
        %1794 = vmatpush.bf16.msra.mxu0 0
        %1795 = vmatpush.bf16.msra.mxu0 0
        %1796 = vmatpush.bf16.msra.mxu0 0
        %1797 = vmatpush.bf16.msra.mxu0 0
        %1798 = vmatpush.bf16.msra.mxu0 %v1783
        %1799 = vmatpush.bf16.msra.mxu0 %v1782
        %1800 = vmatmul.bf16.gmra.mxu0 %v1787
        %v1801 = vpop.f32.mrf.mxu0
        %v1802 = vadd.f32 0.0, %v1801
        %v1803 = vpop.f32.mrf.mxu0
        %v1804 = vadd.f32 0.0, %v1803
        %1805 = vmatmul.bf16.gmra.mxu0 %v1790
        %v1806 = vpop.f32.mrf.mxu0
        %v1807 = vadd.f32 0.0, %v1806
        %v1808 = vpop.f32.mrf.mxu0
        %v1809 = vadd.f32 0.0, %v1808
        %1810 = vdwg.mxu0
        %v1811 = vadd.f32 %v1642, %v1802
        %v1812 = vadd.f32 %v1644, %v1804
        %v1813 = vadd.f32 %v1647, %v1807
        %v1814 = vadd.f32 %v1649, %v1809
        %1815 = vrot.lane.b32.xlu0 %v1321, 32
        %v1816 = vpop.permute.xlu0 %1815
        %1817 = vrot.lane.b32.xlu0 %v1322, 32
        %v1818 = vpop.permute.xlu0 %1817
        %1819 = vrot.lane.b32.xlu0 %v1331, 32
        %v1820 = vpop.permute.xlu0 %1819
        %1821 = vrot.lane.b32.xlu0 %v1332, 32
        %v1822 = vpop.permute.xlu0 %1821
        %v1824 = vsel %vm1333, %v1816, 0
        %v1827 = vsel %vm1333, %v1818, 0
        %v1830 = vsel %vm1333, %v1820, 0
        %v1833 = vsel %vm1333, %v1822, 0
        %1835 = vmatpush.bf16.xpose.msra.mxu0 0
        %1836 = vmatpush.bf16.xpose.msra.mxu0 0
        %1837 = vmatpush.bf16.xpose.msra.mxu0 0
        %1838 = vmatpush.bf16.xpose.msra.mxu0 0
        %1839 = vmatpush.bf16.xpose.msra.mxu0 0
        %1840 = vmatpush.bf16.xpose.msra.mxu0 0
        %1841 = vmatpush.bf16.xpose.msra.mxu0 %v1833
        %1842 = vmatpush.bf16.xpose.msra.mxu0 %v1830
        %1843 = vmatmul.bf16.gmra.mxu0 %v1824
        %v1844 = vpop.f32.mrf.mxu0
        %v1845 = vadd.f32 %v1311, %v1844
        %v1846 = vpop.f32.mrf.mxu0
        %v1847 = vadd.f32 %v1311, %v1846
        %1848 = vmatmul.bf16.gmra.mxu0 %v1827
        %v1849 = vpop.f32.mrf.mxu0
        %v1850 = vadd.f32 %v1311, %v1849
        %v1851 = vpop.f32.mrf.mxu0
        %v1852 = vadd.f32 %v1311, %v1851
        %1853 = vdwg.mxu0
        %v1854 = vsel %vm1333, %v1845, -inf
        %1855 = vmax.xlane.f32.xlu0 %v1854
        %v1856 = vpop.xlane.xlu0 %1855
        %v1857 = vsel %vm1333, %v1847, -inf
        %1858 = vmax.xlane.f32.xlu0 %v1857
        %v1859 = vpop.xlane.xlu0 %1858
        %v1860 = vsel %vm1333, %v1850, -inf
        %1861 = vmax.xlane.f32.xlu0 %v1860
        %v1862 = vpop.xlane.xlu0 %1861
        %v1863 = vsel %vm1333, %v1852, -inf
        %1864 = vmax.xlane.f32.xlu0 %v1863
        %v1865 = vpop.xlane.xlu0 %1864
        %v1866 = vsub.f32 %v1845, %v1856
        %v1867 = vsub.f32 %v1847, %v1859
        %v1868 = vsub.f32 %v1850, %v1862
        %v1869 = vsub.f32 %v1852, %v1865
        %v1870 = vmul.f32 %v1866, 1.442695
        %v1871 = vpow.pop %v1870
        %v1872 = vmul.f32 %v1867, 1.442695
        %v1873 = vpow.pop %v1872
        %v1874 = vmul.f32 %v1868, 1.442695
        %v1875 = vpow.pop %v1874
        %v1876 = vmul.f32 %v1869, 1.442695
        %v1877 = vpow.pop %v1876
        %v1878 = vsel %vm1333, %v1871, 0.0
        %1879 = vadd.xlane.f32.xlu0 %v1878
        %v1880 = vpop.xlane.xlu0 %1879
        %v1881 = vsel %vm1333, %v1873, 0.0
        %1882 = vadd.xlane.f32.xlu0 %v1881
        %v1883 = vpop.xlane.xlu0 %1882
        %v1884 = vsel %vm1333, %v1875, 0.0
        %1885 = vadd.xlane.f32.xlu0 %v1884
        %v1886 = vpop.xlane.xlu0 %1885
        %v1887 = vsel %vm1333, %v1877, 0.0
        %1888 = vadd.xlane.f32.xlu0 %v1887
        %v1889 = vpop.xlane.xlu0 %1888
        %v1890 = vrcp.pop %v1880
        %v1891 = vrcp.pop %v1883
        %v1892 = vrcp.pop %v1886
        %v1893 = vrcp.pop %v1889
        %v1894 = vmul.f32 %v1871, %v1890
        %v1895 = vmul.f32 %v1873, %v1891
        %v1896 = vmul.f32 %v1875, %v1892
        %v1897 = vmul.f32 %v1877, %v1893
        %v1898 = vpack.c.bf16 %v1895, %v1894
        %v1899 = vpack.c.bf16 %v1897, %v1896
        %1900 = vrot.lane.b32.xlu0 %v1419, 32
        %v1901 = vpop.permute.xlu0 %1900
        %1902 = vrot.lane.b32.xlu0 %v1420, 32
        %v1903 = vpop.permute.xlu0 %1902
        %v1907 = vsel %vm1333, %v1898, 0
        %v1910 = vsel %vm1333, %v1899, 0
        %1912 = vmatpush.bf16.msra.mxu0 0
        %1913 = vmatpush.bf16.msra.mxu0 0
        %1914 = vmatpush.bf16.msra.mxu0 0
        %1915 = vmatpush.bf16.msra.mxu0 0
        %1916 = vmatpush.bf16.msra.mxu0 0
        %1917 = vmatpush.bf16.msra.mxu0 0
        %1918 = vmatpush.bf16.msra.mxu0 %v1903
        %1919 = vmatpush.bf16.msra.mxu0 %v1901
        %1920 = vmatmul.bf16.gmra.mxu0 %v1907
        %v1921 = vpop.f32.mrf.mxu0
        %v1922 = vadd.f32 0.0, %v1921
        %v1923 = vpop.f32.mrf.mxu0
        %v1924 = vadd.f32 0.0, %v1923
        %1925 = vmatmul.bf16.gmra.mxu0 %v1910
        %v1926 = vpop.f32.mrf.mxu0
        %v1927 = vadd.f32 0.0, %v1926
        %v1928 = vpop.f32.mrf.mxu0
        %v1929 = vadd.f32 0.0, %v1928
        %1930 = vdwg.mxu0
        %v1931 = vpack.c.bf16 %v1924, %v1922
        %v1932 = vpack.c.bf16 %v1929, %v1927
        %s1933 = scalar_lea.vmem [#allocation15], 48
        %v1934 = vld [vmem:[%s1933] sm:$0xf]
        %v1935 = vld [vmem:[%s1933 + $0x4] sm:$0xf]
        %v1936 = vld [vmem:[%s1933 + $0x8] sm:$0xf]
        %v1937 = vld [vmem:[%s1933 + $0xc] sm:$0xf]
        %v1942 = vunpack.c.l.b16 %v1934
        %v1943 = vunpack.c.l.b16 %v1935
        %v1944 = vunpack.c.l.b16 %v1936
        %v1945 = vunpack.c.l.b16 %v1937
        %v1946 = vpack.c.b16 %v1943, %v1942
        %v1947 = vpack.c.b16 %v1945, %v1944
        %v1951 = vsel %vm1333, %v1931, 0
        %v1954 = vsel %vm1333, %v1932, 0
        %1956 = vmatpush.bf16.msra.mxu0 0
        %1957 = vmatpush.bf16.msra.mxu0 0
        %1958 = vmatpush.bf16.msra.mxu0 0
        %1959 = vmatpush.bf16.msra.mxu0 0
        %1960 = vmatpush.bf16.msra.mxu0 0
        %1961 = vmatpush.bf16.msra.mxu0 0
        %1962 = vmatpush.bf16.msra.mxu0 %v1947
        %1963 = vmatpush.bf16.msra.mxu0 %v1946
        %1964 = vmatmul.bf16.gmra.mxu0 %v1951
        %v1965 = vpop.f32.mrf.mxu0
        %v1966 = vadd.f32 0.0, %v1965
        %v1967 = vpop.f32.mrf.mxu0
        %v1968 = vadd.f32 0.0, %v1967
        %1969 = vmatmul.bf16.gmra.mxu0 %v1954
        %v1970 = vpop.f32.mrf.mxu0
        %v1971 = vadd.f32 0.0, %v1970
        %v1972 = vpop.f32.mrf.mxu0
        %v1973 = vadd.f32 0.0, %v1972
        %1974 = vdwg.mxu0
        %v1975 = vadd.f32 %v1811, %v1966
        %v1976 = vadd.f32 %v1812, %v1968
        %v1977 = vadd.f32 %v1813, %v1971
        %v1978 = vadd.f32 %v1814, %v1973
        %v1979 = vperm.slane %v1200, 7
        %v1980 = vadd.f32 %v1975, %v1979
        %v1981 = vadd.f32 %v1976, %v1979
        %v1982 = vadd.f32 %v1977, %v1979
        %v1983 = vadd.f32 %v1978, %v1979
        %v1984 = vadd.f32 %v1208, %v1980
        %v1985 = vadd.f32 %v1209, %v1981
        %v1986 = vadd.f32 %v1210, %v1982
        %v1987 = vadd.f32 %v1211, %v1983
        %1988 = vadd.xlane.f32.xlu0 %v1984
        %v1989 = vpop.xlane.xlu0 %1988
        %1990 = vadd.xlane.f32.xlu0 %v1985
        %v1991 = vpop.xlane.xlu0 %1990
        %1992 = vadd.xlane.f32.xlu0 %v1986
        %v1993 = vpop.xlane.xlu0 %1992
        %1994 = vadd.xlane.f32.xlu0 %v1987
        %v1995 = vpop.xlane.xlu0 %1994
        %v1996 = vrcp.pop 128.0
        %v1997 = vmul.f32 128.0, %v1996
        %v1998 = vsub.f32 1.0, %v1997
        %v1999 = vmul.f32 %v1996, %v1998
        %v2000 = vadd.f32 %v1996, %v1999
        %vm2001 = vweird.f32 %v1996
        %v2002 = vsel %vm2001, %v1996, %v2000
        %v2003 = vmul.f32 %v1989, %v2002
        %v2004 = vmul.f32 %v1991, %v2002
        %v2005 = vmul.f32 %v1993, %v2002
        %v2006 = vmul.f32 %v1995, %v2002
        %v2007 = vsub.f32 %v1984, %v2003
        %v2008 = vsub.f32 %v1985, %v2004
        %v2009 = vsub.f32 %v1986, %v2005
        %v2010 = vsub.f32 %v1987, %v2006
        %v2011 = vmul.f32 %v2007, %v2007
        %v2012 = vmul.f32 %v2008, %v2008
        %v2013 = vmul.f32 %v2009, %v2009
        %v2014 = vmul.f32 %v2010, %v2010
        %2015 = vadd.xlane.f32.xlu0 %v2011
        %v2016 = vpop.xlane.xlu0 %2015
        %2017 = vadd.xlane.f32.xlu0 %v2012
        %v2018 = vpop.xlane.xlu0 %2017
        %2019 = vadd.xlane.f32.xlu0 %v2013
        %v2020 = vpop.xlane.xlu0 %2019
        %2021 = vadd.xlane.f32.xlu0 %v2014
        %v2022 = vpop.xlane.xlu0 %2021
        %v2023 = vmul.f32 %v2016, 0.007874016
        %v2024 = vmul.f32 %v2018, 0.007874016
        %v2025 = vmul.f32 %v2020, 0.007874016
        %v2026 = vmul.f32 %v2022, 0.007874016
        %v2027 = vrsqrt.pop %v2023
        %v2028 = vmul.f32 %v2027, %v2023
        %v2029 = vmul.f32 %v2028, %v2027
        %v2030 = vmul.f32 0.5, %v2029
        %v2031 = vsub.f32 1.5, %v2030
        %v2032 = vmul.f32 %v2027, %v2031
        %v2033 = vmul.f32 %v2023, %v2032
        %vm2034 = vcmp.eq.f32.partialorder %v2023, inf
        %v2035 = vsel %vm2034, %v2023, %v2033
        %vm2036 = vcmp.eq.f32.partialorder %v2023, 0.0
        %v2037 = vand.u32 %v2023, 2147483648
        %v2038 = vsel %vm2036, %v2037, %v2035
        %v2039 = vrsqrt.pop %v2024
        %v2040 = vmul.f32 %v2039, %v2024
        %v2041 = vmul.f32 %v2040, %v2039
        %v2042 = vmul.f32 0.5, %v2041
        %v2043 = vsub.f32 1.5, %v2042
        %v2044 = vmul.f32 %v2039, %v2043
        %v2045 = vmul.f32 %v2024, %v2044
        %vm2046 = vcmp.eq.f32.partialorder %v2024, inf
        %v2047 = vsel %vm2046, %v2024, %v2045
        %vm2048 = vcmp.eq.f32.partialorder %v2024, 0.0
        %v2049 = vand.u32 %v2024, 2147483648
        %v2050 = vsel %vm2048, %v2049, %v2047
        %v2051 = vrsqrt.pop %v2025
        %v2052 = vmul.f32 %v2051, %v2025
        %v2053 = vmul.f32 %v2052, %v2051
        %v2054 = vmul.f32 0.5, %v2053
        %v2055 = vsub.f32 1.5, %v2054
        %v2056 = vmul.f32 %v2051, %v2055
        %v2057 = vmul.f32 %v2025, %v2056
        %vm2058 = vcmp.eq.f32.partialorder %v2025, inf
        %v2059 = vsel %vm2058, %v2025, %v2057
        %vm2060 = vcmp.eq.f32.partialorder %v2025, 0.0
        %v2061 = vand.u32 %v2025, 2147483648
        %v2062 = vsel %vm2060, %v2061, %v2059
        %v2063 = vrsqrt.pop %v2026
        %v2064 = vmul.f32 %v2063, %v2026
        %v2065 = vmul.f32 %v2064, %v2063
        %v2066 = vmul.f32 0.5, %v2065
        %v2067 = vsub.f32 1.5, %v2066
        %v2068 = vmul.f32 %v2063, %v2067
        %v2069 = vmul.f32 %v2026, %v2068
        %vm2070 = vcmp.eq.f32.partialorder %v2026, inf
        %v2071 = vsel %vm2070, %v2026, %v2069
        %vm2072 = vcmp.eq.f32.partialorder %v2026, 0.0
        %v2073 = vand.u32 %v2026, 2147483648
        %v2074 = vsel %vm2072, %v2073, %v2071
        %v2075 = vadd.f32 %v2038, 1e-06
        %v2076 = vadd.f32 %v2050, 1e-06
        %v2077 = vadd.f32 %v2062, 1e-06
        %v2078 = vadd.f32 %v2074, 1e-06
        %v2079 = vrcp.pop %v2075
        %v2080 = vmul.f32 %v2075, %v2079
        %v2081 = vsub.f32 1.0, %v2080
        %v2082 = vmul.f32 %v2079, %v2081
        %v2083 = vadd.f32 %v2079, %v2082
        %vm2084 = vweird.f32 %v2075
        %vm2085 = vweird.f32 %v2079
        %vm2086 = vmor %vm2084, %vm2085
        %v2087 = vsel %vm2086, %v2079, %v2083
        %v2088 = vand.u32 2147483647, %v2075
        %vm2089 = vcmp.eq.f32.partialorder %v2088, 8.507059e+37
        %v2090 = vand.u32 %v2075, 2147483648
        %v2091 = vor.u32 1.1754944e-38, %v2090
        %v2092 = vsel %vm2089, %v2091, %v2087
        %v2093 = vrcp.pop %v2076
        %v2094 = vmul.f32 %v2076, %v2093
        %v2095 = vsub.f32 1.0, %v2094
        %v2096 = vmul.f32 %v2093, %v2095
        %v2097 = vadd.f32 %v2093, %v2096
        %vm2098 = vweird.f32 %v2076
        %vm2099 = vweird.f32 %v2093
        %vm2100 = vmor %vm2098, %vm2099
        %v2101 = vsel %vm2100, %v2093, %v2097
        %v2102 = vand.u32 2147483647, %v2076
        %vm2103 = vcmp.eq.f32.partialorder %v2102, 8.507059e+37
        %v2104 = vand.u32 %v2076, 2147483648
        %v2105 = vor.u32 1.1754944e-38, %v2104
        %v2106 = vsel %vm2103, %v2105, %v2101
        %v2107 = vrcp.pop %v2077
        %v2108 = vmul.f32 %v2077, %v2107
        %v2109 = vsub.f32 1.0, %v2108
        %v2110 = vmul.f32 %v2107, %v2109
        %v2111 = vadd.f32 %v2107, %v2110
        %vm2112 = vweird.f32 %v2077
        %vm2113 = vweird.f32 %v2107
        %vm2114 = vmor %vm2112, %vm2113
        %v2115 = vsel %vm2114, %v2107, %v2111
        %v2116 = vand.u32 2147483647, %v2077
        %vm2117 = vcmp.eq.f32.partialorder %v2116, 8.507059e+37
        %v2118 = vand.u32 %v2077, 2147483648
        %v2119 = vor.u32 1.1754944e-38, %v2118
        %v2120 = vsel %vm2117, %v2119, %v2115
        %v2121 = vrcp.pop %v2078
        %v2122 = vmul.f32 %v2078, %v2121
        %v2123 = vsub.f32 1.0, %v2122
        %v2124 = vmul.f32 %v2121, %v2123
        %v2125 = vadd.f32 %v2121, %v2124
        %vm2126 = vweird.f32 %v2078
        %vm2127 = vweird.f32 %v2121
        %vm2128 = vmor %vm2126, %vm2127
        %v2129 = vsel %vm2128, %v2121, %v2125
        %v2130 = vand.u32 2147483647, %v2078
        %vm2131 = vcmp.eq.f32.partialorder %v2130, 8.507059e+37
        %v2132 = vand.u32 %v2078, 2147483648
        %v2133 = vor.u32 1.1754944e-38, %v2132
        %v2134 = vsel %vm2131, %v2133, %v2129
        %v2135 = vperm.slane %v1200, 0
        %v2136 = vmul.f32 %v2135, %v2007
        %v2137 = vmul.f32 %v2135, %v2008
        %v2138 = vmul.f32 %v2135, %v2009
        %v2139 = vmul.f32 %v2135, %v2010
        %v2140 = vmul.f32 %v2136, %v2092
        %v2141 = vmul.f32 %v2137, %v2106
        %v2142 = vmul.f32 %v2138, %v2120
        %v2143 = vmul.f32 %v2139, %v2134
        %v2144 = vperm.slane %v1200, 1
        %v2145 = vadd.f32 %v2140, %v2144
        %v2146 = vadd.f32 %v2141, %v2144
        %v2147 = vadd.f32 %v2142, %v2144
        %v2148 = vadd.f32 %v2143, %v2144
        %v2149 = vpack.c.bf16 %v2146, %v2145
        %v2150 = vpack.c.bf16 %v2148, %v2147
        %v2151 = vld [vmem:[#allocation16] sm:$0xf]
        %v2152 = vld [vmem:[#allocation16 + $0x4] sm:$0xf]
        %v2153 = vld [vmem:[#allocation16 + $0x8] sm:$0xf]
        %v2154 = vld [vmem:[#allocation16 + $0xc] sm:$0xf]
        %v2155 = vld [vmem:[#allocation16 + $0x10] sm:$0xf]
        %v2156 = vld [vmem:[#allocation16 + $0x14] sm:$0xf]
        %v2157 = vld [vmem:[#allocation16 + $0x18] sm:$0xf]
        %v2158 = vld [vmem:[#allocation16 + $0x1c] sm:$0xf]
        %v2159 = vld [vmem:[#allocation16 + $0x20] sm:$0xf]
        %v2160 = vld [vmem:[#allocation16 + $0x24] sm:$0xf]
        %v2161 = vld [vmem:[#allocation16 + $0x28] sm:$0xf]
        %v2162 = vld [vmem:[#allocation16 + $0x2c] sm:$0xf]
        %v2163 = vld [vmem:[#allocation16 + $0x30] sm:$0xf]
        %v2164 = vld [vmem:[#allocation16 + $0x34] sm:$0xf]
        %v2165 = vld [vmem:[#allocation16 + $0x38] sm:$0xf]
        %v2166 = vld [vmem:[#allocation16 + $0x3c] sm:$0xf]
        %v2167 = vperm.slane %v1201, 0
        %v2184 = vunpack.c.l.b16 %v2151
        %v2185 = vunpack.c.l.b16 %v2152
        %v2186 = vunpack.c.l.b16 %v2153
        %v2187 = vunpack.c.l.b16 %v2154
        %v2188 = vunpack.c.l.b16 %v2155
        %v2189 = vunpack.c.l.b16 %v2156
        %v2190 = vunpack.c.l.b16 %v2157
        %v2191 = vunpack.c.l.b16 %v2158
        %v2192 = vunpack.c.l.b16 %v2159
        %v2193 = vunpack.c.l.b16 %v2160
        %v2194 = vunpack.c.l.b16 %v2161
        %v2195 = vunpack.c.l.b16 %v2162
        %v2196 = vunpack.c.l.b16 %v2163
        %v2197 = vunpack.c.l.b16 %v2164
        %v2198 = vunpack.c.l.b16 %v2165
        %v2199 = vunpack.c.l.b16 %v2166
        %v2200 = vpack.c.b16 %v2185, %v2184
        %v2201 = vpack.c.b16 %v2187, %v2186
        %v2202 = vpack.c.b16 %v2189, %v2188
        %v2203 = vpack.c.b16 %v2191, %v2190
        %v2204 = vpack.c.b16 %v2193, %v2192
        %v2205 = vpack.c.b16 %v2195, %v2194
        %v2206 = vpack.c.b16 %v2197, %v2196
        %v2207 = vpack.c.b16 %v2199, %v2198
        %2216 = vmatpush.bf16.msra.mxu0 %v2207
        %2217 = vmatpush.bf16.msra.mxu0 %v2206
        %2218 = vmatpush.bf16.msra.mxu0 %v2205
        %2219 = vmatpush.bf16.msra.mxu0 %v2204
        %2220 = vmatpush.bf16.msra.mxu0 %v2203
        %2221 = vmatpush.bf16.msra.mxu0 %v2202
        %2222 = vmatpush.bf16.msra.mxu0 %v2201
        %2223 = vmatpush.bf16.msra.mxu0 %v2200
        %2224 = vmatmul.bf16.gmra.mxu0 %v2149
        %v2225 = vpop.f32.mrf.mxu0
        %v2226 = vadd.f32 %v2167, %v2225
        %v2227 = vpop.f32.mrf.mxu0
        %v2228 = vadd.f32 %v2167, %v2227
        %2229 = vmatmul.bf16.gmra.mxu0 %v2150
        %v2230 = vpop.f32.mrf.mxu0
        %v2231 = vadd.f32 %v2167, %v2230
        %v2232 = vpop.f32.mrf.mxu0
        %v2233 = vadd.f32 %v2167, %v2232
        %2234 = vdwg.mxu0
        %v2235 = vpack.c.bf16 %v2226, %v2226
        %v2236 = vpack.c.bf16 %v2228, %v2228
        %v2237 = vpack.c.bf16 %v2231, %v2231
        %v2238 = vpack.c.bf16 %v2233, %v2233
        %v2239 = vld [vmem:[#allocation3] sm:$0xf]
        %v2240 = vld [vmem:[#allocation3 + $0x8] sm:$0xf]
        %v2241 = vld [vmem:[#allocation3 + $0x10] sm:$0xf]
        %v2242 = vld [vmem:[#allocation3 + $0x18] sm:$0xf]
        %v2243 = vld [vmem:[#allocation3 + $0x4] sm:$0xf]
        %v2244 = vld [vmem:[#allocation3 + $0xc] sm:$0xf]
        %v2245 = vld [vmem:[#allocation3 + $0x14] sm:$0xf]
        %v2246 = vld [vmem:[#allocation3 + $0x1c] sm:$0xf]
        %v2248 = vperm.slane %v1207, 0
        %v2254 = vunpack.c.l.b16 %v2235
        %v2255 = vunpack.c.l.b16 %v2236
        %v2256 = vunpack.c.l.b16 %v2237
        %v2257 = vunpack.c.l.b16 %v2238
        %v2258 = vpack.c.b16 %v2255, %v2254
        %v2259 = vpack.c.b16 %v2257, %v2256
        %v2264 = vunpack.c.l.b16 %v2239
        %v2265 = vunpack.c.l.b16 %v2240
        %v2266 = vunpack.c.l.b16 %v2241
        %v2267 = vunpack.c.l.b16 %v2242
        %v2268 = vpack.c.b16 %v2265, %v2264
        %v2269 = vpack.c.b16 %v2267, %v2266
        %vm2270 = vcmask 523264
        %v2272 = vsel %vm2270, %v2258, 0
        %v2275 = vsel %vm2270, %v2259, 0
        %v2278 = vsel %vm2270, %v2268, 0
        %v2281 = vsel %vm2270, %v2269, 0
        %2283 = vmatpush.bf16.xpose.msra.mxu0 0
        %2284 = vmatpush.bf16.xpose.msra.mxu0 0
        %2285 = vmatpush.bf16.xpose.msra.mxu0 0
        %2286 = vmatpush.bf16.xpose.msra.mxu0 0
        %2287 = vmatpush.bf16.xpose.msra.mxu0 0
        %2288 = vmatpush.bf16.xpose.msra.mxu0 0
        %2289 = vmatpush.bf16.xpose.msra.mxu0 %v2281
        %2290 = vmatpush.bf16.xpose.msra.mxu0 %v2278
        %2291 = vmatmul.bf16.gmra.mxu0 %v2272
        %v2292 = vpop.f32.mrf.mxu0
        %v2293 = vadd.f32 %v2248, %v2292
        %v2294 = vpop.f32.mrf.mxu0
        %v2295 = vadd.f32 %v2248, %v2294
        %2296 = vmatmul.bf16.gmra.mxu0 %v2275
        %v2297 = vpop.f32.mrf.mxu0
        %v2298 = vadd.f32 %v2248, %v2297
        %v2299 = vpop.f32.mrf.mxu0
        %v2300 = vadd.f32 %v2248, %v2299
        %2301 = vdwg.mxu0
        %v2302 = vsel %vm1333, %v2293, -inf
        %2303 = vmax.xlane.f32.xlu0 %v2302
        %v2304 = vpop.xlane.xlu0 %2303
        %v2305 = vsel %vm1333, %v2295, -inf
        %2306 = vmax.xlane.f32.xlu0 %v2305
        %v2307 = vpop.xlane.xlu0 %2306
        %v2308 = vsel %vm1333, %v2298, -inf
        %2309 = vmax.xlane.f32.xlu0 %v2308
        %v2310 = vpop.xlane.xlu0 %2309
        %v2311 = vsel %vm1333, %v2300, -inf
        %2312 = vmax.xlane.f32.xlu0 %v2311
        %v2313 = vpop.xlane.xlu0 %2312
        %v2314 = vsub.f32 %v2293, %v2304
        %v2315 = vsub.f32 %v2295, %v2307
        %v2316 = vsub.f32 %v2298, %v2310
        %v2317 = vsub.f32 %v2300, %v2313
        %v2318 = vmul.f32 %v2314, 1.442695
        %v2319 = vpow.pop %v2318
        %v2320 = vmul.f32 %v2315, 1.442695
        %v2321 = vpow.pop %v2320
        %v2322 = vmul.f32 %v2316, 1.442695
        %v2323 = vpow.pop %v2322
        %v2324 = vmul.f32 %v2317, 1.442695
        %v2325 = vpow.pop %v2324
        %v2326 = vsel %vm1333, %v2319, 0.0
        %2327 = vadd.xlane.f32.xlu0 %v2326
        %v2328 = vpop.xlane.xlu0 %2327
        %v2329 = vsel %vm1333, %v2321, 0.0
        %2330 = vadd.xlane.f32.xlu0 %v2329
        %v2331 = vpop.xlane.xlu0 %2330
        %v2332 = vsel %vm1333, %v2323, 0.0
        %2333 = vadd.xlane.f32.xlu0 %v2332
        %v2334 = vpop.xlane.xlu0 %2333
        %v2335 = vsel %vm1333, %v2325, 0.0
        %2336 = vadd.xlane.f32.xlu0 %v2335
        %v2337 = vpop.xlane.xlu0 %2336
        %v2338 = vrcp.pop %v2328
        %v2339 = vrcp.pop %v2331
        %v2340 = vrcp.pop %v2334
        %v2341 = vrcp.pop %v2337
        %v2342 = vmul.f32 %v2319, %v2338
        %v2343 = vmul.f32 %v2321, %v2339
        %v2344 = vmul.f32 %v2323, %v2340
        %v2345 = vmul.f32 %v2325, %v2341
        %v2346 = vpack.c.bf16 %v2343, %v2342
        %v2347 = vpack.c.bf16 %v2345, %v2344
        %v2352 = vunpack.c.l.b16 %v2243
        %v2353 = vunpack.c.l.b16 %v2244
        %v2354 = vunpack.c.l.b16 %v2245
        %v2355 = vunpack.c.l.b16 %v2246
        %v2356 = vpack.c.b16 %v2353, %v2352
        %v2357 = vpack.c.b16 %v2355, %v2354
        %v2361 = vsel %vm1333, %v2346, 0
        %v2364 = vsel %vm1333, %v2347, 0
        %2366 = vmatpush.bf16.msra.mxu0 0
        %2367 = vmatpush.bf16.msra.mxu0 0
        %2368 = vmatpush.bf16.msra.mxu0 0
        %2369 = vmatpush.bf16.msra.mxu0 0
        %2370 = vmatpush.bf16.msra.mxu0 0
        %2371 = vmatpush.bf16.msra.mxu0 0
        %2372 = vmatpush.bf16.msra.mxu0 %v2357
        %2373 = vmatpush.bf16.msra.mxu0 %v2356
        %2374 = vmatmul.bf16.gmra.mxu0 %v2361
        %v2375 = vpop.f32.mrf.mxu0
        %v2376 = vadd.f32 0.0, %v2375
        %v2377 = vpop.f32.mrf.mxu0
        %v2378 = vadd.f32 0.0, %v2377
        %2379 = vmatmul.bf16.gmra.mxu0 %v2364
        %v2380 = vpop.f32.mrf.mxu0
        %v2381 = vadd.f32 0.0, %v2380
        %v2382 = vpop.f32.mrf.mxu0
        %v2383 = vadd.f32 0.0, %v2382
        %2384 = vdwg.mxu0
        %v2385 = vpack.c.bf16 %v2378, %v2376
        %v2386 = vpack.c.bf16 %v2383, %v2381
        %v2387 = vld [vmem:[#allocation19] sm:$0xf]
        %v2388 = vld [vmem:[#allocation19 + $0x4] sm:$0xf]
        %v2389 = vld [vmem:[#allocation19 + $0x8] sm:$0xf]
        %v2390 = vld [vmem:[#allocation19 + $0xc] sm:$0xf]
        %v2391 = vld [vmem:[#allocation19 + $0x10] sm:$0xf]
        %v2392 = vld [vmem:[#allocation19 + $0x14] sm:$0xf]
        %v2393 = vld [vmem:[#allocation19 + $0x18] sm:$0xf]
        %v2394 = vld [vmem:[#allocation19 + $0x1c] sm:$0xf]
        %2395 = vrot.lane.b32.xlu0 %v2258, 64
        %v2396 = vpop.permute.xlu0 %2395
        %2397 = vrot.lane.b32.xlu0 %v2259, 64
        %v2398 = vpop.permute.xlu0 %2397
        %2399 = vrot.lane.b32.xlu0 %v2268, 64
        %v2400 = vpop.permute.xlu0 %2399
        %2401 = vrot.lane.b32.xlu0 %v2269, 64
        %v2402 = vpop.permute.xlu0 %2401
        %v2404 = vsel %vm2270, %v2396, 0
        %v2407 = vsel %vm2270, %v2398, 0
        %v2410 = vsel %vm2270, %v2400, 0
        %v2413 = vsel %vm2270, %v2402, 0
        %2415 = vmatpush.bf16.xpose.msra.mxu0 0
        %2416 = vmatpush.bf16.xpose.msra.mxu0 0
        %2417 = vmatpush.bf16.xpose.msra.mxu0 0
        %2418 = vmatpush.bf16.xpose.msra.mxu0 0
        %2419 = vmatpush.bf16.xpose.msra.mxu0 0
        %2420 = vmatpush.bf16.xpose.msra.mxu0 0
        %2421 = vmatpush.bf16.xpose.msra.mxu0 %v2413
        %2422 = vmatpush.bf16.xpose.msra.mxu0 %v2410
        %2423 = vmatmul.bf16.gmra.mxu0 %v2404
        %v2424 = vpop.f32.mrf.mxu0
        %v2425 = vadd.f32 %v2248, %v2424
        %v2426 = vpop.f32.mrf.mxu0
        %v2427 = vadd.f32 %v2248, %v2426
        %2428 = vmatmul.bf16.gmra.mxu0 %v2407
        %v2429 = vpop.f32.mrf.mxu0
        %v2430 = vadd.f32 %v2248, %v2429
        %v2431 = vpop.f32.mrf.mxu0
        %v2432 = vadd.f32 %v2248, %v2431
        %2433 = vdwg.mxu0
        %v2434 = vsel %vm1333, %v2425, -inf
        %2435 = vmax.xlane.f32.xlu0 %v2434
        %v2436 = vpop.xlane.xlu0 %2435
        %v2437 = vsel %vm1333, %v2427, -inf
        %2438 = vmax.xlane.f32.xlu0 %v2437
        %v2439 = vpop.xlane.xlu0 %2438
        %v2440 = vsel %vm1333, %v2430, -inf
        %2441 = vmax.xlane.f32.xlu0 %v2440
        %v2442 = vpop.xlane.xlu0 %2441
        %v2443 = vsel %vm1333, %v2432, -inf
        %2444 = vmax.xlane.f32.xlu0 %v2443
        %v2445 = vpop.xlane.xlu0 %2444
        %v2446 = vsub.f32 %v2425, %v2436
        %v2447 = vsub.f32 %v2427, %v2439
        %v2448 = vsub.f32 %v2430, %v2442
        %v2449 = vsub.f32 %v2432, %v2445
        %v2450 = vmul.f32 %v2446, 1.442695
        %v2451 = vpow.pop %v2450
        %v2452 = vmul.f32 %v2447, 1.442695
        %v2453 = vpow.pop %v2452
        %v2454 = vmul.f32 %v2448, 1.442695
        %v2455 = vpow.pop %v2454
        %v2456 = vmul.f32 %v2449, 1.442695
        %v2457 = vpow.pop %v2456
        %v2458 = vsel %vm1333, %v2451, 0.0
        %2459 = vadd.xlane.f32.xlu0 %v2458
        %v2460 = vpop.xlane.xlu0 %2459
        %v2461 = vsel %vm1333, %v2453, 0.0
        %2462 = vadd.xlane.f32.xlu0 %v2461
        %v2463 = vpop.xlane.xlu0 %2462
        %v2464 = vsel %vm1333, %v2455, 0.0
        %2465 = vadd.xlane.f32.xlu0 %v2464
        %v2466 = vpop.xlane.xlu0 %2465
        %v2467 = vsel %vm1333, %v2457, 0.0
        %2468 = vadd.xlane.f32.xlu0 %v2467
        %v2469 = vpop.xlane.xlu0 %2468
        %v2470 = vrcp.pop %v2460
        %v2471 = vrcp.pop %v2463
        %v2472 = vrcp.pop %v2466
        %v2473 = vrcp.pop %v2469
        %v2474 = vmul.f32 %v2451, %v2470
        %v2475 = vmul.f32 %v2453, %v2471
        %v2476 = vmul.f32 %v2455, %v2472
        %v2477 = vmul.f32 %v2457, %v2473
        %v2478 = vpack.c.bf16 %v2475, %v2474
        %v2479 = vpack.c.bf16 %v2477, %v2476
        %2480 = vrot.lane.b32.xlu0 %v2356, 64
        %v2481 = vpop.permute.xlu0 %2480
        %2482 = vrot.lane.b32.xlu0 %v2357, 64
        %v2483 = vpop.permute.xlu0 %2482
        %v2487 = vsel %vm1333, %v2478, 0
        %v2490 = vsel %vm1333, %v2479, 0
        %2492 = vmatpush.bf16.msra.mxu0 0
        %2493 = vmatpush.bf16.msra.mxu0 0
        %2494 = vmatpush.bf16.msra.mxu0 0
        %2495 = vmatpush.bf16.msra.mxu0 0
        %2496 = vmatpush.bf16.msra.mxu0 0
        %2497 = vmatpush.bf16.msra.mxu0 0
        %2498 = vmatpush.bf16.msra.mxu0 %v2483
        %2499 = vmatpush.bf16.msra.mxu0 %v2481
        %2500 = vmatmul.bf16.gmra.mxu0 %v2487
        %v2501 = vpop.f32.mrf.mxu0
        %v2502 = vadd.f32 0.0, %v2501
        %v2503 = vpop.f32.mrf.mxu0
        %v2504 = vadd.f32 0.0, %v2503
        %2505 = vmatmul.bf16.gmra.mxu0 %v2490
        %v2506 = vpop.f32.mrf.mxu0
        %v2507 = vadd.f32 0.0, %v2506
        %v2508 = vpop.f32.mrf.mxu0
        %v2509 = vadd.f32 0.0, %v2508
        %2510 = vdwg.mxu0
        %v2511 = vpack.c.bf16 %v2504, %v2502
        %v2512 = vpack.c.bf16 %v2509, %v2507
        %s2513 = scalar_lea.vmem [#allocation19], 32
        %v2514 = vld [vmem:[%s2513] sm:$0xf]
        %v2515 = vld [vmem:[%s2513 + $0x4] sm:$0xf]
        %v2516 = vld [vmem:[%s2513 + $0x8] sm:$0xf]
        %v2517 = vld [vmem:[%s2513 + $0xc] sm:$0xf]
        %v2518 = vld [vmem:[%s2513 + $0x10] sm:$0xf]
        %v2519 = vld [vmem:[%s2513 + $0x14] sm:$0xf]
        %v2520 = vld [vmem:[%s2513 + $0x18] sm:$0xf]
        %v2521 = vld [vmem:[%s2513 + $0x1c] sm:$0xf]
        %v2530 = vunpack.c.l.b16 %v2514
        %v2531 = vunpack.c.l.b16 %v2515
        %v2532 = vunpack.c.l.b16 %v2516
        %v2533 = vunpack.c.l.b16 %v2517
        %v2534 = vunpack.c.l.b16 %v2518
        %v2535 = vunpack.c.l.b16 %v2519
        %v2536 = vunpack.c.l.b16 %v2520
        %v2537 = vunpack.c.l.b16 %v2521
        %v2538 = vpack.c.b16 %v2531, %v2530
        %v2539 = vpack.c.b16 %v2533, %v2532
        %v2540 = vpack.c.b16 %v2535, %v2534
        %v2541 = vpack.c.b16 %v2537, %v2536
        %v2547 = vsel %vm2270, %v2511, 0
        %v2550 = vsel %vm2270, %v2512, 0
        %2552 = vmatpush.bf16.msra.mxu0 0
        %2553 = vmatpush.bf16.msra.mxu0 0
        %2554 = vmatpush.bf16.msra.mxu0 0
        %2555 = vmatpush.bf16.msra.mxu0 0
        %2556 = vmatpush.bf16.msra.mxu0 %v2541
        %2557 = vmatpush.bf16.msra.mxu0 %v2540
        %2558 = vmatpush.bf16.msra.mxu0 %v2539
        %2559 = vmatpush.bf16.msra.mxu0 %v2538
        %2560 = vmatmul.bf16.gmra.mxu0 %v2547
        %v2561 = vpop.f32.mrf.mxu0
        %v2562 = vadd.f32 0.0, %v2561
        %v2563 = vpop.f32.mrf.mxu0
        %v2564 = vadd.f32 0.0, %v2563
        %2565 = vmatmul.bf16.gmra.mxu0 %v2550
        %v2566 = vpop.f32.mrf.mxu0
        %v2567 = vadd.f32 0.0, %v2566
        %v2568 = vpop.f32.mrf.mxu0
        %v2569 = vadd.f32 0.0, %v2568
        %2570 = vdwg.mxu0
        %v2579 = vunpack.c.l.b16 %v2387
        %v2580 = vunpack.c.l.b16 %v2388
        %v2581 = vunpack.c.l.b16 %v2389
        %v2582 = vunpack.c.l.b16 %v2390
        %v2583 = vunpack.c.l.b16 %v2391
        %v2584 = vunpack.c.l.b16 %v2392
        %v2585 = vunpack.c.l.b16 %v2393
        %v2586 = vunpack.c.l.b16 %v2394
        %v2587 = vpack.c.b16 %v2580, %v2579
        %v2588 = vpack.c.b16 %v2582, %v2581
        %v2589 = vpack.c.b16 %v2584, %v2583
        %v2590 = vpack.c.b16 %v2586, %v2585
        %v2596 = vsel %vm2270, %v2385, 0
        %v2599 = vsel %vm2270, %v2386, 0
        %2601 = vmatpush.bf16.msra.mxu0 0
        %2602 = vmatpush.bf16.msra.mxu0 0
        %2603 = vmatpush.bf16.msra.mxu0 0
        %2604 = vmatpush.bf16.msra.mxu0 0
        %2605 = vmatpush.bf16.msra.mxu0 %v2590
        %2606 = vmatpush.bf16.msra.mxu0 %v2589
        %2607 = vmatpush.bf16.msra.mxu0 %v2588
        %2608 = vmatpush.bf16.msra.mxu0 %v2587
        %2609 = vmatmul.bf16.gmra.mxu0 %v2596
        %v2610 = vpop.f32.mrf.mxu0
        %v2611 = vadd.f32 %v2562, %v2610
        %v2612 = vpop.f32.mrf.mxu0
        %v2613 = vadd.f32 %v2564, %v2612
        %2614 = vmatmul.bf16.gmra.mxu0 %v2599
        %v2615 = vpop.f32.mrf.mxu0
        %v2616 = vadd.f32 %v2567, %v2615
        %v2617 = vpop.f32.mrf.mxu0
        %v2618 = vadd.f32 %v2569, %v2617
        %2619 = vdwg.mxu0
        %v2620 = vperm.slane %v1201, 1
        %v2621 = vadd.f32 %v2611, %v2620
        %v2622 = vadd.f32 %v2613, %v2620
        %v2623 = vadd.f32 %v2616, %v2620
        %v2624 = vadd.f32 %v2618, %v2620
        %v2625 = vadd.f32 %v2145, %v2621
        %v2626 = vadd.f32 %v2146, %v2622
        %v2627 = vadd.f32 %v2147, %v2623
        %v2628 = vadd.f32 %v2148, %v2624
        %2629 = vadd.xlane.f32.xlu0 %v2625
        %v2630 = vpop.xlane.xlu0 %2629
        %2631 = vadd.xlane.f32.xlu0 %v2626
        %v2632 = vpop.xlane.xlu0 %2631
        %2633 = vadd.xlane.f32.xlu0 %v2627
        %v2634 = vpop.xlane.xlu0 %2633
        %2635 = vadd.xlane.f32.xlu0 %v2628
        %v2636 = vpop.xlane.xlu0 %2635
        %v2637 = vmul.f32 %v2630, %v2002
        %v2638 = vmul.f32 %v2632, %v2002
        %v2639 = vmul.f32 %v2634, %v2002
        %v2640 = vmul.f32 %v2636, %v2002
        %v2641 = vsub.f32 %v2625, %v2637
        %v2642 = vsub.f32 %v2626, %v2638
        %v2643 = vsub.f32 %v2627, %v2639
        %v2644 = vsub.f32 %v2628, %v2640
        %v2645 = vmul.f32 %v2641, %v2641
        %v2646 = vmul.f32 %v2642, %v2642
        %v2647 = vmul.f32 %v2643, %v2643
        %v2648 = vmul.f32 %v2644, %v2644
        %2649 = vadd.xlane.f32.xlu0 %v2645
        %v2650 = vpop.xlane.xlu0 %2649
        %2651 = vadd.xlane.f32.xlu0 %v2646
        %v2652 = vpop.xlane.xlu0 %2651
        %2653 = vadd.xlane.f32.xlu0 %v2647
        %v2654 = vpop.xlane.xlu0 %2653
        %2655 = vadd.xlane.f32.xlu0 %v2648
        %v2656 = vpop.xlane.xlu0 %2655
        %v2657 = vmul.f32 %v2650, 0.007874016
        %v2658 = vmul.f32 %v2652, 0.007874016
        %v2659 = vmul.f32 %v2654, 0.007874016
        %v2660 = vmul.f32 %v2656, 0.007874016
        %v2661 = vrsqrt.pop %v2657
        %v2662 = vmul.f32 %v2661, %v2657
        %v2663 = vmul.f32 %v2662, %v2661
        %v2664 = vmul.f32 0.5, %v2663
        %v2665 = vsub.f32 1.5, %v2664
        %v2666 = vmul.f32 %v2661, %v2665
        %v2667 = vmul.f32 %v2657, %v2666
        %vm2668 = vcmp.eq.f32.partialorder %v2657, inf
        %v2669 = vsel %vm2668, %v2657, %v2667
        %vm2670 = vcmp.eq.f32.partialorder %v2657, 0.0
        %v2671 = vand.u32 %v2657, 2147483648
        %v2672 = vsel %vm2670, %v2671, %v2669
        %v2673 = vrsqrt.pop %v2658
        %v2674 = vmul.f32 %v2673, %v2658
        %v2675 = vmul.f32 %v2674, %v2673
        %v2676 = vmul.f32 0.5, %v2675
        %v2677 = vsub.f32 1.5, %v2676
        %v2678 = vmul.f32 %v2673, %v2677
        %v2679 = vmul.f32 %v2658, %v2678
        %vm2680 = vcmp.eq.f32.partialorder %v2658, inf
        %v2681 = vsel %vm2680, %v2658, %v2679
        %vm2682 = vcmp.eq.f32.partialorder %v2658, 0.0
        %v2683 = vand.u32 %v2658, 2147483648
        %v2684 = vsel %vm2682, %v2683, %v2681
        %v2685 = vrsqrt.pop %v2659
        %v2686 = vmul.f32 %v2685, %v2659
        %v2687 = vmul.f32 %v2686, %v2685
        %v2688 = vmul.f32 0.5, %v2687
        %v2689 = vsub.f32 1.5, %v2688
        %v2690 = vmul.f32 %v2685, %v2689
        %v2691 = vmul.f32 %v2659, %v2690
        %vm2692 = vcmp.eq.f32.partialorder %v2659, inf
        %v2693 = vsel %vm2692, %v2659, %v2691
        %vm2694 = vcmp.eq.f32.partialorder %v2659, 0.0
        %v2695 = vand.u32 %v2659, 2147483648
        %v2696 = vsel %vm2694, %v2695, %v2693
        %v2697 = vrsqrt.pop %v2660
        %v2698 = vmul.f32 %v2697, %v2660
        %v2699 = vmul.f32 %v2698, %v2697
        %v2700 = vmul.f32 0.5, %v2699
        %v2701 = vsub.f32 1.5, %v2700
        %v2702 = vmul.f32 %v2697, %v2701
        %v2703 = vmul.f32 %v2660, %v2702
        %vm2704 = vcmp.eq.f32.partialorder %v2660, inf
        %v2705 = vsel %vm2704, %v2660, %v2703
        %vm2706 = vcmp.eq.f32.partialorder %v2660, 0.0
        %v2707 = vand.u32 %v2660, 2147483648
        %v2708 = vsel %vm2706, %v2707, %v2705
        %v2709 = vadd.f32 %v2672, 1e-06
        %v2710 = vadd.f32 %v2684, 1e-06
        %v2711 = vadd.f32 %v2696, 1e-06
        %v2712 = vadd.f32 %v2708, 1e-06
        %v2713 = vrcp.pop %v2709
        %v2714 = vmul.f32 %v2709, %v2713
        %v2715 = vsub.f32 1.0, %v2714
        %v2716 = vmul.f32 %v2713, %v2715
        %v2717 = vadd.f32 %v2713, %v2716
        %vm2718 = vweird.f32 %v2709
        %vm2719 = vweird.f32 %v2713
        %vm2720 = vmor %vm2718, %vm2719
        %v2721 = vsel %vm2720, %v2713, %v2717
        %v2722 = vand.u32 2147483647, %v2709
        %vm2723 = vcmp.eq.f32.partialorder %v2722, 8.507059e+37
        %v2724 = vand.u32 %v2709, 2147483648
        %v2725 = vor.u32 1.1754944e-38, %v2724
        %v2726 = vsel %vm2723, %v2725, %v2721
        %v2727 = vrcp.pop %v2710
        %v2728 = vmul.f32 %v2710, %v2727
        %v2729 = vsub.f32 1.0, %v2728
        %v2730 = vmul.f32 %v2727, %v2729
        %v2731 = vadd.f32 %v2727, %v2730
        %vm2732 = vweird.f32 %v2710
        %vm2733 = vweird.f32 %v2727
        %vm2734 = vmor %vm2732, %vm2733
        %v2735 = vsel %vm2734, %v2727, %v2731
        %v2736 = vand.u32 2147483647, %v2710
        %vm2737 = vcmp.eq.f32.partialorder %v2736, 8.507059e+37
        %v2738 = vand.u32 %v2710, 2147483648
        %v2739 = vor.u32 1.1754944e-38, %v2738
        %v2740 = vsel %vm2737, %v2739, %v2735
        %v2741 = vrcp.pop %v2711
        %v2742 = vmul.f32 %v2711, %v2741
        %v2743 = vsub.f32 1.0, %v2742
        %v2744 = vmul.f32 %v2741, %v2743
        %v2745 = vadd.f32 %v2741, %v2744
        %vm2746 = vweird.f32 %v2711
        %vm2747 = vweird.f32 %v2741
        %vm2748 = vmor %vm2746, %vm2747
        %v2749 = vsel %vm2748, %v2741, %v2745
        %v2750 = vand.u32 2147483647, %v2711
        %vm2751 = vcmp.eq.f32.partialorder %v2750, 8.507059e+37
        %v2752 = vand.u32 %v2711, 2147483648
        %v2753 = vor.u32 1.1754944e-38, %v2752
        %v2754 = vsel %vm2751, %v2753, %v2749
        %v2755 = vrcp.pop %v2712
        %v2756 = vmul.f32 %v2712, %v2755
        %v2757 = vsub.f32 1.0, %v2756
        %v2758 = vmul.f32 %v2755, %v2757
        %v2759 = vadd.f32 %v2755, %v2758
        %vm2760 = vweird.f32 %v2712
        %vm2761 = vweird.f32 %v2755
        %vm2762 = vmor %vm2760, %vm2761
        %v2763 = vsel %vm2762, %v2755, %v2759
        %v2764 = vand.u32 2147483647, %v2712
        %vm2765 = vcmp.eq.f32.partialorder %v2764, 8.507059e+37
        %v2766 = vand.u32 %v2712, 2147483648
        %v2767 = vor.u32 1.1754944e-38, %v2766
        %v2768 = vsel %vm2765, %v2767, %v2763
        %v2769 = vperm.slane %v1200, 2
        %v2770 = vmul.f32 %v2769, %v2641
        %v2771 = vmul.f32 %v2769, %v2642
        %v2772 = vmul.f32 %v2769, %v2643
        %v2773 = vmul.f32 %v2769, %v2644
        %v2774 = vmul.f32 %v2770, %v2726
        %v2775 = vmul.f32 %v2771, %v2740
        %v2776 = vmul.f32 %v2772, %v2754
        %v2777 = vmul.f32 %v2773, %v2768
        %v2778 = vperm.slane %v1200, 3
        %v2779 = vadd.f32 %v2774, %v2778
        %v2780 = vadd.f32 %v2775, %v2778
        %v2781 = vadd.f32 %v2776, %v2778
        %v2782 = vadd.f32 %v2777, %v2778
        %v2783 = vpack.c.bf16 %v2780, %v2779
        %v2784 = vpack.c.bf16 %v2782, %v2781
        %v2785 = vld [vmem:[#allocation21] sm:$0xff]
        %v2786 = vld [vmem:[#allocation21 + $0x8] sm:$0xff]
        %v2787 = vld [vmem:[#allocation21 + $0x10] sm:$0xff]
        %v2788 = vld [vmem:[#allocation21 + $0x18] sm:$0xff]
        %v2789 = vld [vmem:[#allocation21 + $0x20] sm:$0xff]
        %v2790 = vld [vmem:[#allocation21 + $0x28] sm:$0xff]
        %v2791 = vld [vmem:[#allocation21 + $0x30] sm:$0xff]
        %v2792 = vld [vmem:[#allocation21 + $0x38] sm:$0xff]
        %v2793 = vld [vmem:[#allocation21 + $0x40] sm:$0xff]
        %v2794 = vld [vmem:[#allocation21 + $0x48] sm:$0xff]
        %v2795 = vld [vmem:[#allocation21 + $0x50] sm:$0xff]
        %v2796 = vld [vmem:[#allocation21 + $0x58] sm:$0xff]
        %v2797 = vld [vmem:[#allocation21 + $0x60] sm:$0xff]
        %v2798 = vld [vmem:[#allocation21 + $0x68] sm:$0xff]
        %v2799 = vld [vmem:[#allocation21 + $0x70] sm:$0xff]
        %v2800 = vld [vmem:[#allocation21 + $0x78] sm:$0xff]
        %v2801 = vld [vmem:[%s16] sm:$0x3]
        %v2803 = vperm.slane %v2801, 0
        %v2804 = vperm.slane %v2801, 1
        %v2823 = vunpack.c.l.b16 %v2785
        %v2824 = vunpack.c.h.b16 %v2785
        %v2825 = vunpack.c.l.b16 %v2786
        %v2826 = vunpack.c.h.b16 %v2786
        %v2827 = vunpack.c.l.b16 %v2787
        %v2828 = vunpack.c.h.b16 %v2787
        %v2829 = vunpack.c.l.b16 %v2788
        %v2830 = vunpack.c.h.b16 %v2788
        %v2831 = vunpack.c.l.b16 %v2789
        %v2832 = vunpack.c.h.b16 %v2789
        %v2833 = vunpack.c.l.b16 %v2790
        %v2834 = vunpack.c.h.b16 %v2790
        %v2835 = vunpack.c.l.b16 %v2791
        %v2836 = vunpack.c.h.b16 %v2791
        %v2837 = vunpack.c.l.b16 %v2792
        %v2838 = vunpack.c.h.b16 %v2792
        %v2839 = vunpack.c.l.b16 %v2793
        %v2840 = vunpack.c.h.b16 %v2793
        %v2841 = vunpack.c.l.b16 %v2794
        %v2842 = vunpack.c.h.b16 %v2794
        %v2843 = vunpack.c.l.b16 %v2795
        %v2844 = vunpack.c.h.b16 %v2795
        %v2845 = vunpack.c.l.b16 %v2796
        %v2846 = vunpack.c.h.b16 %v2796
        %v2847 = vunpack.c.l.b16 %v2797
        %v2848 = vunpack.c.h.b16 %v2797
        %v2849 = vunpack.c.l.b16 %v2798
        %v2850 = vunpack.c.h.b16 %v2798
        %v2851 = vunpack.c.l.b16 %v2799
        %v2852 = vunpack.c.h.b16 %v2799
        %v2853 = vunpack.c.l.b16 %v2800
        %v2854 = vunpack.c.h.b16 %v2800
        %v2855 = vpack.c.b16 %v2825, %v2823
        %v2856 = vpack.c.b16 %v2826, %v2824
        %v2857 = vpack.c.b16 %v2829, %v2827
        %v2858 = vpack.c.b16 %v2830, %v2828
        %v2859 = vpack.c.b16 %v2833, %v2831
        %v2860 = vpack.c.b16 %v2834, %v2832
        %v2861 = vpack.c.b16 %v2837, %v2835
        %v2862 = vpack.c.b16 %v2838, %v2836
        %v2863 = vpack.c.b16 %v2841, %v2839
        %v2864 = vpack.c.b16 %v2842, %v2840
        %v2865 = vpack.c.b16 %v2845, %v2843
        %v2866 = vpack.c.b16 %v2846, %v2844
        %v2867 = vpack.c.b16 %v2849, %v2847
        %v2868 = vpack.c.b16 %v2850, %v2848
        %v2869 = vpack.c.b16 %v2853, %v2851
        %v2870 = vpack.c.b16 %v2854, %v2852
        %2887 = vmatpush.bf16.msra.mxu0 %v2869
        %2888 = vmatpush.bf16.msra.mxu0 %v2867
        %2889 = vmatpush.bf16.msra.mxu0 %v2865
        %2890 = vmatpush.bf16.msra.mxu0 %v2863
        %2891 = vmatpush.bf16.msra.mxu0 %v2861
        %2892 = vmatpush.bf16.msra.mxu0 %v2859
        %2893 = vmatpush.bf16.msra.mxu0 %v2857
        %2894 = vmatpush.bf16.msra.mxu0 %v2855
        %2895 = vmatmul.bf16.gmra.mxu0 %v2783
        %v2896 = vpop.f32.mrf.mxu0
        %v2897 = vadd.f32 %v2803, %v2896
        %v2898 = vpop.f32.mrf.mxu0
        %v2899 = vadd.f32 %v2803, %v2898
        %2900 = vmatmul.bf16.gmra.mxu0 %v2784
        %v2901 = vpop.f32.mrf.mxu0
        %v2902 = vadd.f32 %v2803, %v2901
        %v2903 = vpop.f32.mrf.mxu0
        %v2904 = vadd.f32 %v2803, %v2903
        %2905 = vdwg.mxu0
        %2906 = vmatpush.bf16.msra.mxu0 %v2870
        %2907 = vmatpush.bf16.msra.mxu0 %v2868
        %2908 = vmatpush.bf16.msra.mxu0 %v2866
        %2909 = vmatpush.bf16.msra.mxu0 %v2864
        %2910 = vmatpush.bf16.msra.mxu0 %v2862
        %2911 = vmatpush.bf16.msra.mxu0 %v2860
        %2912 = vmatpush.bf16.msra.mxu0 %v2858
        %2913 = vmatpush.bf16.msra.mxu0 %v2856
        %2914 = vmatmul.bf16.gmra.mxu0 %v2783
        %v2915 = vpop.f32.mrf.mxu0
        %v2916 = vadd.f32 %v2804, %v2915
        %v2917 = vpop.f32.mrf.mxu0
        %v2918 = vadd.f32 %v2804, %v2917
        %2919 = vmatmul.bf16.gmra.mxu0 %v2784
        %v2920 = vpop.f32.mrf.mxu0
        %v2921 = vadd.f32 %v2804, %v2920
        %v2922 = vpop.f32.mrf.mxu0
        %v2923 = vadd.f32 %v2804, %v2922
        %2924 = vdwg.mxu0
        %v2925 = vmax.f32 %v2897, 0.0
        %v2926 = vmax.f32 %v2916, 0.0
        %v2927 = vmax.f32 %v2899, 0.0
        %v2928 = vmax.f32 %v2918, 0.0
        %v2929 = vmax.f32 %v2902, 0.0
        %v2930 = vmax.f32 %v2921, 0.0
        %v2931 = vmax.f32 %v2904, 0.0
        %v2932 = vmax.f32 %v2923, 0.0
        %v2933 = vpack.c.bf16 %v2927, %v2925
        %v2934 = vpack.c.bf16 %v2928, %v2926
        %v2935 = vpack.c.bf16 %v2931, %v2929
        %v2936 = vpack.c.bf16 %v2932, %v2930
        %v2937 = vld [vmem:[#allocation22] sm:$0xf]
        %v2938 = vld [vmem:[#allocation22 + $0x4] sm:$0xf]
        %v2939 = vld [vmem:[#allocation22 + $0x8] sm:$0xf]
        %v2940 = vld [vmem:[#allocation22 + $0xc] sm:$0xf]
        %v2941 = vld [vmem:[#allocation22 + $0x10] sm:$0xf]
        %v2942 = vld [vmem:[#allocation22 + $0x14] sm:$0xf]
        %v2943 = vld [vmem:[#allocation22 + $0x18] sm:$0xf]
        %v2944 = vld [vmem:[#allocation22 + $0x1c] sm:$0xf]
        %v2945 = vld [vmem:[#allocation22 + $0x20] sm:$0xf]
        %v2946 = vld [vmem:[#allocation22 + $0x24] sm:$0xf]
        %v2947 = vld [vmem:[#allocation22 + $0x28] sm:$0xf]
        %v2948 = vld [vmem:[#allocation22 + $0x2c] sm:$0xf]
        %v2949 = vld [vmem:[#allocation22 + $0x30] sm:$0xf]
        %v2950 = vld [vmem:[#allocation22 + $0x34] sm:$0xf]
        %v2951 = vld [vmem:[#allocation22 + $0x38] sm:$0xf]
        %v2952 = vld [vmem:[#allocation22 + $0x3c] sm:$0xf]
        %v2953 = vld [vmem:[#allocation22 + $0x40] sm:$0xf]
        %v2954 = vld [vmem:[#allocation22 + $0x44] sm:$0xf]
        %v2955 = vld [vmem:[#allocation22 + $0x48] sm:$0xf]
        %v2956 = vld [vmem:[#allocation22 + $0x4c] sm:$0xf]
        %v2957 = vld [vmem:[#allocation22 + $0x50] sm:$0xf]
        %v2958 = vld [vmem:[#allocation22 + $0x54] sm:$0xf]
        %v2959 = vld [vmem:[#allocation22 + $0x58] sm:$0xf]
        %v2960 = vld [vmem:[#allocation22 + $0x5c] sm:$0xf]
        %v2961 = vld [vmem:[#allocation22 + $0x60] sm:$0xf]
        %v2962 = vld [vmem:[#allocation22 + $0x64] sm:$0xf]
        %v2963 = vld [vmem:[#allocation22 + $0x68] sm:$0xf]
        %v2964 = vld [vmem:[#allocation22 + $0x6c] sm:$0xf]
        %v2965 = vld [vmem:[#allocation22 + $0x70] sm:$0xf]
        %v2966 = vld [vmem:[#allocation22 + $0x74] sm:$0xf]
        %v2967 = vld [vmem:[#allocation22 + $0x78] sm:$0xf]
        %v2968 = vld [vmem:[#allocation22 + $0x7c] sm:$0xf]
        %v2969 = vperm.slane %v1201, 2
        %v3002 = vunpack.c.l.b16 %v2937
        %v3003 = vunpack.c.l.b16 %v2938
        %v3004 = vunpack.c.l.b16 %v2939
        %v3005 = vunpack.c.l.b16 %v2940
        %v3006 = vunpack.c.l.b16 %v2941
        %v3007 = vunpack.c.l.b16 %v2942
        %v3008 = vunpack.c.l.b16 %v2943
        %v3009 = vunpack.c.l.b16 %v2944
        %v3010 = vunpack.c.l.b16 %v2945
        %v3011 = vunpack.c.l.b16 %v2946
        %v3012 = vunpack.c.l.b16 %v2947
        %v3013 = vunpack.c.l.b16 %v2948
        %v3014 = vunpack.c.l.b16 %v2949
        %v3015 = vunpack.c.l.b16 %v2950
        %v3016 = vunpack.c.l.b16 %v2951
        %v3017 = vunpack.c.l.b16 %v2952
        %v3018 = vunpack.c.l.b16 %v2953
        %v3019 = vunpack.c.l.b16 %v2954
        %v3020 = vunpack.c.l.b16 %v2955
        %v3021 = vunpack.c.l.b16 %v2956
        %v3022 = vunpack.c.l.b16 %v2957
        %v3023 = vunpack.c.l.b16 %v2958
        %v3024 = vunpack.c.l.b16 %v2959
        %v3025 = vunpack.c.l.b16 %v2960
        %v3026 = vunpack.c.l.b16 %v2961
        %v3027 = vunpack.c.l.b16 %v2962
        %v3028 = vunpack.c.l.b16 %v2963
        %v3029 = vunpack.c.l.b16 %v2964
        %v3030 = vunpack.c.l.b16 %v2965
        %v3031 = vunpack.c.l.b16 %v2966
        %v3032 = vunpack.c.l.b16 %v2967
        %v3033 = vunpack.c.l.b16 %v2968
        %v3034 = vpack.c.b16 %v3003, %v3002
        %v3035 = vpack.c.b16 %v3005, %v3004
        %v3036 = vpack.c.b16 %v3007, %v3006
        %v3037 = vpack.c.b16 %v3009, %v3008
        %v3038 = vpack.c.b16 %v3011, %v3010
        %v3039 = vpack.c.b16 %v3013, %v3012
        %v3040 = vpack.c.b16 %v3015, %v3014
        %v3041 = vpack.c.b16 %v3017, %v3016
        %v3042 = vpack.c.b16 %v3019, %v3018
        %v3043 = vpack.c.b16 %v3021, %v3020
        %v3044 = vpack.c.b16 %v3023, %v3022
        %v3045 = vpack.c.b16 %v3025, %v3024
        %v3046 = vpack.c.b16 %v3027, %v3026
        %v3047 = vpack.c.b16 %v3029, %v3028
        %v3048 = vpack.c.b16 %v3031, %v3030
        %v3049 = vpack.c.b16 %v3033, %v3032
        %3066 = vmatpush.bf16.msra.mxu0 %v3041
        %3067 = vmatpush.bf16.msra.mxu0 %v3040
        %3068 = vmatpush.bf16.msra.mxu0 %v3039
        %3069 = vmatpush.bf16.msra.mxu0 %v3038
        %3070 = vmatpush.bf16.msra.mxu0 %v3037
        %3071 = vmatpush.bf16.msra.mxu0 %v3036
        %3072 = vmatpush.bf16.msra.mxu0 %v3035
        %3073 = vmatpush.bf16.msra.mxu0 %v3034
        %3074 = vmatmul.bf16.gmra.mxu0 %v2933
        %v3075 = vpop.f32.mrf.mxu0
        %v3076 = vadd.f32 %v2969, %v3075
        %v3077 = vpop.f32.mrf.mxu0
        %v3078 = vadd.f32 %v2969, %v3077
        %3079 = vmatmul.bf16.gmra.mxu0 %v2935
        %v3080 = vpop.f32.mrf.mxu0
        %v3081 = vadd.f32 %v2969, %v3080
        %v3082 = vpop.f32.mrf.mxu0
        %v3083 = vadd.f32 %v2969, %v3082
        %3084 = vdwg.mxu0
        %3085 = vmatpush.bf16.msra.mxu0 %v3049
        %3086 = vmatpush.bf16.msra.mxu0 %v3048
        %3087 = vmatpush.bf16.msra.mxu0 %v3047
        %3088 = vmatpush.bf16.msra.mxu0 %v3046
        %3089 = vmatpush.bf16.msra.mxu0 %v3045
        %3090 = vmatpush.bf16.msra.mxu0 %v3044
        %3091 = vmatpush.bf16.msra.mxu0 %v3043
        %3092 = vmatpush.bf16.msra.mxu0 %v3042
        %3093 = vmatmul.bf16.gmra.mxu0 %v2934
        %v3094 = vpop.f32.mrf.mxu0
        %v3095 = vadd.f32 %v3076, %v3094
        %v3096 = vpop.f32.mrf.mxu0
        %v3097 = vadd.f32 %v3078, %v3096
        %3098 = vmatmul.bf16.gmra.mxu0 %v2936
        %v3099 = vpop.f32.mrf.mxu0
        %v3100 = vadd.f32 %v3081, %v3099
        %v3101 = vpop.f32.mrf.mxu0
        %v3102 = vadd.f32 %v3083, %v3101
        %3103 = vdwg.mxu0
        %v3104 = vadd.f32 %v2779, %v3095
        %v3105 = vadd.f32 %v2780, %v3097
        %v3106 = vadd.f32 %v2781, %v3100
        %v3107 = vadd.f32 %v2782, %v3102
        %3108 = vadd.xlane.f32.xlu0 %v3104
        %v3109 = vpop.xlane.xlu0 %3108
        %3110 = vadd.xlane.f32.xlu0 %v3105
        %v3111 = vpop.xlane.xlu0 %3110
        %3112 = vadd.xlane.f32.xlu0 %v3106
        %v3113 = vpop.xlane.xlu0 %3112
        %3114 = vadd.xlane.f32.xlu0 %v3107
        %v3115 = vpop.xlane.xlu0 %3114
        %v3116 = vmul.f32 %v3109, %v2002
        %v3117 = vmul.f32 %v3111, %v2002
        %v3118 = vmul.f32 %v3113, %v2002
        %v3119 = vmul.f32 %v3115, %v2002
        %v3120 = vsub.f32 %v3104, %v3116
        %v3121 = vsub.f32 %v3105, %v3117
        %v3122 = vsub.f32 %v3106, %v3118
        %v3123 = vsub.f32 %v3107, %v3119
        %v3124 = vmul.f32 %v3120, %v3120
        %v3125 = vmul.f32 %v3121, %v3121
        %v3126 = vmul.f32 %v3122, %v3122
        %v3127 = vmul.f32 %v3123, %v3123
        %3128 = vadd.xlane.f32.xlu0 %v3124
        %v3129 = vpop.xlane.xlu0 %3128
        %3130 = vadd.xlane.f32.xlu0 %v3125
        %v3131 = vpop.xlane.xlu0 %3130
        %3132 = vadd.xlane.f32.xlu0 %v3126
        %v3133 = vpop.xlane.xlu0 %3132
        %3134 = vadd.xlane.f32.xlu0 %v3127
        %v3135 = vpop.xlane.xlu0 %3134
        %v3136 = vmul.f32 %v3129, 0.007874016
        %v3137 = vmul.f32 %v3131, 0.007874016
        %v3138 = vmul.f32 %v3133, 0.007874016
        %v3139 = vmul.f32 %v3135, 0.007874016
        %v3140 = vrsqrt.pop %v3136
        %v3141 = vmul.f32 %v3140, %v3136
        %v3142 = vmul.f32 %v3141, %v3140
        %v3143 = vmul.f32 0.5, %v3142
        %v3144 = vsub.f32 1.5, %v3143
        %v3145 = vmul.f32 %v3140, %v3144
        %v3146 = vmul.f32 %v3136, %v3145
        %vm3147 = vcmp.eq.f32.partialorder %v3136, inf
        %v3148 = vsel %vm3147, %v3136, %v3146
        %vm3149 = vcmp.eq.f32.partialorder %v3136, 0.0
        %v3150 = vand.u32 %v3136, 2147483648
        %v3151 = vsel %vm3149, %v3150, %v3148
        %v3152 = vrsqrt.pop %v3137
        %v3153 = vmul.f32 %v3152, %v3137
        %v3154 = vmul.f32 %v3153, %v3152
        %v3155 = vmul.f32 0.5, %v3154
        %v3156 = vsub.f32 1.5, %v3155
        %v3157 = vmul.f32 %v3152, %v3156
        %v3158 = vmul.f32 %v3137, %v3157
        %vm3159 = vcmp.eq.f32.partialorder %v3137, inf
        %v3160 = vsel %vm3159, %v3137, %v3158
        %vm3161 = vcmp.eq.f32.partialorder %v3137, 0.0
        %v3162 = vand.u32 %v3137, 2147483648
        %v3163 = vsel %vm3161, %v3162, %v3160
        %v3164 = vrsqrt.pop %v3138
        %v3165 = vmul.f32 %v3164, %v3138
        %v3166 = vmul.f32 %v3165, %v3164
        %v3167 = vmul.f32 0.5, %v3166
        %v3168 = vsub.f32 1.5, %v3167
        %v3169 = vmul.f32 %v3164, %v3168
        %v3170 = vmul.f32 %v3138, %v3169
        %vm3171 = vcmp.eq.f32.partialorder %v3138, inf
        %v3172 = vsel %vm3171, %v3138, %v3170
        %vm3173 = vcmp.eq.f32.partialorder %v3138, 0.0
        %v3174 = vand.u32 %v3138, 2147483648
        %v3175 = vsel %vm3173, %v3174, %v3172
        %v3176 = vrsqrt.pop %v3139
        %v3177 = vmul.f32 %v3176, %v3139
        %v3178 = vmul.f32 %v3177, %v3176
        %v3179 = vmul.f32 0.5, %v3178
        %v3180 = vsub.f32 1.5, %v3179
        %v3181 = vmul.f32 %v3176, %v3180
        %v3182 = vmul.f32 %v3139, %v3181
        %vm3183 = vcmp.eq.f32.partialorder %v3139, inf
        %v3184 = vsel %vm3183, %v3139, %v3182
        %vm3185 = vcmp.eq.f32.partialorder %v3139, 0.0
        %v3186 = vand.u32 %v3139, 2147483648
        %v3187 = vsel %vm3185, %v3186, %v3184
        %v3188 = vadd.f32 %v3151, 1e-06
        %v3189 = vadd.f32 %v3163, 1e-06
        %v3190 = vadd.f32 %v3175, 1e-06
        %v3191 = vadd.f32 %v3187, 1e-06
        %v3192 = vrcp.pop %v3188
        %v3193 = vmul.f32 %v3188, %v3192
        %v3194 = vsub.f32 1.0, %v3193
        %v3195 = vmul.f32 %v3192, %v3194
        %v3196 = vadd.f32 %v3192, %v3195
        %vm3197 = vweird.f32 %v3188
        %vm3198 = vweird.f32 %v3192
        %vm3199 = vmor %vm3197, %vm3198
        %v3200 = vsel %vm3199, %v3192, %v3196
        %v3201 = vand.u32 2147483647, %v3188
        %vm3202 = vcmp.eq.f32.partialorder %v3201, 8.507059e+37
        %v3203 = vand.u32 %v3188, 2147483648
        %v3204 = vor.u32 1.1754944e-38, %v3203
        %v3205 = vsel %vm3202, %v3204, %v3200
        %v3206 = vrcp.pop %v3189
        %v3207 = vmul.f32 %v3189, %v3206
        %v3208 = vsub.f32 1.0, %v3207
        %v3209 = vmul.f32 %v3206, %v3208
        %v3210 = vadd.f32 %v3206, %v3209
        %vm3211 = vweird.f32 %v3189
        %vm3212 = vweird.f32 %v3206
        %vm3213 = vmor %vm3211, %vm3212
        %v3214 = vsel %vm3213, %v3206, %v3210
        %v3215 = vand.u32 2147483647, %v3189
        %vm3216 = vcmp.eq.f32.partialorder %v3215, 8.507059e+37
        %v3217 = vand.u32 %v3189, 2147483648
        %v3218 = vor.u32 1.1754944e-38, %v3217
        %v3219 = vsel %vm3216, %v3218, %v3214
        %v3220 = vrcp.pop %v3190
        %v3221 = vmul.f32 %v3190, %v3220
        %v3222 = vsub.f32 1.0, %v3221
        %v3223 = vmul.f32 %v3220, %v3222
        %v3224 = vadd.f32 %v3220, %v3223
        %vm3225 = vweird.f32 %v3190
        %vm3226 = vweird.f32 %v3220
        %vm3227 = vmor %vm3225, %vm3226
        %v3228 = vsel %vm3227, %v3220, %v3224
        %v3229 = vand.u32 2147483647, %v3190
        %vm3230 = vcmp.eq.f32.partialorder %v3229, 8.507059e+37
        %v3231 = vand.u32 %v3190, 2147483648
        %v3232 = vor.u32 1.1754944e-38, %v3231
        %v3233 = vsel %vm3230, %v3232, %v3228
        %v3234 = vrcp.pop %v3191
        %v3235 = vmul.f32 %v3191, %v3234
        %v3236 = vsub.f32 1.0, %v3235
        %v3237 = vmul.f32 %v3234, %v3236
        %v3238 = vadd.f32 %v3234, %v3237
        %vm3239 = vweird.f32 %v3191
        %vm3240 = vweird.f32 %v3234
        %vm3241 = vmor %vm3239, %vm3240
        %v3242 = vsel %vm3241, %v3234, %v3238
        %v3243 = vand.u32 2147483647, %v3191
        %vm3244 = vcmp.eq.f32.partialorder %v3243, 8.507059e+37
        %v3245 = vand.u32 %v3191, 2147483648
        %v3246 = vor.u32 1.1754944e-38, %v3245
        %v3247 = vsel %vm3244, %v3246, %v3242
        %v3248 = vperm.slane %v1200, 4
        %v3249 = vmul.f32 %v3248, %v3120
        %v3250 = vmul.f32 %v3248, %v3121
        %v3251 = vmul.f32 %v3248, %v3122
        %v3252 = vmul.f32 %v3248, %v3123
        %v3253 = vmul.f32 %v3249, %v3205
        %v3254 = vmul.f32 %v3250, %v3219
        %v3255 = vmul.f32 %v3251, %v3233
        %v3256 = vmul.f32 %v3252, %v3247
        %v3257 = vperm.slane %v1200, 5
        %v3258 = vadd.f32 %v3253, %v3257
        %v3259 = vadd.f32 %v3254, %v3257
        %v3260 = vadd.f32 %v3255, %v3257
        %v3261 = vadd.f32 %v3256, %v3257
        %3262 = vst [vmem:[%s861] sm:$0xff] %v3258
        %3263 = vst [vmem:[%s861 + $0x8] sm:$0xff] %v3259
        %3264 = vst [vmem:[%s861 + $0x10] sm:$0xff] %v3260
        %3265 = vst [vmem:[%s861 + $0x18] sm:$0xff] %v3261
        %s3266 = sand.u32 %s450, 1
        %s3267 = scalar_lea.sflag [#allocation6], %s3266
        %s3268 = sand.u32 %s450, 1
        %s3269 = smul.addr %s3268, 32
        %s3270 = scalar_lea.vmem [#allocation25], %s3269
        // Predicated region
        $region145: #{tpu_custom_call.1} parent=87 // pred_check
          %p3271 = pneg %p460
        $region146: #{tpu_custom_call.1} parent=87 // pred_check_branch
          %3273 = sbr.rel (%p3271) target = $region148
        $region147: #{tpu_custom_call.1} parent=87 // pred_region
          %s3274 = smul.u32 4, %s49
          %3276 = vsyncadd %s3267, 0
          %s3277 = smul.addr %s48, 4
          %s3278 = sadd.s32 %s3274, %s3277
          %s3279 = smul.addr %s3278, 8
          %s3280 = scalar_lea.hbm %s17, %s3279
          %s3281 = sshll.u32 %s3270, 4
          %s3282 = int_to_ptr.vmem [resolvable:$true] %s3281
          %s3283 = sshll.u32 %s3280, 4
          %s3284 = int_to_ptr.hbm [resolvable:$true] %s3283
          %3289 = dma.vmem_to_hbm [thread:$0]  %s3282, 512, %s3284, %s3267, 128, 128, 8
        $region148: #{tpu_custom_call.1} parent=87 // pred_fallthru
          _
      $region88: #{tpu_custom_call.1} parent=5 // pred_fallthru
        _
      %p3290 = scmp.le.s32.totalorder 2, %s39
      // Predicated region
      $region149: #{tpu_custom_call.1} parent=5 // pred_check
        %p3291 = pneg %p3290
      $region150: #{tpu_custom_call.1} parent=5 // pred_check_branch
        %3293 = sbr.rel (%p3291) target = $region152
      $region151: #{tpu_custom_call.1} parent=5 // pred_region
        %s3294 = ssub.s32 %s39, 2
        // Predicated region
        $region153: #{tpu_custom_call.1} parent=151 // pred_check
          %p3295 = pneg %p466
        $region154: #{tpu_custom_call.1} parent=151 // pred_check_branch
          %3297 = sbr.rel (%p3295) target = $region156
        $region155: #{tpu_custom_call.1} parent=151 // pred_region
          %s3298 = sand.u32 %s451, 1
          %s3299 = scalar_lea.sflag [#allocation6], %s3298
          %s3300 = sand.u32 %s451, 1
          %s3301 = smul.addr %s3300, 32
          %s3302 = scalar_lea.vmem [#allocation25], %s3301
          %3304 = dma.done %s3299, 512
        $region156: #{tpu_custom_call.1} parent=151 // pred_fallthru
          _
      $region152: #{tpu_custom_call.1} parent=5 // pred_fallthru
        _
    $region6: #{tpu_custom_call.1} parent=1 // loop_footer
      %s43 = sadd.s32 1, %s39
    $region7: #{tpu_custom_call.1} parent=1 // loop_footer_branch
      %38 = sbr.rel target = $region3
    $region8: #{tpu_custom_call.1} parent=1 // loop_exit
      _
    %3305 = vsyncpa [#allocation5], 1
    %s3306 = scalar_lea.sflag [#allocation5], 1
    %3307 = vsyncpa %s3306, 1
    %3308 = vsyncpa [#allocation8], 1
    %s3309 = scalar_lea.sflag [#allocation8], 1
    %3310 = vsyncpa %s3309, 1
    %3311 = vsyncpa [#allocation11], 1
    %s3312 = scalar_lea.sflag [#allocation11], 1
    %3313 = vsyncpa %s3312, 1
    %3314 = vsyncpa [#allocation14], 1
    %3315 = vsyncpa [#allocation17], 1
    %3316 = vsyncpa [#allocation20], 1
    %3317 = vsyncpa [#allocation23], 1
    %3318 = vsyncpa [#allocation6], 1
    %s3319 = scalar_lea.sflag [#allocation6], 1
    %3320 = vsyncpa %s3319, 1

</llo_original>
